<compile_context>
chip_gen: v7x
topology: tpu7x:2x2x1
jax: 0.10.0
libtpu: 0.0.40
codegen_flags: <defaults>
</compile_context>

<pallas_src>
import functools

import jax
import jax.numpy as jnp
from jax import lax
from jax.experimental import pallas as pl
from jax.experimental.pallas import tpu as pltpu

# ---------------- model hyper-parameters (small, consistent with the module) -----------
B = 2
DIM = 64
HEADS = 2
DIM_HEAD = 32
INNER = HEADS * DIM_HEAD                   # 64
DEPTH = 2
FF_MULT = 4
TEXT_SEQ_LEN = 16
NUM_TEXT_TOKENS = 112 + TEXT_SEQ_LEN       # 128 (num_text_tokens + text_seq_len)
IMAGE_FMAP = 4                             # vae.image_size // 2**vae.num_layers
IMAGE_SEQ_LEN = IMAGE_FMAP * IMAGE_FMAP    # 16
NUM_IMAGE_TOKENS = 128                     # vae.num_tokens
TOTAL_TOKENS = NUM_TEXT_TOKENS + NUM_IMAGE_TOKENS   # 256
TOTAL_SEQ_LEN = TEXT_SEQ_LEN + IMAGE_SEQ_LEN        # 32
SHIFT_TEXT_LEN = TOTAL_SEQ_LEN - IMAGE_SEQ_LEN + 1  # 17 (PreShiftToken text_len)
LN_EPS = 1e-5
NEG_MAX = float(jnp.finfo(jnp.float32).max)         # final masked_fill value is -finfo.max
ATTN_NEG = -1e30                                     # safe large negative for attention mask


# ------------------------------- fused Pallas kernel -----------------------------------
def _fused_dalle_kernel(tok_ref,
                        ln1_g_ref, ln1_b_ref, wqkv_ref, wout_ref, bout_ref, ls1_ref,
                        ln2_g_ref, ln2_b_ref, w1_ref, b1_ref, w2_ref, b2_ref, ls2_ref,
                        lng_ref, lnb_ref, wlog_ref, blog_ref,
                        o_ref,
                        *, depth, heads, dim_head, image_fmap,
                        shift_text_len, text_seq_len, num_text_tokens):
    x = tok_ref[0]                                    # (N, D) f32, one batch row
    n, d = x.shape
    inner = heads * dim_head
    scale = dim_head ** -0.5
    hn = heads * n

    # ---- masks / iotas: built once per grid step, reused by every layer (no re-broadcasts) ----
    # combined causal + block-diagonal (same-head) mask for the head-stacked score matrix
    log2_n = n.bit_length() - 1                       # n is a power of two (32)
    ri = lax.broadcasted_iota(jnp.int32, (hn, hn), 0)
    ci = lax.broadcasted_iota(jnp.int32, (hn, hn), 1)
    attn_allow = ((ri >> log2_n) == (ci >> log2_n)) & ((ci & (n - 1)) <= (ri & (n - 1)))

    # PreShiftToken selection masks (sequence rows x feature lanes); fmap is a power of two (4)
    rr = lax.broadcasted_iota(jnp.int32, (n, d), 0)
    cc = lax.broadcasted_iota(jnp.int32, (n, d), 1)
    is_text = rr < shift_text_len
    p_img = rr - shift_text_len                       # image grid position (only valid when >= 0)
    lane_q0 = cc < (d // 4)                           # first quarter of channels
    lane_q1 = (cc >= (d // 4)) & (cc < (d // 2))      # second quarter
    lane_half = cc < (d // 2)                         # first half
    keep_text = rr >= 1                               # text shift-by-1: row 0 -> 0
    keep_img_h = p_img >= image_fmap                  # image shift-down:  grid row 0 -> 0
    keep_img_w = (p_img & (image_fmap - 1)) != 0      # image shift-right: grid col 0 -> 0
    sel_text = is_text & lane_half
    sel_img_h = (~is_text) & lane_q0
    sel_img_w = (~is_text) & lane_q1

    def layer_norm(v, g, b):
        mu = jnp.mean(v, axis=-1, keepdims=True)
        var = jnp.mean((v - mu) ** 2, axis=-1, keepdims=True)
        return (v - mu) * lax.rsqrt(var + LN_EPS) * g + b

    def shift_tokens(v):
        # PreShiftToken, fused in-kernel: sublane (sequence) rolls + lane-group selects.
        v1 = pltpu.roll(v, shift=1, axis=0)           # row r <- row r-1 (wrap masked below)
        v4 = pltpu.roll(v, shift=image_fmap, axis=0)  # row r <- row r-image_fmap
        text_sh = jnp.where(keep_text, v1, 0.0)
        img_h = jnp.where(keep_img_h, v4, 0.0)
        img_w = jnp.where(keep_img_w, v1, 0.0)
        out = jnp.where(sel_text, text_sh, v)
        out = jnp.where(sel_img_h, img_h, out)
        out = jnp.where(sel_img_w, img_w, out)
        return out

    xb = x
    for lyr in range(depth):
        # ------------------------------ attention block ------------------------------
        h = shift_tokens(layer_norm(xb, ln1_g_ref[lyr], ln1_b_ref[lyr]))
        qkv = jnp.dot(h.astype(jnp.bfloat16), wqkv_ref[lyr],
                      preferred_element_type=jnp.float32)              # (N, 3*inner) f32
        # stack heads on the sublane axis: (heads*N, dim_head)
        q = jnp.concatenate(
            [qkv[:, hd * dim_head:(hd + 1) * dim_head] for hd in range(heads)], axis=0)
        k = jnp.concatenate(
            [qkv[:, inner + hd * dim_head:inner + (hd + 1) * dim_head]
             for hd in range(heads)], axis=0)
        v = jnp.concatenate(
            [qkv[:, 2 * inner + hd * dim_head:2 * inner + (hd + 1) * dim_head]
             for hd in range(heads)], axis=0)
        s = lax.dot_general(q * scale, k, (((1,), (1,)), ((), ())),
                            preferred_element_type=jnp.float32)        # (heads*N, heads*N)
        s = jnp.where(attn_allow, s, ATTN_NEG)
        s = s - jnp.max(s, axis=-1, keepdims=True)
        e = jnp.exp(s)
        p = e * pl.reciprocal(jnp.sum(e, axis=-1, keepdims=True), approx=True)
        ov = jnp.dot(p, v, preferred_element_type=jnp.float32)         # (heads*N, dim_head)
        att = jnp.concatenate([ov[hd * n:(hd + 1) * n] for hd in range(heads)], axis=-1)
        att = jnp.dot(att.astype(jnp.bfloat16), wout_ref[lyr],
                      preferred_element_type=jnp.float32) + bout_ref[lyr]
        xb = xb + att * ls1_ref[lyr]                                    # LayerScale + residual

        # --------------------------- GEGLU feed-forward block ---------------------------
        h = shift_tokens(layer_norm(xb, ln2_g_ref[lyr], ln2_b_ref[lyr]))
        u = jnp.dot(h.astype(jnp.bfloat16), w1_ref[lyr],
                    preferred_element_type=jnp.float32) + b1_ref[lyr]   # (N, 2*hidden)
        hid = u.shape[-1] // 2
        a = u[:, :hid]
        g = u[:, hid:]
        act = a * (0.5 * g * (1.0 + lax.erf(g * (2.0 ** -0.5))))        # GEGLU (exact gelu)
        ff = jnp.dot(act.astype(jnp.bfloat16), w2_ref[lyr],
                     preferred_element_type=jnp.float32) + b2_ref[lyr]
        xb = xb + ff * ls2_ref[lyr]                                     # LayerScale + residual

    # ------------------- to_logits head: LN -> Linear -> logits mask -------------------
    xn = layer_norm(xb, lng_ref[...], lnb_ref[...])
    logits = jnp.dot(xn.astype(jnp.bfloat16), wlog_ref[...],
                     preferred_element_type=jnp.float32) + blog_ref[...]   # (N, V)
    vtot = logits.shape[-1]
    pos = lax.broadcasted_iota(jnp.int32, (n, vtot), 0)    # sequence position of each row
    tok = lax.broadcasted_iota(jnp.int32, (n, vtot), 1)    # vocab index of each column
    lmask = ((pos >= text_seq_len) & (tok < num_text_tokens)) | \
            ((pos < text_seq_len) & (tok >= num_text_tokens))
    o_ref[0] = jnp.where(lmask, -NEG_MAX, logits)


def dalle_fused_forward(tokens, p):
    """tokens: (B, N, D) f32 embedded sequence -> (B, N, TOTAL_TOKENS) f32 masked logits."""
    Bb, N, D = tokens.shape
    V = p["logit_w"].shape[-1]

    weights = [p["ln1_g"], p["ln1_b"], p["wqkv"], p["wout"], p["bout"], p["ls1"],
               p["ln2_g"], p["ln2_b"], p["w1"], p["b1"], p["w2"], p["b2"], p["ls2"],
               p["logit_ln_g"], p["logit_ln_b"], p["logit_w"], p["logit_b"]]

    def resident(a):
        # full-array block, constant block index -> weights stay resident in VMEM across steps
        return pl.BlockSpec(a.shape, lambda b, _nd=a.ndim: (0,) * _nd)

    kernel = functools.partial(
        _fused_dalle_kernel, depth=DEPTH, heads=HEADS, dim_head=DIM_HEAD,
        image_fmap=IMAGE_FMAP, shift_text_len=SHIFT_TEXT_LEN,
        text_seq_len=TEXT_SEQ_LEN, num_text_tokens=NUM_TEXT_TOKENS)

    return pl.pallas_call(
        kernel,
        out_shape=jax.ShapeDtypeStruct((Bb, N, V), jnp.float32),
        grid=(Bb,),
        in_specs=[pl.BlockSpec((1, N, D), lambda b: (b, 0, 0))] +
                 [resident(a) for a in weights],
        out_specs=pl.BlockSpec((1, N, V), lambda b: (b, 0, 0)),
        compiler_params=pltpu.CompilerParams(dimension_semantics=("parallel",)),
    )(tokens, *weights)


# ------------------------------- JAX glue (embeddings) ----------------------------------
def init_params(key):
    keys = iter(jax.random.split(key, 12))

    def nrm(shape, std=0.02, dtype=jnp.float32):
        return (std * jax.random.normal(next(keys), shape, dtype=jnp.float32)).astype(dtype)

    return {
        # embeddings (gathered in plain JAX)
        "text_emb": nrm((NUM_TEXT_TOKENS, DIM)),
        "text_pos_emb": nrm((TEXT_SEQ_LEN + 1, DIM)),
        "image_emb": nrm((NUM_IMAGE_TOKENS, DIM)),
        "img_pos_h": nrm((IMAGE_FMAP, DIM)),   # axial positional embedding, h axis
        "img_pos_w": nrm((IMAGE_FMAP, DIM)),   # axial positional embedding, w axis
        # transformer weights, stacked over depth; matmul weights in bf16 (f32 accumulation)
        "ln1_g": jnp.ones((DEPTH, 1, DIM), jnp.float32),
        "ln1_b": jnp.zeros((DEPTH, 1, DIM), jnp.float32),
        "wqkv": nrm((DEPTH, DIM, 3 * INNER), dtype=jnp.bfloat16),
        "wout": nrm((DEPTH, INNER, DIM), dtype=jnp.bfloat16),
        "bout": jnp.zeros((DEPTH, 1, DIM), jnp.float32),
        "ls1": 0.1 * jnp.ones((DEPTH, 1, DIM), jnp.float32),   # LayerScale eps=0.1 (depth<=18)
        "ln2_g": jnp.ones((DEPTH, 1, DIM), jnp.float32),
        "ln2_b": jnp.zeros((DEPTH, 1, DIM), jnp.float32),
        "w1": nrm((DEPTH, DIM, DIM * FF_MULT * 2), dtype=jnp.bfloat16),
        "b1": jnp.zeros((DEPTH, 1, DIM * FF_MULT * 2), jnp.float32),
        "w2": nrm((DEPTH, DIM * FF_MULT, DIM), dtype=jnp.bfloat16),
        "b2": jnp.zeros((DEPTH, 1, DIM), jnp.float32),
        "ls2": 0.1 * jnp.ones((DEPTH, 1, DIM), jnp.float32),
        # to_logits head
        "logit_ln_g": jnp.ones((1, DIM), jnp.float32),
        "logit_ln_b": jnp.zeros((1, DIM), jnp.float32),
        "logit_w": nrm((DIM, TOTAL_TOKENS), dtype=jnp.bfloat16),
        "logit_b": jnp.zeros((1, TOTAL_TOKENS), jnp.float32),
    }


@jax.jit
def dalle_forward(params, text, image):
    """text: (B, TEXT_SEQ_LEN) int32 token ids; image: (B, IMAGE_SEQ_LEN) int32 codebook codes."""
    # --- embeddings (plain JAX: gathers + positional embeddings + concat/trim) ---
    text = jnp.pad(text, ((0, 0), (1, 0)))                        # F.pad(text, (1,0), value=0)
    tokens = jnp.take(params["text_emb"], text, axis=0)           # (B, 17, D)
    tokens = tokens + params["text_pos_emb"][None, :text.shape[1], :]

    img_emb = jnp.take(params["image_emb"], image, axis=0)        # (B, 16, D)
    axial = (params["img_pos_h"][:, None, :] +
             params["img_pos_w"][None, :, :]).reshape(1, IMAGE_SEQ_LEN, DIM)
    img_emb = img_emb + axial[:, :img_emb.shape[1]]

    tokens = jnp.concatenate([tokens, img_emb], axis=1)           # (B, 33, D)
    tokens = tokens[:, :TOTAL_SEQ_LEN]                            # trim to (B, 32, D)

    # --- fused transformer + to_logits (single Pallas kernel) ---
    return dalle_fused_forward(tokens, params)                    # (B, 32, TOTAL_TOKENS)


if __name__ == "__main__":
    key = jax.random.PRNGKey(0)
    k_param, k_text, k_img = jax.random.split(key, 3)
    params = init_params(k_param)
    text = jax.random.randint(k_text, (B, TEXT_SEQ_LEN), 0, NUM_TEXT_TOKENS, dtype=jnp.int32)
    image = jax.random.randint(k_img, (B, IMAGE_SEQ_LEN), 0, NUM_IMAGE_TOKENS, dtype=jnp.int32)

    logits = dalle_forward(params, text, image)
    jax.block_until_ready(logits)
    assert logits.shape == (B, TOTAL_SEQ_LEN, TOTAL_TOKENS)
    # sanity: text positions have image-token logits masked to -finfo.max, and no NaNs anywhere
    assert bool(jnp.all(logits[:, 0, NUM_TEXT_TOKENS:] == -NEG_MAX))
    assert not bool(jnp.any(jnp.isnan(logits)))
    print("KERNEL_OK")
</pallas_src>

<mosaic_0001>
module attributes {stable_mosaic.version = 11 : i64} {
  func.func @_fused_dalle_kernel(%arg0: i32, %arg1: memref<1x32x64xf32, #tpu.memory_space<vmem>>, %arg2: memref<2x1x64xf32, #tpu.memory_space<vmem>>, %arg3: memref<2x1x64xf32, #tpu.memory_space<vmem>>, %arg4: memref<2x64x192xbf16, #tpu.memory_space<vmem>>, %arg5: memref<2x64x64xbf16, #tpu.memory_space<vmem>>, %arg6: memref<2x1x64xf32, #tpu.memory_space<vmem>>, %arg7: memref<2x1x64xf32, #tpu.memory_space<vmem>>, %arg8: memref<2x1x64xf32, #tpu.memory_space<vmem>>, %arg9: memref<2x1x64xf32, #tpu.memory_space<vmem>>, %arg10: memref<2x64x512xbf16, #tpu.memory_space<vmem>>, %arg11: memref<2x1x512xf32, #tpu.memory_space<vmem>>, %arg12: memref<2x256x64xbf16, #tpu.memory_space<vmem>>, %arg13: memref<2x1x64xf32, #tpu.memory_space<vmem>>, %arg14: memref<2x1x64xf32, #tpu.memory_space<vmem>>, %arg15: memref<1x64xf32, #tpu.memory_space<vmem>>, %arg16: memref<1x64xf32, #tpu.memory_space<vmem>>, %arg17: memref<64x256xbf16, #tpu.memory_space<vmem>>, %arg18: memref<1x256xf32, #tpu.memory_space<vmem>>, %arg19: memref<1x32x256xf32, #tpu.memory_space<vmem>>) attributes {dimension_semantics = [#tpu.dimension_semantics<parallel>], iteration_bounds = array<i64: 2>, scalar_prefetch = 0 : i64, scratch_operands = 0 : i64, tpu.core_type = #tpu.core_type<tc>, window_params = [{transform_indices = @transform_0, window_bounds = array<i64: 1, 32, 64>}, {pipeline_mode = #tpu.pipeline_mode<synchronous>, transform_indices = @transform_1, window_bounds = array<i64: 2, 1, 64>}, {pipeline_mode = #tpu.pipeline_mode<synchronous>, transform_indices = @transform_2, window_bounds = array<i64: 2, 1, 64>}, {pipeline_mode = #tpu.pipeline_mode<synchronous>, transform_indices = @transform_3, window_bounds = array<i64: 2, 64, 192>}, {pipeline_mode = #tpu.pipeline_mode<synchronous>, transform_indices = @transform_4, window_bounds = array<i64: 2, 64, 64>}, {pipeline_mode = #tpu.pipeline_mode<synchronous>, transform_indices = @transform_5, window_bounds = array<i64: 2, 1, 64>}, {pipeline_mode = #tpu.pipeline_mode<synchronous>, transform_indices = @transform_6, window_bounds = array<i64: 2, 1, 64>}, {pipeline_mode = #tpu.pipeline_mode<synchronous>, transform_indices = @transform_7, window_bounds = array<i64: 2, 1, 64>}, {pipeline_mode = #tpu.pipeline_mode<synchronous>, transform_indices = @transform_8, window_bounds = array<i64: 2, 1, 64>}, {pipeline_mode = #tpu.pipeline_mode<synchronous>, transform_indices = @transform_9, window_bounds = array<i64: 2, 64, 512>}, {pipeline_mode = #tpu.pipeline_mode<synchronous>, transform_indices = @transform_10, window_bounds = array<i64: 2, 1, 512>}, {pipeline_mode = #tpu.pipeline_mode<synchronous>, transform_indices = @transform_11, window_bounds = array<i64: 2, 256, 64>}, {pipeline_mode = #tpu.pipeline_mode<synchronous>, transform_indices = @transform_12, window_bounds = array<i64: 2, 1, 64>}, {pipeline_mode = #tpu.pipeline_mode<synchronous>, transform_indices = @transform_13, window_bounds = array<i64: 2, 1, 64>}, {pipeline_mode = #tpu.pipeline_mode<synchronous>, transform_indices = @transform_14, window_bounds = array<i64: 1, 64>}, {pipeline_mode = #tpu.pipeline_mode<synchronous>, transform_indices = @transform_15, window_bounds = array<i64: 1, 64>}, {pipeline_mode = #tpu.pipeline_mode<synchronous>, transform_indices = @transform_16, window_bounds = array<i64: 64, 256>}, {pipeline_mode = #tpu.pipeline_mode<synchronous>, transform_indices = @transform_17, window_bounds = array<i64: 1, 256>}, {transform_indices = @transform_18, window_bounds = array<i64: 1, 32, 256>}]} {
    %c0 = arith.constant 0 : index
    %c0_0 = arith.constant 0 : index
    %c0_1 = arith.constant 0 : index
    %0 = vector.load %arg1[%c0, %c0_0, %c0_1] : memref<1x32x64xf32, #tpu.memory_space<vmem>>, vector<1x32x64xf32>
    %1 = vector.shape_cast %0 : vector<1x32x64xf32> to vector<32x64xf32>
    %2 = tpu.iota {dimensions = array<i32: 0>} : vector<64x64xi32>
    %3 = tpu.iota {dimensions = array<i32: 1>} : vector<64x64xi32>
    %c5_i32 = arith.constant 5 : i32
    %4 = vector.broadcast %c5_i32 : i32 to vector<64x64xi32>
    %5 = arith.shrsi %2, %4 : vector<64x64xi32>
    %c5_i32_2 = arith.constant 5 : i32
    %6 = vector.broadcast %c5_i32_2 : i32 to vector<64x64xi32>
    %7 = arith.shrsi %3, %6 : vector<64x64xi32>
    %8 = arith.cmpi eq, %5, %7 : vector<64x64xi32>
    %c31_i32 = arith.constant 31 : i32
    %9 = vector.broadcast %c31_i32 : i32 to vector<64x64xi32>
    %10 = arith.andi %3, %9 : vector<64x64xi32>
    %c31_i32_3 = arith.constant 31 : i32
    %11 = vector.broadcast %c31_i32_3 : i32 to vector<64x64xi32>
    %12 = arith.andi %2, %11 : vector<64x64xi32>
    %13 = arith.cmpi sle, %10, %12 : vector<64x64xi32>
    %14 = arith.andi %8, %13 : vector<64x64xi1>
    %15 = tpu.iota {dimensions = array<i32: 0>} : vector<32x64xi32>
    %16 = tpu.iota {dimensions = array<i32: 1>} : vector<32x64xi32>
    %c17_i32 = arith.constant 17 : i32
    %17 = vector.broadcast %c17_i32 : i32 to vector<32x64xi32>
    %18 = arith.cmpi slt, %15, %17 : vector<32x64xi32>
    %c17_i32_4 = arith.constant 17 : i32
    %19 = vector.broadcast %c17_i32_4 : i32 to vector<32x64xi32>
    %20 = arith.subi %15, %19 : vector<32x64xi32>
    %c16_i32 = arith.constant 16 : i32
    %21 = vector.broadcast %c16_i32 : i32 to vector<32x64xi32>
    %22 = arith.cmpi slt, %16, %21 : vector<32x64xi32>
    %c16_i32_5 = arith.constant 16 : i32
    %23 = vector.broadcast %c16_i32_5 : i32 to vector<32x64xi32>
    %24 = arith.cmpi sge, %16, %23 : vector<32x64xi32>
    %c32_i32 = arith.constant 32 : i32
    %25 = vector.broadcast %c32_i32 : i32 to vector<32x64xi32>
    %26 = arith.cmpi slt, %16, %25 : vector<32x64xi32>
    %27 = arith.andi %24, %26 : vector<32x64xi1>
    %c32_i32_6 = arith.constant 32 : i32
    %28 = vector.broadcast %c32_i32_6 : i32 to vector<32x64xi32>
    %29 = arith.cmpi slt, %16, %28 : vector<32x64xi32>
    %c1_i32 = arith.constant 1 : i32
    %30 = vector.broadcast %c1_i32 : i32 to vector<32x64xi32>
    %31 = arith.cmpi sge, %15, %30 : vector<32x64xi32>
    %c4_i32 = arith.constant 4 : i32
    %32 = vector.broadcast %c4_i32 : i32 to vector<32x64xi32>
    %33 = arith.cmpi sge, %20, %32 : vector<32x64xi32>
    %c3_i32 = arith.constant 3 : i32
    %34 = vector.broadcast %c3_i32 : i32 to vector<32x64xi32>
    %35 = arith.andi %20, %34 : vector<32x64xi32>
    %c0_i32 = arith.constant 0 : i32
    %36 = vector.broadcast %c0_i32 : i32 to vector<32x64xi32>
    %37 = arith.cmpi ne, %35, %36 : vector<32x64xi32>
    %38 = arith.andi %18, %29 : vector<32x64xi1>
    %cst = arith.constant dense<true> : vector<32x64xi1>
    %39 = arith.xori %18, %cst : vector<32x64xi1>
    %40 = arith.andi %39, %22 : vector<32x64xi1>
    %cst_7 = arith.constant dense<true> : vector<32x64xi1>
    %41 = arith.xori %18, %cst_7 : vector<32x64xi1>
    %42 = arith.andi %41, %27 : vector<32x64xi1>
    %c0_8 = arith.constant 0 : index
    %c0_9 = arith.constant 0 : index
    %c0_10 = arith.constant 0 : index
    %43 = vector.load %arg2[%c0_8, %c0_9, %c0_10] : memref<2x1x64xf32, #tpu.memory_space<vmem>>, vector<1x1x64xf32>
    %44 = vector.shape_cast %43 : vector<1x1x64xf32> to vector<1x64xf32>
    %c0_11 = arith.constant 0 : index
    %c0_12 = arith.constant 0 : index
    %c0_13 = arith.constant 0 : index
    %45 = vector.load %arg3[%c0_11, %c0_12, %c0_13] : memref<2x1x64xf32, #tpu.memory_space<vmem>>, vector<1x1x64xf32>
    %46 = vector.shape_cast %45 : vector<1x1x64xf32> to vector<1x64xf32>
    %cst_14 = arith.constant dense<0.000000e+00> : vector<32xf32>
    %47 = vector.multi_reduction <add>, %1, %cst_14 [1] : vector<32x64xf32> to vector<32xf32>
    %48 = vector.shape_cast %47 : vector<32xf32> to vector<32x1xf32>
    %cst_15 = arith.constant 6.400000e+01 : f32
    %49 = vector.broadcast %cst_15 : f32 to vector<32x1xf32>
    %50 = arith.divf %48, %49 : vector<32x1xf32>
    %51 = vector.broadcast %50 : vector<32x1xf32> to vector<32x64xf32>
    %52 = arith.subf %1, %51 : vector<32x64xf32>
    %53 = arith.mulf %52, %52 : vector<32x64xf32>
    %cst_16 = arith.constant dense<0.000000e+00> : vector<32xf32>
    %54 = vector.multi_reduction <add>, %53, %cst_16 [1] : vector<32x64xf32> to vector<32xf32>
    %55 = vector.shape_cast %54 : vector<32xf32> to vector<32x1xf32>
    %cst_17 = arith.constant 6.400000e+01 : f32
    %56 = vector.broadcast %cst_17 : f32 to vector<32x1xf32>
    %57 = arith.divf %55, %56 : vector<32x1xf32>
    %58 = vector.broadcast %50 : vector<32x1xf32> to vector<32x64xf32>
    %59 = arith.subf %1, %58 : vector<32x64xf32>
    %cst_18 = arith.constant 9.99999974E-6 : f32
    %60 = vector.broadcast %cst_18 : f32 to vector<32x1xf32>
    %61 = arith.addf %57, %60 : vector<32x1xf32>
    %62 = math.rsqrt %61 : vector<32x1xf32>
    %63 = vector.broadcast %62 : vector<32x1xf32> to vector<32x64xf32>
    %64 = arith.mulf %59, %63 : vector<32x64xf32>
    %65 = vector.broadcast %44 : vector<1x64xf32> to vector<32x64xf32>
    %66 = arith.mulf %64, %65 : vector<32x64xf32>
    %67 = vector.broadcast %46 : vector<1x64xf32> to vector<32x64xf32>
    %68 = arith.addf %66, %67 : vector<32x64xf32>
    %c1_i32_19 = arith.constant 1 : i32
    %69 = tpu.dynamic_rotate %68 by %c1_i32_19 dim 0 : vector<32x64xf32>, i32 -> vector<32x64xf32>
    %c4_i32_20 = arith.constant 4 : i32
    %70 = tpu.dynamic_rotate %68 by %c4_i32_20 dim 0 : vector<32x64xf32>, i32 -> vector<32x64xf32>
    %cst_21 = arith.constant 0.000000e+00 : f32
    %71 = vector.broadcast %cst_21 : f32 to vector<32x64xf32>
    %72 = arith.select %31, %69, %71 : vector<32x64xi1>, vector<32x64xf32>
    %cst_22 = arith.constant 0.000000e+00 : f32
    %73 = vector.broadcast %cst_22 : f32 to vector<32x64xf32>
    %74 = arith.select %33, %70, %73 : vector<32x64xi1>, vector<32x64xf32>
    %cst_23 = arith.constant 0.000000e+00 : f32
    %75 = vector.broadcast %cst_23 : f32 to vector<32x64xf32>
    %76 = arith.select %37, %69, %75 : vector<32x64xi1>, vector<32x64xf32>
    %77 = arith.select %38, %72, %68 : vector<32x64xi1>, vector<32x64xf32>
    %78 = arith.select %40, %74, %77 : vector<32x64xi1>, vector<32x64xf32>
    %79 = arith.select %42, %76, %78 : vector<32x64xi1>, vector<32x64xf32>
    %80 = arith.truncf %79 : vector<32x64xf32> to vector<32x64xbf16>
    %c0_24 = arith.constant 0 : index
    %c0_25 = arith.constant 0 : index
    %c0_26 = arith.constant 0 : index
    %81 = vector.load %arg4[%c0_24, %c0_25, %c0_26] : memref<2x64x192xbf16, #tpu.memory_space<vmem>>, vector<1x64x192xbf16>
    %82 = vector.shape_cast %81 : vector<1x64x192xbf16> to vector<64x192xbf16>
    %cst_27 = arith.constant dense<0.000000e+00> : vector<32x192xf32>
    %83 = tpu.matmul %80, %82, %cst_27 {dimension_numbers = #tpu.dot_dimension_numbers<[1], [0], [0], [1], [0, 0, 1, 1], [], []>} : vector<32x64xbf16>, vector<64x192xbf16>, vector<32x192xf32> -> vector<32x192xf32>
    %84 = vector.extract_strided_slice %83 {offsets = [0, 0], sizes = [32, 32], strides = [1, 1]} : vector<32x192xf32> to vector<32x32xf32>
    %85 = vector.extract_strided_slice %83 {offsets = [0, 32], sizes = [32, 32], strides = [1, 1]} : vector<32x192xf32> to vector<32x32xf32>
    %86 = tpu.concatenate %84, %85 in 0 : vector<32x32xf32>, vector<32x32xf32> -> vector<64x32xf32>
    %87 = vector.extract_strided_slice %83 {offsets = [0, 64], sizes = [32, 32], strides = [1, 1]} : vector<32x192xf32> to vector<32x32xf32>
    %88 = vector.extract_strided_slice %83 {offsets = [0, 96], sizes = [32, 32], strides = [1, 1]} : vector<32x192xf32> to vector<32x32xf32>
    %89 = tpu.concatenate %87, %88 in 0 : vector<32x32xf32>, vector<32x32xf32> -> vector<64x32xf32>
    %90 = vector.extract_strided_slice %83 {offsets = [0, 128], sizes = [32, 32], strides = [1, 1]} : vector<32x192xf32> to vector<32x32xf32>
    %91 = vector.extract_strided_slice %83 {offsets = [0, 160], sizes = [32, 32], strides = [1, 1]} : vector<32x192xf32> to vector<32x32xf32>
    %92 = tpu.concatenate %90, %91 in 0 : vector<32x32xf32>, vector<32x32xf32> -> vector<64x32xf32>
    %cst_28 = arith.constant 0.176776692 : f32
    %93 = vector.broadcast %cst_28 : f32 to vector<64x32xf32>
    %94 = arith.mulf %86, %93 : vector<64x32xf32>
    %cst_29 = arith.constant dense<0.000000e+00> : vector<64x64xf32>
    %95 = tpu.matmul %94, %89, %cst_29 {dimension_numbers = #tpu.dot_dimension_numbers<[1], [1], [0], [0], [0, 0, 1, 0], [], []>} : vector<64x32xf32>, vector<64x32xf32>, vector<64x64xf32> -> vector<64x64xf32>
    %cst_30 = arith.constant -1.000000e+30 : f32
    %96 = vector.broadcast %cst_30 : f32 to vector<64x64xf32>
    %97 = arith.select %14, %95, %96 : vector<64x64xi1>, vector<64x64xf32>
    %cst_31 = arith.constant dense<0xFF800000> : vector<64xf32>
    %98 = vector.multi_reduction <maximumf>, %97, %cst_31 [1] : vector<64x64xf32> to vector<64xf32>
    %99 = vector.shape_cast %98 : vector<64xf32> to vector<64x1xf32>
    %100 = vector.broadcast %99 : vector<64x1xf32> to vector<64x64xf32>
    %101 = arith.subf %97, %100 : vector<64x64xf32>
    %102 = math.exp %101 : vector<64x64xf32>
    %cst_32 = arith.constant dense<0.000000e+00> : vector<64xf32>
    %103 = vector.multi_reduction <add>, %102, %cst_32 [1] : vector<64x64xf32> to vector<64xf32>
    %104 = vector.shape_cast %103 : vector<64xf32> to vector<64x1xf32>
    %105 = tpu.reciprocal %104 {approx = true} : vector<64x1xf32> -> vector<64x1xf32>
    %106 = vector.broadcast %105 : vector<64x1xf32> to vector<64x64xf32>
    %107 = arith.mulf %102, %106 : vector<64x64xf32>
    %cst_33 = arith.constant dense<0.000000e+00> : vector<64x32xf32>
    %108 = tpu.matmul %107, %92, %cst_33 {dimension_numbers = #tpu.dot_dimension_numbers<[1], [0], [0], [1], [0, 0, 1, 1], [], []>} : vector<64x64xf32>, vector<64x32xf32>, vector<64x32xf32> -> vector<64x32xf32>
    %109 = vector.extract_strided_slice %108 {offsets = [0, 0], sizes = [32, 32], strides = [1, 1]} : vector<64x32xf32> to vector<32x32xf32>
    %110 = vector.extract_strided_slice %108 {offsets = [32, 0], sizes = [32, 32], strides = [1, 1]} : vector<64x32xf32> to vector<32x32xf32>
    %111 = tpu.concatenate %109, %110 in 1 : vector<32x32xf32>, vector<32x32xf32> -> vector<32x64xf32>
    %112 = arith.truncf %111 : vector<32x64xf32> to vector<32x64xbf16>
    %c0_34 = arith.constant 0 : index
    %c0_35 = arith.constant 0 : index
    %c0_36 = arith.constant 0 : index
    %113 = vector.load %arg5[%c0_34, %c0_35, %c0_36] : memref<2x64x64xbf16, #tpu.memory_space<vmem>>, vector<1x64x64xbf16>
    %114 = vector.shape_cast %113 : vector<1x64x64xbf16> to vector<64x64xbf16>
    %cst_37 = arith.constant dense<0.000000e+00> : vector<32x64xf32>
    %115 = tpu.matmul %112, %114, %cst_37 {dimension_numbers = #tpu.dot_dimension_numbers<[1], [0], [0], [1], [0, 0, 1, 1], [], []>} : vector<32x64xbf16>, vector<64x64xbf16>, vector<32x64xf32> -> vector<32x64xf32>
    %c0_38 = arith.constant 0 : index
    %c0_39 = arith.constant 0 : index
    %c0_40 = arith.constant 0 : index
    %116 = vector.load %arg6[%c0_38, %c0_39, %c0_40] : memref<2x1x64xf32, #tpu.memory_space<vmem>>, vector<1x1x64xf32>
    %117 = vector.shape_cast %116 : vector<1x1x64xf32> to vector<1x64xf32>
    %118 = vector.broadcast %117 : vector<1x64xf32> to vector<32x64xf32>
    %119 = arith.addf %115, %118 : vector<32x64xf32>
    %c0_41 = arith.constant 0 : index
    %c0_42 = arith.constant 0 : index
    %c0_43 = arith.constant 0 : index
    %120 = vector.load %arg7[%c0_41, %c0_42, %c0_43] : memref<2x1x64xf32, #tpu.memory_space<vmem>>, vector<1x1x64xf32>
    %121 = vector.shape_cast %120 : vector<1x1x64xf32> to vector<1x64xf32>
    %122 = vector.broadcast %121 : vector<1x64xf32> to vector<32x64xf32>
    %123 = arith.mulf %119, %122 : vector<32x64xf32>
    %124 = arith.addf %1, %123 : vector<32x64xf32>
    %c0_44 = arith.constant 0 : index
    %c0_45 = arith.constant 0 : index
    %c0_46 = arith.constant 0 : index
    %125 = vector.load %arg8[%c0_44, %c0_45, %c0_46] : memref<2x1x64xf32, #tpu.memory_space<vmem>>, vector<1x1x64xf32>
    %126 = vector.shape_cast %125 : vector<1x1x64xf32> to vector<1x64xf32>
    %c0_47 = arith.constant 0 : index
    %c0_48 = arith.constant 0 : index
    %c0_49 = arith.constant 0 : index
    %127 = vector.load %arg9[%c0_47, %c0_48, %c0_49] : memref<2x1x64xf32, #tpu.memory_space<vmem>>, vector<1x1x64xf32>
    %128 = vector.shape_cast %127 : vector<1x1x64xf32> to vector<1x64xf32>
    %cst_50 = arith.constant dense<0.000000e+00> : vector<32xf32>
    %129 = vector.multi_reduction <add>, %124, %cst_50 [1] : vector<32x64xf32> to vector<32xf32>
    %130 = vector.shape_cast %129 : vector<32xf32> to vector<32x1xf32>
    %cst_51 = arith.constant 6.400000e+01 : f32
    %131 = vector.broadcast %cst_51 : f32 to vector<32x1xf32>
    %132 = arith.divf %130, %131 : vector<32x1xf32>
    %133 = vector.broadcast %132 : vector<32x1xf32> to vector<32x64xf32>
    %134 = arith.subf %124, %133 : vector<32x64xf32>
    %135 = arith.mulf %134, %134 : vector<32x64xf32>
    %cst_52 = arith.constant dense<0.000000e+00> : vector<32xf32>
    %136 = vector.multi_reduction <add>, %135, %cst_52 [1] : vector<32x64xf32> to vector<32xf32>
    %137 = vector.shape_cast %136 : vector<32xf32> to vector<32x1xf32>
    %cst_53 = arith.constant 6.400000e+01 : f32
    %138 = vector.broadcast %cst_53 : f32 to vector<32x1xf32>
    %139 = arith.divf %137, %138 : vector<32x1xf32>
    %140 = vector.broadcast %132 : vector<32x1xf32> to vector<32x64xf32>
    %141 = arith.subf %124, %140 : vector<32x64xf32>
    %cst_54 = arith.constant 9.99999974E-6 : f32
    %142 = vector.broadcast %cst_54 : f32 to vector<32x1xf32>
    %143 = arith.addf %139, %142 : vector<32x1xf32>
    %144 = math.rsqrt %143 : vector<32x1xf32>
    %145 = vector.broadcast %144 : vector<32x1xf32> to vector<32x64xf32>
    %146 = arith.mulf %141, %145 : vector<32x64xf32>
    %147 = vector.broadcast %126 : vector<1x64xf32> to vector<32x64xf32>
    %148 = arith.mulf %146, %147 : vector<32x64xf32>
    %149 = vector.broadcast %128 : vector<1x64xf32> to vector<32x64xf32>
    %150 = arith.addf %148, %149 : vector<32x64xf32>
    %c1_i32_55 = arith.constant 1 : i32
    %151 = tpu.dynamic_rotate %150 by %c1_i32_55 dim 0 : vector<32x64xf32>, i32 -> vector<32x64xf32>
    %c4_i32_56 = arith.constant 4 : i32
    %152 = tpu.dynamic_rotate %150 by %c4_i32_56 dim 0 : vector<32x64xf32>, i32 -> vector<32x64xf32>
    %cst_57 = arith.constant 0.000000e+00 : f32
    %153 = vector.broadcast %cst_57 : f32 to vector<32x64xf32>
    %154 = arith.select %31, %151, %153 : vector<32x64xi1>, vector<32x64xf32>
    %cst_58 = arith.constant 0.000000e+00 : f32
    %155 = vector.broadcast %cst_58 : f32 to vector<32x64xf32>
    %156 = arith.select %33, %152, %155 : vector<32x64xi1>, vector<32x64xf32>
    %cst_59 = arith.constant 0.000000e+00 : f32
    %157 = vector.broadcast %cst_59 : f32 to vector<32x64xf32>
    %158 = arith.select %37, %151, %157 : vector<32x64xi1>, vector<32x64xf32>
    %159 = arith.select %38, %154, %150 : vector<32x64xi1>, vector<32x64xf32>
    %160 = arith.select %40, %156, %159 : vector<32x64xi1>, vector<32x64xf32>
    %161 = arith.select %42, %158, %160 : vector<32x64xi1>, vector<32x64xf32>
    %162 = arith.truncf %161 : vector<32x64xf32> to vector<32x64xbf16>
    %c0_60 = arith.constant 0 : index
    %c0_61 = arith.constant 0 : index
    %c0_62 = arith.constant 0 : index
    %163 = vector.load %arg10[%c0_60, %c0_61, %c0_62] : memref<2x64x512xbf16, #tpu.memory_space<vmem>>, vector<1x64x512xbf16>
    %164 = vector.shape_cast %163 : vector<1x64x512xbf16> to vector<64x512xbf16>
    %cst_63 = arith.constant dense<0.000000e+00> : vector<32x512xf32>
    %165 = tpu.matmul %162, %164, %cst_63 {dimension_numbers = #tpu.dot_dimension_numbers<[1], [0], [0], [1], [0, 0, 1, 1], [], []>} : vector<32x64xbf16>, vector<64x512xbf16>, vector<32x512xf32> -> vector<32x512xf32>
    %c0_64 = arith.constant 0 : index
    %c0_65 = arith.constant 0 : index
    %c0_66 = arith.constant 0 : index
    %166 = vector.load %arg11[%c0_64, %c0_65, %c0_66] : memref<2x1x512xf32, #tpu.memory_space<vmem>>, vector<1x1x512xf32>
    %167 = vector.shape_cast %166 : vector<1x1x512xf32> to vector<1x512xf32>
    %168 = vector.broadcast %167 : vector<1x512xf32> to vector<32x512xf32>
    %169 = arith.addf %165, %168 : vector<32x512xf32>
    %170 = vector.extract_strided_slice %169 {offsets = [0, 0], sizes = [32, 256], strides = [1, 1]} : vector<32x512xf32> to vector<32x256xf32>
    %171 = vector.extract_strided_slice %169 {offsets = [0, 256], sizes = [32, 256], strides = [1, 1]} : vector<32x512xf32> to vector<32x256xf32>
    %cst_67 = arith.constant 5.000000e-01 : f32
    %172 = vector.broadcast %cst_67 : f32 to vector<32x256xf32>
    %173 = arith.mulf %172, %171 : vector<32x256xf32>
    %cst_68 = arith.constant 0.707106769 : f32
    %174 = vector.broadcast %cst_68 : f32 to vector<32x256xf32>
    %175 = arith.mulf %171, %174 : vector<32x256xf32>
    %176 = math.erf %175 : vector<32x256xf32>
    %cst_69 = arith.constant 1.000000e+00 : f32
    %177 = vector.broadcast %cst_69 : f32 to vector<32x256xf32>
    %178 = arith.addf %177, %176 : vector<32x256xf32>
    %179 = arith.mulf %173, %178 : vector<32x256xf32>
    %180 = arith.mulf %170, %179 : vector<32x256xf32>
    %181 = arith.truncf %180 : vector<32x256xf32> to vector<32x256xbf16>
    %c0_70 = arith.constant 0 : index
    %c0_71 = arith.constant 0 : index
    %c0_72 = arith.constant 0 : index
    %182 = vector.load %arg12[%c0_70, %c0_71, %c0_72] : memref<2x256x64xbf16, #tpu.memory_space<vmem>>, vector<1x256x64xbf16>
    %183 = vector.shape_cast %182 : vector<1x256x64xbf16> to vector<256x64xbf16>
    %cst_73 = arith.constant dense<0.000000e+00> : vector<32x64xf32>
    %184 = tpu.matmul %181, %183, %cst_73 {dimension_numbers = #tpu.dot_dimension_numbers<[1], [0], [0], [1], [0, 0, 1, 1], [], []>} : vector<32x256xbf16>, vector<256x64xbf16>, vector<32x64xf32> -> vector<32x64xf32>
    %c0_74 = arith.constant 0 : index
    %c0_75 = arith.constant 0 : index
    %c0_76 = arith.constant 0 : index
    %185 = vector.load %arg13[%c0_74, %c0_75, %c0_76] : memref<2x1x64xf32, #tpu.memory_space<vmem>>, vector<1x1x64xf32>
    %186 = vector.shape_cast %185 : vector<1x1x64xf32> to vector<1x64xf32>
    %187 = vector.broadcast %186 : vector<1x64xf32> to vector<32x64xf32>
    %188 = arith.addf %184, %187 : vector<32x64xf32>
    %c0_77 = arith.constant 0 : index
    %c0_78 = arith.constant 0 : index
    %c0_79 = arith.constant 0 : index
    %189 = vector.load %arg14[%c0_77, %c0_78, %c0_79] : memref<2x1x64xf32, #tpu.memory_space<vmem>>, vector<1x1x64xf32>
    %190 = vector.shape_cast %189 : vector<1x1x64xf32> to vector<1x64xf32>
    %191 = vector.broadcast %190 : vector<1x64xf32> to vector<32x64xf32>
    %192 = arith.mulf %188, %191 : vector<32x64xf32>
    %193 = arith.addf %124, %192 : vector<32x64xf32>
    %c1 = arith.constant 1 : index
    %c0_80 = arith.constant 0 : index
    %c0_81 = arith.constant 0 : index
    %194 = vector.load %arg2[%c1, %c0_80, %c0_81] : memref<2x1x64xf32, #tpu.memory_space<vmem>>, vector<1x1x64xf32>
    %195 = vector.shape_cast %194 : vector<1x1x64xf32> to vector<1x64xf32>
    %c1_82 = arith.constant 1 : index
    %c0_83 = arith.constant 0 : index
    %c0_84 = arith.constant 0 : index
    %196 = vector.load %arg3[%c1_82, %c0_83, %c0_84] : memref<2x1x64xf32, #tpu.memory_space<vmem>>, vector<1x1x64xf32>
    %197 = vector.shape_cast %196 : vector<1x1x64xf32> to vector<1x64xf32>
    %cst_85 = arith.constant dense<0.000000e+00> : vector<32xf32>
    %198 = vector.multi_reduction <add>, %193, %cst_85 [1] : vector<32x64xf32> to vector<32xf32>
    %199 = vector.shape_cast %198 : vector<32xf32> to vector<32x1xf32>
    %cst_86 = arith.constant 6.400000e+01 : f32
    %200 = vector.broadcast %cst_86 : f32 to vector<32x1xf32>
    %201 = arith.divf %199, %200 : vector<32x1xf32>
    %202 = vector.broadcast %201 : vector<32x1xf32> to vector<32x64xf32>
    %203 = arith.subf %193, %202 : vector<32x64xf32>
    %204 = arith.mulf %203, %203 : vector<32x64xf32>
    %cst_87 = arith.constant dense<0.000000e+00> : vector<32xf32>
    %205 = vector.multi_reduction <add>, %204, %cst_87 [1] : vector<32x64xf32> to vector<32xf32>
    %206 = vector.shape_cast %205 : vector<32xf32> to vector<32x1xf32>
    %cst_88 = arith.constant 6.400000e+01 : f32
    %207 = vector.broadcast %cst_88 : f32 to vector<32x1xf32>
    %208 = arith.divf %206, %207 : vector<32x1xf32>
    %209 = vector.broadcast %201 : vector<32x1xf32> to vector<32x64xf32>
    %210 = arith.subf %193, %209 : vector<32x64xf32>
    %cst_89 = arith.constant 9.99999974E-6 : f32
    %211 = vector.broadcast %cst_89 : f32 to vector<32x1xf32>
    %212 = arith.addf %208, %211 : vector<32x1xf32>
    %213 = math.rsqrt %212 : vector<32x1xf32>
    %214 = vector.broadcast %213 : vector<32x1xf32> to vector<32x64xf32>
    %215 = arith.mulf %210, %214 : vector<32x64xf32>
    %216 = vector.broadcast %195 : vector<1x64xf32> to vector<32x64xf32>
    %217 = arith.mulf %215, %216 : vector<32x64xf32>
    %218 = vector.broadcast %197 : vector<1x64xf32> to vector<32x64xf32>
    %219 = arith.addf %217, %218 : vector<32x64xf32>
    %c1_i32_90 = arith.constant 1 : i32
    %220 = tpu.dynamic_rotate %219 by %c1_i32_90 dim 0 : vector<32x64xf32>, i32 -> vector<32x64xf32>
    %c4_i32_91 = arith.constant 4 : i32
    %221 = tpu.dynamic_rotate %219 by %c4_i32_91 dim 0 : vector<32x64xf32>, i32 -> vector<32x64xf32>
    %cst_92 = arith.constant 0.000000e+00 : f32
    %222 = vector.broadcast %cst_92 : f32 to vector<32x64xf32>
    %223 = arith.select %31, %220, %222 : vector<32x64xi1>, vector<32x64xf32>
    %cst_93 = arith.constant 0.000000e+00 : f32
    %224 = vector.broadcast %cst_93 : f32 to vector<32x64xf32>
    %225 = arith.select %33, %221, %224 : vector<32x64xi1>, vector<32x64xf32>
    %cst_94 = arith.constant 0.000000e+00 : f32
    %226 = vector.broadcast %cst_94 : f32 to vector<32x64xf32>
    %227 = arith.select %37, %220, %226 : vector<32x64xi1>, vector<32x64xf32>
    %228 = arith.select %38, %223, %219 : vector<32x64xi1>, vector<32x64xf32>
    %229 = arith.select %40, %225, %228 : vector<32x64xi1>, vector<32x64xf32>
    %230 = arith.select %42, %227, %229 : vector<32x64xi1>, vector<32x64xf32>
    %231 = arith.truncf %230 : vector<32x64xf32> to vector<32x64xbf16>
    %c1_95 = arith.constant 1 : index
    %c0_96 = arith.constant 0 : index
    %c0_97 = arith.constant 0 : index
    %232 = vector.load %arg4[%c1_95, %c0_96, %c0_97] : memref<2x64x192xbf16, #tpu.memory_space<vmem>>, vector<1x64x192xbf16>
    %233 = vector.shape_cast %232 : vector<1x64x192xbf16> to vector<64x192xbf16>
    %cst_98 = arith.constant dense<0.000000e+00> : vector<32x192xf32>
    %234 = tpu.matmul %231, %233, %cst_98 {dimension_numbers = #tpu.dot_dimension_numbers<[1], [0], [0], [1], [0, 0, 1, 1], [], []>} : vector<32x64xbf16>, vector<64x192xbf16>, vector<32x192xf32> -> vector<32x192xf32>
    %235 = vector.extract_strided_slice %234 {offsets = [0, 0], sizes = [32, 32], strides = [1, 1]} : vector<32x192xf32> to vector<32x32xf32>
    %236 = vector.extract_strided_slice %234 {offsets = [0, 32], sizes = [32, 32], strides = [1, 1]} : vector<32x192xf32> to vector<32x32xf32>
    %237 = tpu.concatenate %235, %236 in 0 : vector<32x32xf32>, vector<32x32xf32> -> vector<64x32xf32>
    %238 = vector.extract_strided_slice %234 {offsets = [0, 64], sizes = [32, 32], strides = [1, 1]} : vector<32x192xf32> to vector<32x32xf32>
    %239 = vector.extract_strided_slice %234 {offsets = [0, 96], sizes = [32, 32], strides = [1, 1]} : vector<32x192xf32> to vector<32x32xf32>
    %240 = tpu.concatenate %238, %239 in 0 : vector<32x32xf32>, vector<32x32xf32> -> vector<64x32xf32>
    %241 = vector.extract_strided_slice %234 {offsets = [0, 128], sizes = [32, 32], strides = [1, 1]} : vector<32x192xf32> to vector<32x32xf32>
    %242 = vector.extract_strided_slice %234 {offsets = [0, 160], sizes = [32, 32], strides = [1, 1]} : vector<32x192xf32> to vector<32x32xf32>
    %243 = tpu.concatenate %241, %242 in 0 : vector<32x32xf32>, vector<32x32xf32> -> vector<64x32xf32>
    %cst_99 = arith.constant 0.176776692 : f32
    %244 = vector.broadcast %cst_99 : f32 to vector<64x32xf32>
    %245 = arith.mulf %237, %244 : vector<64x32xf32>
    %cst_100 = arith.constant dense<0.000000e+00> : vector<64x64xf32>
    %246 = tpu.matmul %245, %240, %cst_100 {dimension_numbers = #tpu.dot_dimension_numbers<[1], [1], [0], [0], [0, 0, 1, 0], [], []>} : vector<64x32xf32>, vector<64x32xf32>, vector<64x64xf32> -> vector<64x64xf32>
    %cst_101 = arith.constant -1.000000e+30 : f32
    %247 = vector.broadcast %cst_101 : f32 to vector<64x64xf32>
    %248 = arith.select %14, %246, %247 : vector<64x64xi1>, vector<64x64xf32>
    %cst_102 = arith.constant dense<0xFF800000> : vector<64xf32>
    %249 = vector.multi_reduction <maximumf>, %248, %cst_102 [1] : vector<64x64xf32> to vector<64xf32>
    %250 = vector.shape_cast %249 : vector<64xf32> to vector<64x1xf32>
    %251 = vector.broadcast %250 : vector<64x1xf32> to vector<64x64xf32>
    %252 = arith.subf %248, %251 : vector<64x64xf32>
    %253 = math.exp %252 : vector<64x64xf32>
    %cst_103 = arith.constant dense<0.000000e+00> : vector<64xf32>
    %254 = vector.multi_reduction <add>, %253, %cst_103 [1] : vector<64x64xf32> to vector<64xf32>
    %255 = vector.shape_cast %254 : vector<64xf32> to vector<64x1xf32>
    %256 = tpu.reciprocal %255 {approx = true} : vector<64x1xf32> -> vector<64x1xf32>
    %257 = vector.broadcast %256 : vector<64x1xf32> to vector<64x64xf32>
    %258 = arith.mulf %253, %257 : vector<64x64xf32>
    %cst_104 = arith.constant dense<0.000000e+00> : vector<64x32xf32>
    %259 = tpu.matmul %258, %243, %cst_104 {dimension_numbers = #tpu.dot_dimension_numbers<[1], [0], [0], [1], [0, 0, 1, 1], [], []>} : vector<64x64xf32>, vector<64x32xf32>, vector<64x32xf32> -> vector<64x32xf32>
    %260 = vector.extract_strided_slice %259 {offsets = [0, 0], sizes = [32, 32], strides = [1, 1]} : vector<64x32xf32> to vector<32x32xf32>
    %261 = vector.extract_strided_slice %259 {offsets = [32, 0], sizes = [32, 32], strides = [1, 1]} : vector<64x32xf32> to vector<32x32xf32>
    %262 = tpu.concatenate %260, %261 in 1 : vector<32x32xf32>, vector<32x32xf32> -> vector<32x64xf32>
    %263 = arith.truncf %262 : vector<32x64xf32> to vector<32x64xbf16>
    %c1_105 = arith.constant 1 : index
    %c0_106 = arith.constant 0 : index
    %c0_107 = arith.constant 0 : index
    %264 = vector.load %arg5[%c1_105, %c0_106, %c0_107] : memref<2x64x64xbf16, #tpu.memory_space<vmem>>, vector<1x64x64xbf16>
    %265 = vector.shape_cast %264 : vector<1x64x64xbf16> to vector<64x64xbf16>
    %cst_108 = arith.constant dense<0.000000e+00> : vector<32x64xf32>
    %266 = tpu.matmul %263, %265, %cst_108 {dimension_numbers = #tpu.dot_dimension_numbers<[1], [0], [0], [1], [0, 0, 1, 1], [], []>} : vector<32x64xbf16>, vector<64x64xbf16>, vector<32x64xf32> -> vector<32x64xf32>
    %c1_109 = arith.constant 1 : index
    %c0_110 = arith.constant 0 : index
    %c0_111 = arith.constant 0 : index
    %267 = vector.load %arg6[%c1_109, %c0_110, %c0_111] : memref<2x1x64xf32, #tpu.memory_space<vmem>>, vector<1x1x64xf32>
    %268 = vector.shape_cast %267 : vector<1x1x64xf32> to vector<1x64xf32>
    %269 = vector.broadcast %268 : vector<1x64xf32> to vector<32x64xf32>
    %270 = arith.addf %266, %269 : vector<32x64xf32>
    %c1_112 = arith.constant 1 : index
    %c0_113 = arith.constant 0 : index
    %c0_114 = arith.constant 0 : index
    %271 = vector.load %arg7[%c1_112, %c0_113, %c0_114] : memref<2x1x64xf32, #tpu.memory_space<vmem>>, vector<1x1x64xf32>
    %272 = vector.shape_cast %271 : vector<1x1x64xf32> to vector<1x64xf32>
    %273 = vector.broadcast %272 : vector<1x64xf32> to vector<32x64xf32>
    %274 = arith.mulf %270, %273 : vector<32x64xf32>
    %275 = arith.addf %193, %274 : vector<32x64xf32>
    %c1_115 = arith.constant 1 : index
    %c0_116 = arith.constant 0 : index
    %c0_117 = arith.constant 0 : index
    %276 = vector.load %arg8[%c1_115, %c0_116, %c0_117] : memref<2x1x64xf32, #tpu.memory_space<vmem>>, vector<1x1x64xf32>
    %277 = vector.shape_cast %276 : vector<1x1x64xf32> to vector<1x64xf32>
    %c1_118 = arith.constant 1 : index
    %c0_119 = arith.constant 0 : index
    %c0_120 = arith.constant 0 : index
    %278 = vector.load %arg9[%c1_118, %c0_119, %c0_120] : memref<2x1x64xf32, #tpu.memory_space<vmem>>, vector<1x1x64xf32>
    %279 = vector.shape_cast %278 : vector<1x1x64xf32> to vector<1x64xf32>
    %cst_121 = arith.constant dense<0.000000e+00> : vector<32xf32>
    %280 = vector.multi_reduction <add>, %275, %cst_121 [1] : vector<32x64xf32> to vector<32xf32>
    %281 = vector.shape_cast %280 : vector<32xf32> to vector<32x1xf32>
    %cst_122 = arith.constant 6.400000e+01 : f32
    %282 = vector.broadcast %cst_122 : f32 to vector<32x1xf32>
    %283 = arith.divf %281, %282 : vector<32x1xf32>
    %284 = vector.broadcast %283 : vector<32x1xf32> to vector<32x64xf32>
    %285 = arith.subf %275, %284 : vector<32x64xf32>
    %286 = arith.mulf %285, %285 : vector<32x64xf32>
    %cst_123 = arith.constant dense<0.000000e+00> : vector<32xf32>
    %287 = vector.multi_reduction <add>, %286, %cst_123 [1] : vector<32x64xf32> to vector<32xf32>
    %288 = vector.shape_cast %287 : vector<32xf32> to vector<32x1xf32>
    %cst_124 = arith.constant 6.400000e+01 : f32
    %289 = vector.broadcast %cst_124 : f32 to vector<32x1xf32>
    %290 = arith.divf %288, %289 : vector<32x1xf32>
    %291 = vector.broadcast %283 : vector<32x1xf32> to vector<32x64xf32>
    %292 = arith.subf %275, %291 : vector<32x64xf32>
    %cst_125 = arith.constant 9.99999974E-6 : f32
    %293 = vector.broadcast %cst_125 : f32 to vector<32x1xf32>
    %294 = arith.addf %290, %293 : vector<32x1xf32>
    %295 = math.rsqrt %294 : vector<32x1xf32>
    %296 = vector.broadcast %295 : vector<32x1xf32> to vector<32x64xf32>
    %297 = arith.mulf %292, %296 : vector<32x64xf32>
    %298 = vector.broadcast %277 : vector<1x64xf32> to vector<32x64xf32>
    %299 = arith.mulf %297, %298 : vector<32x64xf32>
    %300 = vector.broadcast %279 : vector<1x64xf32> to vector<32x64xf32>
    %301 = arith.addf %299, %300 : vector<32x64xf32>
    %c1_i32_126 = arith.constant 1 : i32
    %302 = tpu.dynamic_rotate %301 by %c1_i32_126 dim 0 : vector<32x64xf32>, i32 -> vector<32x64xf32>
    %c4_i32_127 = arith.constant 4 : i32
    %303 = tpu.dynamic_rotate %301 by %c4_i32_127 dim 0 : vector<32x64xf32>, i32 -> vector<32x64xf32>
    %cst_128 = arith.constant 0.000000e+00 : f32
    %304 = vector.broadcast %cst_128 : f32 to vector<32x64xf32>
    %305 = arith.select %31, %302, %304 : vector<32x64xi1>, vector<32x64xf32>
    %cst_129 = arith.constant 0.000000e+00 : f32
    %306 = vector.broadcast %cst_129 : f32 to vector<32x64xf32>
    %307 = arith.select %33, %303, %306 : vector<32x64xi1>, vector<32x64xf32>
    %cst_130 = arith.constant 0.000000e+00 : f32
    %308 = vector.broadcast %cst_130 : f32 to vector<32x64xf32>
    %309 = arith.select %37, %302, %308 : vector<32x64xi1>, vector<32x64xf32>
    %310 = arith.select %38, %305, %301 : vector<32x64xi1>, vector<32x64xf32>
    %311 = arith.select %40, %307, %310 : vector<32x64xi1>, vector<32x64xf32>
    %312 = arith.select %42, %309, %311 : vector<32x64xi1>, vector<32x64xf32>
    %313 = arith.truncf %312 : vector<32x64xf32> to vector<32x64xbf16>
    %c1_131 = arith.constant 1 : index
    %c0_132 = arith.constant 0 : index
    %c0_133 = arith.constant 0 : index
    %314 = vector.load %arg10[%c1_131, %c0_132, %c0_133] : memref<2x64x512xbf16, #tpu.memory_space<vmem>>, vector<1x64x512xbf16>
    %315 = vector.shape_cast %314 : vector<1x64x512xbf16> to vector<64x512xbf16>
    %cst_134 = arith.constant dense<0.000000e+00> : vector<32x512xf32>
    %316 = tpu.matmul %313, %315, %cst_134 {dimension_numbers = #tpu.dot_dimension_numbers<[1], [0], [0], [1], [0, 0, 1, 1], [], []>} : vector<32x64xbf16>, vector<64x512xbf16>, vector<32x512xf32> -> vector<32x512xf32>
    %c1_135 = arith.constant 1 : index
    %c0_136 = arith.constant 0 : index
    %c0_137 = arith.constant 0 : index
    %317 = vector.load %arg11[%c1_135, %c0_136, %c0_137] : memref<2x1x512xf32, #tpu.memory_space<vmem>>, vector<1x1x512xf32>
    %318 = vector.shape_cast %317 : vector<1x1x512xf32> to vector<1x512xf32>
    %319 = vector.broadcast %318 : vector<1x512xf32> to vector<32x512xf32>
    %320 = arith.addf %316, %319 : vector<32x512xf32>
    %321 = vector.extract_strided_slice %320 {offsets = [0, 0], sizes = [32, 256], strides = [1, 1]} : vector<32x512xf32> to vector<32x256xf32>
    %322 = vector.extract_strided_slice %320 {offsets = [0, 256], sizes = [32, 256], strides = [1, 1]} : vector<32x512xf32> to vector<32x256xf32>
    %cst_138 = arith.constant 5.000000e-01 : f32
    %323 = vector.broadcast %cst_138 : f32 to vector<32x256xf32>
    %324 = arith.mulf %323, %322 : vector<32x256xf32>
    %cst_139 = arith.constant 0.707106769 : f32
    %325 = vector.broadcast %cst_139 : f32 to vector<32x256xf32>
    %326 = arith.mulf %322, %325 : vector<32x256xf32>
    %327 = math.erf %326 : vector<32x256xf32>
    %cst_140 = arith.constant 1.000000e+00 : f32
    %328 = vector.broadcast %cst_140 : f32 to vector<32x256xf32>
    %329 = arith.addf %328, %327 : vector<32x256xf32>
    %330 = arith.mulf %324, %329 : vector<32x256xf32>
    %331 = arith.mulf %321, %330 : vector<32x256xf32>
    %332 = arith.truncf %331 : vector<32x256xf32> to vector<32x256xbf16>
    %c1_141 = arith.constant 1 : index
    %c0_142 = arith.constant 0 : index
    %c0_143 = arith.constant 0 : index
    %333 = vector.load %arg12[%c1_141, %c0_142, %c0_143] : memref<2x256x64xbf16, #tpu.memory_space<vmem>>, vector<1x256x64xbf16>
    %334 = vector.shape_cast %333 : vector<1x256x64xbf16> to vector<256x64xbf16>
    %cst_144 = arith.constant dense<0.000000e+00> : vector<32x64xf32>
    %335 = tpu.matmul %332, %334, %cst_144 {dimension_numbers = #tpu.dot_dimension_numbers<[1], [0], [0], [1], [0, 0, 1, 1], [], []>} : vector<32x256xbf16>, vector<256x64xbf16>, vector<32x64xf32> -> vector<32x64xf32>
    %c1_145 = arith.constant 1 : index
    %c0_146 = arith.constant 0 : index
    %c0_147 = arith.constant 0 : index
    %336 = vector.load %arg13[%c1_145, %c0_146, %c0_147] : memref<2x1x64xf32, #tpu.memory_space<vmem>>, vector<1x1x64xf32>
    %337 = vector.shape_cast %336 : vector<1x1x64xf32> to vector<1x64xf32>
    %338 = vector.broadcast %337 : vector<1x64xf32> to vector<32x64xf32>
    %339 = arith.addf %335, %338 : vector<32x64xf32>
    %c1_148 = arith.constant 1 : index
    %c0_149 = arith.constant 0 : index
    %c0_150 = arith.constant 0 : index
    %340 = vector.load %arg14[%c1_148, %c0_149, %c0_150] : memref<2x1x64xf32, #tpu.memory_space<vmem>>, vector<1x1x64xf32>
    %341 = vector.shape_cast %340 : vector<1x1x64xf32> to vector<1x64xf32>
    %342 = vector.broadcast %341 : vector<1x64xf32> to vector<32x64xf32>
    %343 = arith.mulf %339, %342 : vector<32x64xf32>
    %344 = arith.addf %275, %343 : vector<32x64xf32>
    %c0_151 = arith.constant 0 : index
    %c0_152 = arith.constant 0 : index
    %345 = vector.load %arg15[%c0_151, %c0_152] : memref<1x64xf32, #tpu.memory_space<vmem>>, vector<1x64xf32>
    %c0_153 = arith.constant 0 : index
    %c0_154 = arith.constant 0 : index
    %346 = vector.load %arg16[%c0_153, %c0_154] : memref<1x64xf32, #tpu.memory_space<vmem>>, vector<1x64xf32>
    %cst_155 = arith.constant dense<0.000000e+00> : vector<32xf32>
    %347 = vector.multi_reduction <add>, %344, %cst_155 [1] : vector<32x64xf32> to vector<32xf32>
    %348 = vector.shape_cast %347 : vector<32xf32> to vector<32x1xf32>
    %cst_156 = arith.constant 6.400000e+01 : f32
    %349 = vector.broadcast %cst_156 : f32 to vector<32x1xf32>
    %350 = arith.divf %348, %349 : vector<32x1xf32>
    %351 = vector.broadcast %350 : vector<32x1xf32> to vector<32x64xf32>
    %352 = arith.subf %344, %351 : vector<32x64xf32>
    %353 = arith.mulf %352, %352 : vector<32x64xf32>
    %cst_157 = arith.constant dense<0.000000e+00> : vector<32xf32>
    %354 = vector.multi_reduction <add>, %353, %cst_157 [1] : vector<32x64xf32> to vector<32xf32>
    %355 = vector.shape_cast %354 : vector<32xf32> to vector<32x1xf32>
    %cst_158 = arith.constant 6.400000e+01 : f32
    %356 = vector.broadcast %cst_158 : f32 to vector<32x1xf32>
    %357 = arith.divf %355, %356 : vector<32x1xf32>
    %358 = vector.broadcast %350 : vector<32x1xf32> to vector<32x64xf32>
    %359 = arith.subf %344, %358 : vector<32x64xf32>
    %cst_159 = arith.constant 9.99999974E-6 : f32
    %360 = vector.broadcast %cst_159 : f32 to vector<32x1xf32>
    %361 = arith.addf %357, %360 : vector<32x1xf32>
    %362 = math.rsqrt %361 : vector<32x1xf32>
    %363 = vector.broadcast %362 : vector<32x1xf32> to vector<32x64xf32>
    %364 = arith.mulf %359, %363 : vector<32x64xf32>
    %365 = vector.broadcast %345 : vector<1x64xf32> to vector<32x64xf32>
    %366 = arith.mulf %364, %365 : vector<32x64xf32>
    %367 = vector.broadcast %346 : vector<1x64xf32> to vector<32x64xf32>
    %368 = arith.addf %366, %367 : vector<32x64xf32>
    %369 = arith.truncf %368 : vector<32x64xf32> to vector<32x64xbf16>
    %c0_160 = arith.constant 0 : index
    %c0_161 = arith.constant 0 : index
    %370 = vector.load %arg17[%c0_160, %c0_161] : memref<64x256xbf16, #tpu.memory_space<vmem>>, vector<64x256xbf16>
    %cst_162 = arith.constant dense<0.000000e+00> : vector<32x256xf32>
    %371 = tpu.matmul %369, %370, %cst_162 {dimension_numbers = #tpu.dot_dimension_numbers<[1], [0], [0], [1], [0, 0, 1, 1], [], []>} : vector<32x64xbf16>, vector<64x256xbf16>, vector<32x256xf32> -> vector<32x256xf32>
    %c0_163 = arith.constant 0 : index
    %c0_164 = arith.constant 0 : index
    %372 = vector.load %arg18[%c0_163, %c0_164] : memref<1x256xf32, #tpu.memory_space<vmem>>, vector<1x256xf32>
    %373 = vector.broadcast %372 : vector<1x256xf32> to vector<32x256xf32>
    %374 = arith.addf %371, %373 : vector<32x256xf32>
    %375 = tpu.iota {dimensions = array<i32: 0>} : vector<32x256xi32>
    %376 = tpu.iota {dimensions = array<i32: 1>} : vector<32x256xi32>
    %c16_i32_165 = arith.constant 16 : i32
    %377 = vector.broadcast %c16_i32_165 : i32 to vector<32x256xi32>
    %378 = arith.cmpi sge, %375, %377 : vector<32x256xi32>
    %c128_i32 = arith.constant 128 : i32
    %379 = vector.broadcast %c128_i32 : i32 to vector<32x256xi32>
    %380 = arith.cmpi slt, %376, %379 : vector<32x256xi32>
    %381 = arith.andi %378, %380 : vector<32x256xi1>
    %c16_i32_166 = arith.constant 16 : i32
    %382 = vector.broadcast %c16_i32_166 : i32 to vector<32x256xi32>
    %383 = arith.cmpi slt, %375, %382 : vector<32x256xi32>
    %c128_i32_167 = arith.constant 128 : i32
    %384 = vector.broadcast %c128_i32_167 : i32 to vector<32x256xi32>
    %385 = arith.cmpi sge, %376, %384 : vector<32x256xi32>
    %386 = arith.andi %383, %385 : vector<32x256xi1>
    %387 = arith.ori %381, %386 : vector<32x256xi1>
    %cst_168 = arith.constant -3.40282347E+38 : f32
    %388 = vector.broadcast %cst_168 : f32 to vector<32x256xf32>
    %389 = arith.select %387, %388, %374 : vector<32x256xi1>, vector<32x256xf32>
    %c0_169 = arith.constant 0 : index
    %c0_170 = arith.constant 0 : index
    %c0_171 = arith.constant 0 : index
    %390 = vector.load %arg19[%c0_169, %c0_170, %c0_171] : memref<1x32x256xf32, #tpu.memory_space<vmem>>, vector<1x32x256xf32>
    %391 = vector.shape_cast %390 : vector<1x32x256xf32> to vector<32x256xf32>
    %392 = vector.shape_cast %389 : vector<32x256xf32> to vector<1x32x256xf32>
    tpu.vector_store %arg19[%c0_169, %c0_170, %c0_171], %392 {strides = array<i32>} : memref<1x32x256xf32, #tpu.memory_space<vmem>>, vector<1x32x256xf32>,
    return
  }
  func.func @transform_0(%arg0: i32) -> (i32, i32, i32) {
    %c0_i32 = arith.constant 0 : i32
    %c0_i32_0 = arith.constant 0 : i32
    %c0_i32_1 = arith.constant 0 : i32
    return %arg0, %c0_i32, %c0_i32_0 : i32, i32, i32
  }
  func.func @transform_1(%arg0: i32) -> (i32, i32, i32) {
    %c0_i32 = arith.constant 0 : i32
    %c0_i32_0 = arith.constant 0 : i32
    %c0_i32_1 = arith.constant 0 : i32
    %c0_i32_2 = arith.constant 0 : i32
    return %c0_i32, %c0_i32_0, %c0_i32_1 : i32, i32, i32
  }
  func.func @transform_2(%arg0: i32) -> (i32, i32, i32) {
    %c0_i32 = arith.constant 0 : i32
    %c0_i32_0 = arith.constant 0 : i32
    %c0_i32_1 = arith.constant 0 : i32
    %c0_i32_2 = arith.constant 0 : i32
    return %c0_i32, %c0_i32_0, %c0_i32_1 : i32, i32, i32
  }
  func.func @transform_3(%arg0: i32) -> (i32, i32, i32) {
    %c0_i32 = arith.constant 0 : i32
    %c0_i32_0 = arith.constant 0 : i32
    %c0_i32_1 = arith.constant 0 : i32
    %c0_i32_2 = arith.constant 0 : i32
    return %c0_i32, %c0_i32_0, %c0_i32_1 : i32, i32, i32
  }
  func.func @transform_4(%arg0: i32) -> (i32, i32, i32) {
    %c0_i32 = arith.constant 0 : i32
    %c0_i32_0 = arith.constant 0 : i32
    %c0_i32_1 = arith.constant 0 : i32
    %c0_i32_2 = arith.constant 0 : i32
    return %c0_i32, %c0_i32_0, %c0_i32_1 : i32, i32, i32
  }
  func.func @transform_5(%arg0: i32) -> (i32, i32, i32) {
    %c0_i32 = arith.constant 0 : i32
    %c0_i32_0 = arith.constant 0 : i32
    %c0_i32_1 = arith.constant 0 : i32
    %c0_i32_2 = arith.constant 0 : i32
    return %c0_i32, %c0_i32_0, %c0_i32_1 : i32, i32, i32
  }
  func.func @transform_6(%arg0: i32) -> (i32, i32, i32) {
    %c0_i32 = arith.constant 0 : i32
    %c0_i32_0 = arith.constant 0 : i32
    %c0_i32_1 = arith.constant 0 : i32
    %c0_i32_2 = arith.constant 0 : i32
    return %c0_i32, %c0_i32_0, %c0_i32_1 : i32, i32, i32
  }
  func.func @transform_7(%arg0: i32) -> (i32, i32, i32) {
    %c0_i32 = arith.constant 0 : i32
    %c0_i32_0 = arith.constant 0 : i32
    %c0_i32_1 = arith.constant 0 : i32
    %c0_i32_2 = arith.constant 0 : i32
    return %c0_i32, %c0_i32_0, %c0_i32_1 : i32, i32, i32
  }
  func.func @transform_8(%arg0: i32) -> (i32, i32, i32) {
    %c0_i32 = arith.constant 0 : i32
    %c0_i32_0 = arith.constant 0 : i32
    %c0_i32_1 = arith.constant 0 : i32
    %c0_i32_2 = arith.constant 0 : i32
    return %c0_i32, %c0_i32_0, %c0_i32_1 : i32, i32, i32
  }
  func.func @transform_9(%arg0: i32) -> (i32, i32, i32) {
    %c0_i32 = arith.constant 0 : i32
    %c0_i32_0 = arith.constant 0 : i32
    %c0_i32_1 = arith.constant 0 : i32
    %c0_i32_2 = arith.constant 0 : i32
    return %c0_i32, %c0_i32_0, %c0_i32_1 : i32, i32, i32
  }
  func.func @transform_10(%arg0: i32) -> (i32, i32, i32) {
    %c0_i32 = arith.constant 0 : i32
    %c0_i32_0 = arith.constant 0 : i32
    %c0_i32_1 = arith.constant 0 : i32
    %c0_i32_2 = arith.constant 0 : i32
    return %c0_i32, %c0_i32_0, %c0_i32_1 : i32, i32, i32
  }
  func.func @transform_11(%arg0: i32) -> (i32, i32, i32) {
    %c0_i32 = arith.constant 0 : i32
    %c0_i32_0 = arith.constant 0 : i32
    %c0_i32_1 = arith.constant 0 : i32
    %c0_i32_2 = arith.constant 0 : i32
    return %c0_i32, %c0_i32_0, %c0_i32_1 : i32, i32, i32
  }
  func.func @transform_12(%arg0: i32) -> (i32, i32, i32) {
    %c0_i32 = arith.constant 0 : i32
    %c0_i32_0 = arith.constant 0 : i32
    %c0_i32_1 = arith.constant 0 : i32
    %c0_i32_2 = arith.constant 0 : i32
    return %c0_i32, %c0_i32_0, %c0_i32_1 : i32, i32, i32
  }
  func.func @transform_13(%arg0: i32) -> (i32, i32, i32) {
    %c0_i32 = arith.constant 0 : i32
    %c0_i32_0 = arith.constant 0 : i32
    %c0_i32_1 = arith.constant 0 : i32
    %c0_i32_2 = arith.constant 0 : i32
    return %c0_i32, %c0_i32_0, %c0_i32_1 : i32, i32, i32
  }
  func.func @transform_14(%arg0: i32) -> (i32, i32) {
    %c0_i32 = arith.constant 0 : i32
    %c0_i32_0 = arith.constant 0 : i32
    %c0_i32_1 = arith.constant 0 : i32
    return %c0_i32, %c0_i32_0 : i32, i32
  }
  func.func @transform_15(%arg0: i32) -> (i32, i32) {
    %c0_i32 = arith.constant 0 : i32
    %c0_i32_0 = arith.constant 0 : i32
    %c0_i32_1 = arith.constant 0 : i32
    return %c0_i32, %c0_i32_0 : i32, i32
  }
  func.func @transform_16(%arg0: i32) -> (i32, i32) {
    %c0_i32 = arith.constant 0 : i32
    %c0_i32_0 = arith.constant 0 : i32
    %c0_i32_1 = arith.constant 0 : i32
    return %c0_i32, %c0_i32_0 : i32, i32
  }
  func.func @transform_17(%arg0: i32) -> (i32, i32) {
    %c0_i32 = arith.constant 0 : i32
    %c0_i32_0 = arith.constant 0 : i32
    %c0_i32_1 = arith.constant 0 : i32
    return %c0_i32, %c0_i32_0 : i32, i32
  }
  func.func @transform_18(%arg0: i32) -> (i32, i32, i32) {
    %c0_i32 = arith.constant 0 : i32
    %c0_i32_0 = arith.constant 0 : i32
    %c0_i32_1 = arith.constant 0 : i32
    return %arg0, %c0_i32, %c0_i32_0 : i32, i32, i32
  }
}

</mosaic_0001>

<llo_original>
// kernel: dalle_forward.1
$region0: #{dalle_forward.1}
  #allocation0 [shape = 'u32[]', space=smem, size = 0x4, offset = 0x4, fixed_abs, tag = 'smem constant byte address 0x4 - core index']
  #allocation1 [shape = 'u32[144,128]{1,0:T(1,128)}', space=vmem, size = 0x12000, scoped, tag = 'internal scratch']
  %s0 = inlined_call_operand.vmem [shape: f32[2,32,64], index: 0, kind: input, shape index: {}]
  %s1 = inlined_call_operand.vmem [shape: f32[2,1,64], index: 1, kind: input, shape index: {}]
  %s2 = inlined_call_operand.vmem [shape: f32[2,1,64], index: 2, kind: input, shape index: {}]
  %s3 = inlined_call_operand.vmem [shape: bf16[2,64,192], index: 3, kind: input, shape index: {}]
  %s4 = inlined_call_operand.vmem [shape: bf16[2,64,64], index: 4, kind: input, shape index: {}]
  %s5 = inlined_call_operand.vmem [shape: f32[2,1,64], index: 5, kind: input, shape index: {}]
  %s6 = inlined_call_operand.vmem [shape: f32[2,1,64], index: 6, kind: input, shape index: {}]
  %s7 = inlined_call_operand.vmem [shape: f32[2,1,64], index: 7, kind: input, shape index: {}]
  %s8 = inlined_call_operand.vmem [shape: f32[2,1,64], index: 8, kind: input, shape index: {}]
  %s9 = inlined_call_operand.vmem [shape: bf16[2,64,512], index: 9, kind: input, shape index: {}]
  %s10 = inlined_call_operand.vmem [shape: f32[2,1,512], index: 10, kind: input, shape index: {}]
  %s11 = inlined_call_operand.vmem [shape: bf16[2,256,64], index: 11, kind: input, shape index: {}]
  %s12 = inlined_call_operand.vmem [shape: f32[2,1,64], index: 12, kind: input, shape index: {}]
  %s13 = inlined_call_operand.vmem [shape: f32[2,1,64], index: 13, kind: input, shape index: {}]
  %s14 = inlined_call_operand.vmem [shape: f32[1,64], index: 14, kind: input, shape index: {}]
  %s15 = inlined_call_operand.vmem [shape: f32[1,64], index: 15, kind: input, shape index: {}]
  %s16 = inlined_call_operand.vmem [shape: bf16[64,256], index: 16, kind: input, shape index: {}]
  %s17 = inlined_call_operand.vmem [shape: f32[1,256], index: 17, kind: input, shape index: {}]
  %s18 = inlined_call_operand.hbm [shape: f32[2,32,256], index: 18, kind: output, shape index: {}]
  %s19 = sld [smem:[#allocation0]]
  $region105: #{dalle_forward.1} parent=0
    _
  %s21 = ssub.s32 1, %s19
  %s22 = scalar_select 0, %s21, %s19
  $region1: #{dalle_forward.1} parent=0
    #allocation2 [shape = 'u8[65536]{0}', space=vmem, size = 0x10000, scoped, tag = 'output window, operand 0']
    #allocation3 [shape = 's32[2]{0}', space=sflag, size = 0x8, scoped, tag = 'scoped memory for dalle_forward.1']
    %23 = vsyncpa [#allocation3], 0
    %s24 = scalar_lea.sflag [#allocation3], 1
    %25 = vsyncpa %s24, 0
    loop: start=0, step=1, limit=4
    $region2: #{dalle_forward.1} parent=1 // loop_pre_header
      _
    $region3: #{dalle_forward.1} parent=1 // loop_header
      %s27 = sphi 0, %s31
      %p28 = scmp.ge.s32.totalorder %s27, 4
      %s37 = sphi 0, %s39
      %s40 = sphi 0, %s37
      %s41 = sphi 0, %s40
      %s57 = sphi 0, %s41
      %s61 = sphi 0, %s61
      %s63 = sphi 0, %s61
      %s64 = sphi 0, %s63
      %s78 = sphi 0, %s64
      %s82 = sphi 0, %s82
      %s84 = sphi 0, %s82
      %s85 = sphi 0, %s84
      %s99 = sphi 0, %s85
      %s103 = sphi 0, %s103
      %s105 = sphi 0, %s103
      %s106 = sphi 0, %s105
      %s120 = sphi 0, %s106
      %s124 = sphi 0, %s124
      %s126 = sphi 0, %s124
      %s127 = sphi 0, %s126
      %s141 = sphi 0, %s127
      %s145 = sphi 0, %s145
      %s147 = sphi 0, %s145
      %s148 = sphi 0, %s147
      %s162 = sphi 0, %s148
      %s166 = sphi 0, %s166
      %s168 = sphi 0, %s166
      %s169 = sphi 0, %s168
      %s183 = sphi 0, %s169
      %s187 = sphi 0, %s187
      %s189 = sphi 0, %s187
      %s190 = sphi 0, %s189
      %s204 = sphi 0, %s190
      %s208 = sphi 0, %s208
      %s210 = sphi 0, %s208
      %s211 = sphi 0, %s210
      %s225 = sphi 0, %s211
      %s229 = sphi 0, %s229
      %s231 = sphi 0, %s229
      %s232 = sphi 0, %s231
      %s246 = sphi 0, %s232
      %s250 = sphi 0, %s250
      %s252 = sphi 0, %s250
      %s253 = sphi 0, %s252
      %s267 = sphi 0, %s253
      %s271 = sphi 0, %s271
      %s273 = sphi 0, %s271
      %s274 = sphi 0, %s273
      %s288 = sphi 0, %s274
      %s292 = sphi 0, %s292
      %s294 = sphi 0, %s292
      %s295 = sphi 0, %s294
      %s309 = sphi 0, %s295
      %s313 = sphi 0, %s313
      %s315 = sphi 0, %s313
      %s316 = sphi 0, %s315
      %s330 = sphi 0, %s316
      %s334 = sphi 0, %s334
      %s336 = sphi 0, %s334
      %s337 = sphi 0, %s336
      %s351 = sphi 0, %s337
      %s355 = sphi 0, %s355
      %s357 = sphi 0, %s355
      %s358 = sphi 0, %s357
      %s372 = sphi 0, %s358
      %s376 = sphi 0, %s376
      %s378 = sphi 0, %s376
      %s379 = sphi 0, %s378
      %s393 = sphi 0, %s379
      %s397 = sphi 0, %s397
      %s399 = sphi 0, %s397
      %s400 = sphi 0, %s399
      %s414 = sphi 0, %s400
      %s420 = sphi 0, %s422
      %s423 = sphi 0, %s420
      %s424 = sphi 0, %s423
      %s440 = sphi 0, %s424
    $region4: #{dalle_forward.1} parent=1 // loop_header_branch
      %30 = sbr.rel (%p28) target = $region8
    $region5: #{dalle_forward.1} parent=1 // loop_body
      %s32 = ssub.s32 %s27, 1
      %s33 = ssub.s32 %s27, 2
      %s34 = sadd.s32 %s27, 1
      %s35 = ssub.s32 %s27, %s34
      %p36 = scmp.eq.s32.totalorder %s35, 0
      %s38 = sadd.s32 %s37, 1
      %s39 = scalar_select %p36, %s37, %s38
      %p42 = pneg %p36
      %p43 = scmp.eq.s32.totalorder %s27, 1
      %p44 = por %p42, %p43
      %p45 = scmp.ne.s32.totalorder %s37, %s40
      %p46 = scmp.eq.s32.totalorder %s27, 0
      %p47 = por %p45, %p46
      %p48 = scmp.ne.s32.totalorder %s37, %s40
      %p49 = scmp.eq.s32.totalorder %s32, 1
      %p50 = por %p48, %p49
      %p51 = scmp.ne.s32.totalorder %s40, %s41
      %p52 = scmp.eq.s32.totalorder %s32, 0
      %p53 = por %p51, %p52
      %p54 = scmp.ne.s32.totalorder %s40, %s41
      %p55 = scmp.eq.s32.totalorder %s33, 1
      %p56 = por %p54, %p55
      %p58 = scmp.ne.s32.totalorder %s41, %s57
      %p59 = scmp.eq.s32.totalorder %s33, 0
      %p60 = por %p58, %p59
      %s62 = sadd.s32 %s61, 1
      %p65 = scmp.eq.s32.totalorder %s27, 1
      %p66 = scmp.ne.s32.totalorder %s61, %s63
      %p67 = scmp.eq.s32.totalorder %s27, 0
      %p68 = por %p66, %p67
      %p69 = scmp.ne.s32.totalorder %s61, %s63
      %p70 = scmp.eq.s32.totalorder %s32, 1
      %p71 = por %p69, %p70
      %p72 = scmp.ne.s32.totalorder %s63, %s64
      %p73 = scmp.eq.s32.totalorder %s32, 0
      %p74 = por %p72, %p73
      %p75 = scmp.ne.s32.totalorder %s63, %s64
      %p76 = scmp.eq.s32.totalorder %s33, 1
      %p77 = por %p75, %p76
      %p79 = scmp.ne.s32.totalorder %s64, %s78
      %p80 = scmp.eq.s32.totalorder %s33, 0
      %p81 = por %p79, %p80
      %s83 = sadd.s32 %s82, 1
      %p86 = scmp.eq.s32.totalorder %s27, 1
      %p87 = scmp.ne.s32.totalorder %s82, %s84
      %p88 = scmp.eq.s32.totalorder %s27, 0
      %p89 = por %p87, %p88
      %p90 = scmp.ne.s32.totalorder %s82, %s84
      %p91 = scmp.eq.s32.totalorder %s32, 1
      %p92 = por %p90, %p91
      %p93 = scmp.ne.s32.totalorder %s84, %s85
      %p94 = scmp.eq.s32.totalorder %s32, 0
      %p95 = por %p93, %p94
      %p96 = scmp.ne.s32.totalorder %s84, %s85
      %p97 = scmp.eq.s32.totalorder %s33, 1
      %p98 = por %p96, %p97
      %p100 = scmp.ne.s32.totalorder %s85, %s99
      %p101 = scmp.eq.s32.totalorder %s33, 0
      %p102 = por %p100, %p101
      %s104 = sadd.s32 %s103, 1
      %p107 = scmp.eq.s32.totalorder %s27, 1
      %p108 = scmp.ne.s32.totalorder %s103, %s105
      %p109 = scmp.eq.s32.totalorder %s27, 0
      %p110 = por %p108, %p109
      %p111 = scmp.ne.s32.totalorder %s103, %s105
      %p112 = scmp.eq.s32.totalorder %s32, 1
      %p113 = por %p111, %p112
      %p114 = scmp.ne.s32.totalorder %s105, %s106
      %p115 = scmp.eq.s32.totalorder %s32, 0
      %p116 = por %p114, %p115
      %p117 = scmp.ne.s32.totalorder %s105, %s106
      %p118 = scmp.eq.s32.totalorder %s33, 1
      %p119 = por %p117, %p118
      %p121 = scmp.ne.s32.totalorder %s106, %s120
      %p122 = scmp.eq.s32.totalorder %s33, 0
      %p123 = por %p121, %p122
      %s125 = sadd.s32 %s124, 1
      %p128 = scmp.eq.s32.totalorder %s27, 1
      %p129 = scmp.ne.s32.totalorder %s124, %s126
      %p130 = scmp.eq.s32.totalorder %s27, 0
      %p131 = por %p129, %p130
      %p132 = scmp.ne.s32.totalorder %s124, %s126
      %p133 = scmp.eq.s32.totalorder %s32, 1
      %p134 = por %p132, %p133
      %p135 = scmp.ne.s32.totalorder %s126, %s127
      %p136 = scmp.eq.s32.totalorder %s32, 0
      %p137 = por %p135, %p136
      %p138 = scmp.ne.s32.totalorder %s126, %s127
      %p139 = scmp.eq.s32.totalorder %s33, 1
      %p140 = por %p138, %p139
      %p142 = scmp.ne.s32.totalorder %s127, %s141
      %p143 = scmp.eq.s32.totalorder %s33, 0
      %p144 = por %p142, %p143
      %s146 = sadd.s32 %s145, 1
      %p149 = scmp.eq.s32.totalorder %s27, 1
      %p150 = scmp.ne.s32.totalorder %s145, %s147
      %p151 = scmp.eq.s32.totalorder %s27, 0
      %p152 = por %p150, %p151
      %p153 = scmp.ne.s32.totalorder %s145, %s147
      %p154 = scmp.eq.s32.totalorder %s32, 1
      %p155 = por %p153, %p154
      %p156 = scmp.ne.s32.totalorder %s147, %s148
      %p157 = scmp.eq.s32.totalorder %s32, 0
      %p158 = por %p156, %p157
      %p159 = scmp.ne.s32.totalorder %s147, %s148
      %p160 = scmp.eq.s32.totalorder %s33, 1
      %p161 = por %p159, %p160
      %p163 = scmp.ne.s32.totalorder %s148, %s162
      %p164 = scmp.eq.s32.totalorder %s33, 0
      %p165 = por %p163, %p164
      %s167 = sadd.s32 %s166, 1
      %p170 = scmp.eq.s32.totalorder %s27, 1
      %p171 = scmp.ne.s32.totalorder %s166, %s168
      %p172 = scmp.eq.s32.totalorder %s27, 0
      %p173 = por %p171, %p172
      %p174 = scmp.ne.s32.totalorder %s166, %s168
      %p175 = scmp.eq.s32.totalorder %s32, 1
      %p176 = por %p174, %p175
      %p177 = scmp.ne.s32.totalorder %s168, %s169
      %p178 = scmp.eq.s32.totalorder %s32, 0
      %p179 = por %p177, %p178
      %p180 = scmp.ne.s32.totalorder %s168, %s169
      %p181 = scmp.eq.s32.totalorder %s33, 1
      %p182 = por %p180, %p181
      %p184 = scmp.ne.s32.totalorder %s169, %s183
      %p185 = scmp.eq.s32.totalorder %s33, 0
      %p186 = por %p184, %p185
      %s188 = sadd.s32 %s187, 1
      %p191 = scmp.eq.s32.totalorder %s27, 1
      %p192 = scmp.ne.s32.totalorder %s187, %s189
      %p193 = scmp.eq.s32.totalorder %s27, 0
      %p194 = por %p192, %p193
      %p195 = scmp.ne.s32.totalorder %s187, %s189
      %p196 = scmp.eq.s32.totalorder %s32, 1
      %p197 = por %p195, %p196
      %p198 = scmp.ne.s32.totalorder %s189, %s190
      %p199 = scmp.eq.s32.totalorder %s32, 0
      %p200 = por %p198, %p199
      %p201 = scmp.ne.s32.totalorder %s189, %s190
      %p202 = scmp.eq.s32.totalorder %s33, 1
      %p203 = por %p201, %p202
      %p205 = scmp.ne.s32.totalorder %s190, %s204
      %p206 = scmp.eq.s32.totalorder %s33, 0
      %p207 = por %p205, %p206
      %s209 = sadd.s32 %s208, 1
      %p212 = scmp.eq.s32.totalorder %s27, 1
      %p213 = scmp.ne.s32.totalorder %s208, %s210
      %p214 = scmp.eq.s32.totalorder %s27, 0
      %p215 = por %p213, %p214
      %p216 = scmp.ne.s32.totalorder %s208, %s210
      %p217 = scmp.eq.s32.totalorder %s32, 1
      %p218 = por %p216, %p217
      %p219 = scmp.ne.s32.totalorder %s210, %s211
      %p220 = scmp.eq.s32.totalorder %s32, 0
      %p221 = por %p219, %p220
      %p222 = scmp.ne.s32.totalorder %s210, %s211
      %p223 = scmp.eq.s32.totalorder %s33, 1
      %p224 = por %p222, %p223
      %p226 = scmp.ne.s32.totalorder %s211, %s225
      %p227 = scmp.eq.s32.totalorder %s33, 0
      %p228 = por %p226, %p227
      %s230 = sadd.s32 %s229, 1
      %p233 = scmp.eq.s32.totalorder %s27, 1
      %p234 = scmp.ne.s32.totalorder %s229, %s231
      %p235 = scmp.eq.s32.totalorder %s27, 0
      %p236 = por %p234, %p235
      %p237 = scmp.ne.s32.totalorder %s229, %s231
      %p238 = scmp.eq.s32.totalorder %s32, 1
      %p239 = por %p237, %p238
      %p240 = scmp.ne.s32.totalorder %s231, %s232
      %p241 = scmp.eq.s32.totalorder %s32, 0
      %p242 = por %p240, %p241
      %p243 = scmp.ne.s32.totalorder %s231, %s232
      %p244 = scmp.eq.s32.totalorder %s33, 1
      %p245 = por %p243, %p244
      %p247 = scmp.ne.s32.totalorder %s232, %s246
      %p248 = scmp.eq.s32.totalorder %s33, 0
      %p249 = por %p247, %p248
      %s251 = sadd.s32 %s250, 1
      %p254 = scmp.eq.s32.totalorder %s27, 1
      %p255 = scmp.ne.s32.totalorder %s250, %s252
      %p256 = scmp.eq.s32.totalorder %s27, 0
      %p257 = por %p255, %p256
      %p258 = scmp.ne.s32.totalorder %s250, %s252
      %p259 = scmp.eq.s32.totalorder %s32, 1
      %p260 = por %p258, %p259
      %p261 = scmp.ne.s32.totalorder %s252, %s253
      %p262 = scmp.eq.s32.totalorder %s32, 0
      %p263 = por %p261, %p262
      %p264 = scmp.ne.s32.totalorder %s252, %s253
      %p265 = scmp.eq.s32.totalorder %s33, 1
      %p266 = por %p264, %p265
      %p268 = scmp.ne.s32.totalorder %s253, %s267
      %p269 = scmp.eq.s32.totalorder %s33, 0
      %p270 = por %p268, %p269
      %s272 = sadd.s32 %s271, 1
      %p275 = scmp.eq.s32.totalorder %s27, 1
      %p276 = scmp.ne.s32.totalorder %s271, %s273
      %p277 = scmp.eq.s32.totalorder %s27, 0
      %p278 = por %p276, %p277
      %p279 = scmp.ne.s32.totalorder %s271, %s273
      %p280 = scmp.eq.s32.totalorder %s32, 1
      %p281 = por %p279, %p280
      %p282 = scmp.ne.s32.totalorder %s273, %s274
      %p283 = scmp.eq.s32.totalorder %s32, 0
      %p284 = por %p282, %p283
      %p285 = scmp.ne.s32.totalorder %s273, %s274
      %p286 = scmp.eq.s32.totalorder %s33, 1
      %p287 = por %p285, %p286
      %p289 = scmp.ne.s32.totalorder %s274, %s288
      %p290 = scmp.eq.s32.totalorder %s33, 0
      %p291 = por %p289, %p290
      %s293 = sadd.s32 %s292, 1
      %p296 = scmp.eq.s32.totalorder %s27, 1
      %p297 = scmp.ne.s32.totalorder %s292, %s294
      %p298 = scmp.eq.s32.totalorder %s27, 0
      %p299 = por %p297, %p298
      %p300 = scmp.ne.s32.totalorder %s292, %s294
      %p301 = scmp.eq.s32.totalorder %s32, 1
      %p302 = por %p300, %p301
      %p303 = scmp.ne.s32.totalorder %s294, %s295
      %p304 = scmp.eq.s32.totalorder %s32, 0
      %p305 = por %p303, %p304
      %p306 = scmp.ne.s32.totalorder %s294, %s295
      %p307 = scmp.eq.s32.totalorder %s33, 1
      %p308 = por %p306, %p307
      %p310 = scmp.ne.s32.totalorder %s295, %s309
      %p311 = scmp.eq.s32.totalorder %s33, 0
      %p312 = por %p310, %p311
      %s314 = sadd.s32 %s313, 1
      %p317 = scmp.eq.s32.totalorder %s27, 1
      %p318 = scmp.ne.s32.totalorder %s313, %s315
      %p319 = scmp.eq.s32.totalorder %s27, 0
      %p320 = por %p318, %p319
      %p321 = scmp.ne.s32.totalorder %s313, %s315
      %p322 = scmp.eq.s32.totalorder %s32, 1
      %p323 = por %p321, %p322
      %p324 = scmp.ne.s32.totalorder %s315, %s316
      %p325 = scmp.eq.s32.totalorder %s32, 0
      %p326 = por %p324, %p325
      %p327 = scmp.ne.s32.totalorder %s315, %s316
      %p328 = scmp.eq.s32.totalorder %s33, 1
      %p329 = por %p327, %p328
      %p331 = scmp.ne.s32.totalorder %s316, %s330
      %p332 = scmp.eq.s32.totalorder %s33, 0
      %p333 = por %p331, %p332
      %s335 = sadd.s32 %s334, 1
      %p338 = scmp.eq.s32.totalorder %s27, 1
      %p339 = scmp.ne.s32.totalorder %s334, %s336
      %p340 = scmp.eq.s32.totalorder %s27, 0
      %p341 = por %p339, %p340
      %p342 = scmp.ne.s32.totalorder %s334, %s336
      %p343 = scmp.eq.s32.totalorder %s32, 1
      %p344 = por %p342, %p343
      %p345 = scmp.ne.s32.totalorder %s336, %s337
      %p346 = scmp.eq.s32.totalorder %s32, 0
      %p347 = por %p345, %p346
      %p348 = scmp.ne.s32.totalorder %s336, %s337
      %p349 = scmp.eq.s32.totalorder %s33, 1
      %p350 = por %p348, %p349
      %p352 = scmp.ne.s32.totalorder %s337, %s351
      %p353 = scmp.eq.s32.totalorder %s33, 0
      %p354 = por %p352, %p353
      %s356 = sadd.s32 %s355, 1
      %p359 = scmp.eq.s32.totalorder %s27, 1
      %p360 = scmp.ne.s32.totalorder %s355, %s357
      %p361 = scmp.eq.s32.totalorder %s27, 0
      %p362 = por %p360, %p361
      %p363 = scmp.ne.s32.totalorder %s355, %s357
      %p364 = scmp.eq.s32.totalorder %s32, 1
      %p365 = por %p363, %p364
      %p366 = scmp.ne.s32.totalorder %s357, %s358
      %p367 = scmp.eq.s32.totalorder %s32, 0
      %p368 = por %p366, %p367
      %p369 = scmp.ne.s32.totalorder %s357, %s358
      %p370 = scmp.eq.s32.totalorder %s33, 1
      %p371 = por %p369, %p370
      %p373 = scmp.ne.s32.totalorder %s358, %s372
      %p374 = scmp.eq.s32.totalorder %s33, 0
      %p375 = por %p373, %p374
      %s377 = sadd.s32 %s376, 1
      %p380 = scmp.eq.s32.totalorder %s27, 1
      %p381 = scmp.ne.s32.totalorder %s376, %s378
      %p382 = scmp.eq.s32.totalorder %s27, 0
      %p383 = por %p381, %p382
      %p384 = scmp.ne.s32.totalorder %s376, %s378
      %p385 = scmp.eq.s32.totalorder %s32, 1
      %p386 = por %p384, %p385
      %p387 = scmp.ne.s32.totalorder %s378, %s379
      %p388 = scmp.eq.s32.totalorder %s32, 0
      %p389 = por %p387, %p388
      %p390 = scmp.ne.s32.totalorder %s378, %s379
      %p391 = scmp.eq.s32.totalorder %s33, 1
      %p392 = por %p390, %p391
      %p394 = scmp.ne.s32.totalorder %s379, %s393
      %p395 = scmp.eq.s32.totalorder %s33, 0
      %p396 = por %p394, %p395
      %s398 = sadd.s32 %s397, 1
      %p401 = scmp.eq.s32.totalorder %s27, 1
      %p402 = scmp.ne.s32.totalorder %s397, %s399
      %p403 = scmp.eq.s32.totalorder %s27, 0
      %p404 = por %p402, %p403
      %p405 = scmp.ne.s32.totalorder %s397, %s399
      %p406 = scmp.eq.s32.totalorder %s32, 1
      %p407 = por %p405, %p406
      %p408 = scmp.ne.s32.totalorder %s399, %s400
      %p409 = scmp.eq.s32.totalorder %s32, 0
      %p410 = por %p408, %p409
      %p411 = scmp.ne.s32.totalorder %s399, %s400
      %p412 = scmp.eq.s32.totalorder %s33, 1
      %p413 = por %p411, %p412
      %p415 = scmp.ne.s32.totalorder %s400, %s414
      %p416 = scmp.eq.s32.totalorder %s33, 0
      %p417 = por %p415, %p416
      %s418 = ssub.s32 %s27, %s34
      %p419 = scmp.eq.s32.totalorder %s418, 0
      %s421 = sadd.s32 %s420, 1
      %s422 = scalar_select %p419, %s420, %s421
      %p425 = pneg %p419
      %p426 = scmp.eq.s32.totalorder %s27, 1
      %p427 = por %p425, %p426
      %p428 = scmp.ne.s32.totalorder %s420, %s423
      %p429 = scmp.eq.s32.totalorder %s27, 0
      %p430 = por %p428, %p429
      %p431 = scmp.ne.s32.totalorder %s420, %s423
      %p432 = scmp.eq.s32.totalorder %s32, 1
      %p433 = por %p431, %p432
      %p434 = scmp.ne.s32.totalorder %s423, %s424
      %p435 = scmp.eq.s32.totalorder %s32, 0
      %p436 = por %p434, %p435
      %p437 = scmp.ne.s32.totalorder %s423, %s424
      %p438 = scmp.eq.s32.totalorder %s33, 1
      %p439 = por %p437, %p438
      %p441 = scmp.ne.s32.totalorder %s424, %s440
      %p442 = scmp.eq.s32.totalorder %s33, 0
      %p443 = por %p441, %p442
      %p444 = scmp.le.s32.totalorder 1, %s27
      %p445 = scmp.lt.s32.totalorder %s27, 3
      %p446 = pnand %p444, %p445
      %p447 = pneg %p446
      // Predicated region
      $region9: #{dalle_forward.1} parent=5 // pred_check
        _
      $region10: #{dalle_forward.1} parent=5 // pred_check_branch
        %449 = sbr.rel (%p446) target = $region12
      $region11: #{dalle_forward.1} parent=5 // pred_region
        %s450 = ssub.s32 %s27, 1
        // Predicated region
        $region13: #{dalle_forward.1} parent=11 // pred_check
          %p451 = pneg %p74
        $region14: #{dalle_forward.1} parent=11 // pred_check_branch
          %453 = sbr.rel (%p451) target = $region16
        $region15: #{dalle_forward.1} parent=11 // pred_region
          _
        $region16: #{dalle_forward.1} parent=11 // pred_fallthru
          _
        // Predicated region
        $region17: #{dalle_forward.1} parent=11 // pred_check
          %p454 = pneg %p95
        $region18: #{dalle_forward.1} parent=11 // pred_check_branch
          %456 = sbr.rel (%p454) target = $region20
        $region19: #{dalle_forward.1} parent=11 // pred_region
          _
        $region20: #{dalle_forward.1} parent=11 // pred_fallthru
          _
        // Predicated region
        $region21: #{dalle_forward.1} parent=11 // pred_check
          %p457 = pneg %p116
        $region22: #{dalle_forward.1} parent=11 // pred_check_branch
          %459 = sbr.rel (%p457) target = $region24
        $region23: #{dalle_forward.1} parent=11 // pred_region
          _
        $region24: #{dalle_forward.1} parent=11 // pred_fallthru
          _
        // Predicated region
        $region25: #{dalle_forward.1} parent=11 // pred_check
          %p460 = pneg %p137
        $region26: #{dalle_forward.1} parent=11 // pred_check_branch
          %462 = sbr.rel (%p460) target = $region28
        $region27: #{dalle_forward.1} parent=11 // pred_region
          _
        $region28: #{dalle_forward.1} parent=11 // pred_fallthru
          _
        // Predicated region
        $region29: #{dalle_forward.1} parent=11 // pred_check
          %p463 = pneg %p158
        $region30: #{dalle_forward.1} parent=11 // pred_check_branch
          %465 = sbr.rel (%p463) target = $region32
        $region31: #{dalle_forward.1} parent=11 // pred_region
          _
        $region32: #{dalle_forward.1} parent=11 // pred_fallthru
          _
        // Predicated region
        $region33: #{dalle_forward.1} parent=11 // pred_check
          %p466 = pneg %p179
        $region34: #{dalle_forward.1} parent=11 // pred_check_branch
          %468 = sbr.rel (%p466) target = $region36
        $region35: #{dalle_forward.1} parent=11 // pred_region
          _
        $region36: #{dalle_forward.1} parent=11 // pred_fallthru
          _
        // Predicated region
        $region37: #{dalle_forward.1} parent=11 // pred_check
          %p469 = pneg %p200
        $region38: #{dalle_forward.1} parent=11 // pred_check_branch
          %471 = sbr.rel (%p469) target = $region40
        $region39: #{dalle_forward.1} parent=11 // pred_region
          _
        $region40: #{dalle_forward.1} parent=11 // pred_fallthru
          _
        // Predicated region
        $region41: #{dalle_forward.1} parent=11 // pred_check
          %p472 = pneg %p221
        $region42: #{dalle_forward.1} parent=11 // pred_check_branch
          %474 = sbr.rel (%p472) target = $region44
        $region43: #{dalle_forward.1} parent=11 // pred_region
          _
        $region44: #{dalle_forward.1} parent=11 // pred_fallthru
          _
        // Predicated region
        $region45: #{dalle_forward.1} parent=11 // pred_check
          %p475 = pneg %p242
        $region46: #{dalle_forward.1} parent=11 // pred_check_branch
          %477 = sbr.rel (%p475) target = $region48
        $region47: #{dalle_forward.1} parent=11 // pred_region
          _
        $region48: #{dalle_forward.1} parent=11 // pred_fallthru
          _
        // Predicated region
        $region49: #{dalle_forward.1} parent=11 // pred_check
          %p478 = pneg %p263
        $region50: #{dalle_forward.1} parent=11 // pred_check_branch
          %480 = sbr.rel (%p478) target = $region52
        $region51: #{dalle_forward.1} parent=11 // pred_region
          _
        $region52: #{dalle_forward.1} parent=11 // pred_fallthru
          _
        // Predicated region
        $region53: #{dalle_forward.1} parent=11 // pred_check
          %p481 = pneg %p284
        $region54: #{dalle_forward.1} parent=11 // pred_check_branch
          %483 = sbr.rel (%p481) target = $region56
        $region55: #{dalle_forward.1} parent=11 // pred_region
          _
        $region56: #{dalle_forward.1} parent=11 // pred_fallthru
          _
        // Predicated region
        $region57: #{dalle_forward.1} parent=11 // pred_check
          %p484 = pneg %p305
        $region58: #{dalle_forward.1} parent=11 // pred_check_branch
          %486 = sbr.rel (%p484) target = $region60
        $region59: #{dalle_forward.1} parent=11 // pred_region
          _
        $region60: #{dalle_forward.1} parent=11 // pred_fallthru
          _
        // Predicated region
        $region61: #{dalle_forward.1} parent=11 // pred_check
          %p487 = pneg %p326
        $region62: #{dalle_forward.1} parent=11 // pred_check_branch
          %489 = sbr.rel (%p487) target = $region64
        $region63: #{dalle_forward.1} parent=11 // pred_region
          _
        $region64: #{dalle_forward.1} parent=11 // pred_fallthru
          _
        // Predicated region
        $region65: #{dalle_forward.1} parent=11 // pred_check
          %p490 = pneg %p347
        $region66: #{dalle_forward.1} parent=11 // pred_check_branch
          %492 = sbr.rel (%p490) target = $region68
        $region67: #{dalle_forward.1} parent=11 // pred_region
          _
        $region68: #{dalle_forward.1} parent=11 // pred_fallthru
          _
        // Predicated region
        $region69: #{dalle_forward.1} parent=11 // pred_check
          %p493 = pneg %p368
        $region70: #{dalle_forward.1} parent=11 // pred_check_branch
          %495 = sbr.rel (%p493) target = $region72
        $region71: #{dalle_forward.1} parent=11 // pred_region
          _
        $region72: #{dalle_forward.1} parent=11 // pred_fallthru
          _
        // Predicated region
        $region73: #{dalle_forward.1} parent=11 // pred_check
          %p496 = pneg %p389
        $region74: #{dalle_forward.1} parent=11 // pred_check_branch
          %498 = sbr.rel (%p496) target = $region76
        $region75: #{dalle_forward.1} parent=11 // pred_region
          _
        $region76: #{dalle_forward.1} parent=11 // pred_fallthru
          _
        // Predicated region
        $region77: #{dalle_forward.1} parent=11 // pred_check
          %p499 = pneg %p410
        $region78: #{dalle_forward.1} parent=11 // pred_check_branch
          %501 = sbr.rel (%p499) target = $region80
        $region79: #{dalle_forward.1} parent=11 // pred_region
          _
        $region80: #{dalle_forward.1} parent=11 // pred_fallthru
          _
      $region12: #{dalle_forward.1} parent=5 // pred_fallthru
        _
      %p502 = scmp.lt.s32.totalorder %s27, 2
      // Predicated region
      $region81: #{dalle_forward.1} parent=5 // pred_check
        %p503 = pneg %p502
      $region82: #{dalle_forward.1} parent=5 // pred_check_branch
        %505 = sbr.rel (%p503) target = $region84
      $region83: #{dalle_forward.1} parent=5 // pred_region
        // Predicated region
        $region85: #{dalle_forward.1} parent=83 // pred_check
          %p506 = pneg %p47
        $region86: #{dalle_forward.1} parent=83 // pred_check_branch
          %508 = sbr.rel (%p506) target = $region88
        $region87: #{dalle_forward.1} parent=83 // pred_region
          %p509 = scmp.lt.s32.totalorder %s27, 1
          %s510 = scalar_select %p509, %s27, 1
          %s511 = smul.addr %s510, 4
          %s512 = smul.addr %s511, 8
          %s513 = scalar_lea.vmem %s0, %s512
        $region88: #{dalle_forward.1} parent=83 // pred_fallthru
          _
      $region84: #{dalle_forward.1} parent=5 // pred_fallthru
        _
      %p514 = scmp.le.s32.totalorder 1, %s27
      %p515 = scmp.lt.s32.totalorder %s27, 3
      %p516 = pnand %p514, %p515
      %p517 = pneg %p516
      // Predicated region
      $region89: #{dalle_forward.1} parent=5 // pred_check
        _
      $region90: #{dalle_forward.1} parent=5 // pred_check_branch
        %519 = sbr.rel (%p516) target = $region92
      $region91: #{dalle_forward.1} parent=5 // pred_region
        %s520 = ssub.s32 %s27, 1
        %p521 = scmp.lt.s32.totalorder %s32, 1
        %s522 = scalar_select %p521, %s32, 1
        %s523 = smul.addr %s522, 4
        %s524 = smul.addr %s523, 8
        %s525 = scalar_lea.vmem %s0, %s524
        %p526 = pneg %p53
        %p527 = pneg %p50
        %p528 = pneg %p74
        %p529 = pneg %p71
        %p530 = pneg %p95
        %p531 = pneg %p92
        %p532 = pneg %p116
        %p533 = pneg %p113
        %p534 = pneg %p137
        %p535 = pneg %p134
        %p536 = pneg %p158
        %p537 = pneg %p155
        %p538 = pneg %p179
        %p539 = pneg %p176
        %p540 = pneg %p200
        %p541 = pneg %p197
        %p542 = pneg %p221
        %p543 = pneg %p218
        %p544 = pneg %p242
        %p545 = pneg %p239
        %p546 = pneg %p263
        %p547 = pneg %p260
        %p548 = pneg %p284
        %p549 = pneg %p281
        %p550 = pneg %p305
        %p551 = pneg %p302
        %p552 = pneg %p326
        %p553 = pneg %p323
        %p554 = pneg %p347
        %p555 = pneg %p344
        %p556 = pneg %p368
        %p557 = pneg %p365
        %p558 = pneg %p389
        %p559 = pneg %p386
        %p560 = pneg %p410
        %p561 = pneg %p407
        %p562 = pneg %p436
        %p563 = pneg %p433
        %s564 = sand.u32 %s423, 1
        %s565 = scalar_lea.sflag [#allocation3], %s564
        %s566 = sand.u32 %s423, 1
        %s567 = smul.addr %s566, 64
        %s568 = scalar_lea.vmem [#allocation2], %s567
        %p569 = scmp.lt.s32.totalorder %s32, 1
        %s570 = scalar_select %p569, %s32, 1
        %s571 = smul.addr %s570, 4
        %s572 = smul.addr %s571, 8
        %s573 = scalar_lea.vmem %s0, %s572
        %v575 = vld [vmem:[%s573] sm:$0xff]
        %v576 = vld [vmem:[%s573 + $0x8] sm:$0xff]
        %v577 = vld [vmem:[%s573 + $0x10] sm:$0xff]
        %v578 = vld [vmem:[%s573 + $0x18] sm:$0xff]
        %v579 = vlaneseq
        %v580 = vshrl.u32 %v579, 7
        %v581 = vadd.s32 %v580, 8
        %v582 = vadd.s32 %v580, 16
        %v583 = vadd.s32 %v580, 24
        %v584 = vadd.s32 %v580, 32
        %v585 = vadd.s32 %v580, 40
        %v586 = vadd.s32 %v580, 48
        %v587 = vadd.s32 %v580, 56
        %v588 = vlaneseq
        %v589 = vand.u32 %v588, 127
        %v590 = vshra.s32 %v580, 5
        %v591 = vshra.s32 %v581, 5
        %v592 = vshra.s32 %v582, 5
        %v593 = vshra.s32 %v583, 5
        %v594 = vshra.s32 %v584, 5
        %v595 = vshra.s32 %v585, 5
        %v596 = vshra.s32 %v586, 5
        %v597 = vshra.s32 %v587, 5
        %v598 = vshra.s32 %v589, 5
        %vm599 = vcmp.eq.s32.totalorder %v590, %v598
        %vm600 = vcmp.eq.s32.totalorder %v591, %v598
        %vm601 = vcmp.eq.s32.totalorder %v592, %v598
        %vm602 = vcmp.eq.s32.totalorder %v593, %v598
        %vm603 = vcmp.eq.s32.totalorder %v594, %v598
        %vm604 = vcmp.eq.s32.totalorder %v595, %v598
        %vm605 = vcmp.eq.s32.totalorder %v596, %v598
        %vm606 = vcmp.eq.s32.totalorder %v597, %v598
        %v607 = vand.u32 %v589, 31
        %v608 = vand.u32 %v580, 31
        %v609 = vand.u32 %v581, 31
        %v610 = vand.u32 %v582, 31
        %v611 = vand.u32 %v583, 31
        %v612 = vand.u32 %v584, 31
        %v613 = vand.u32 %v585, 31
        %v614 = vand.u32 %v586, 31
        %v615 = vand.u32 %v587, 31
        %vm616 = vcmp.le.s32.totalorder %v607, %v608
        %vm617 = vcmp.le.s32.totalorder %v607, %v609
        %vm618 = vcmp.le.s32.totalorder %v607, %v610
        %vm619 = vcmp.le.s32.totalorder %v607, %v611
        %vm620 = vcmp.le.s32.totalorder %v607, %v612
        %vm621 = vcmp.le.s32.totalorder %v607, %v613
        %vm622 = vcmp.le.s32.totalorder %v607, %v614
        %vm623 = vcmp.le.s32.totalorder %v607, %v615
        %vm624 = vmand %vm599, %vm616
        %vm625 = vmand %vm600, %vm617
        %vm626 = vmand %vm601, %vm618
        %vm627 = vmand %vm602, %vm619
        %vm628 = vmand %vm603, %vm620
        %vm629 = vmand %vm604, %vm621
        %vm630 = vmand %vm605, %vm622
        %vm631 = vmand %vm606, %vm623
        %vm632 = vcmp.lt.s32.totalorder %v580, 17
        %vm633 = vcmp.lt.s32.totalorder %v581, 17
        %vm634 = vcmp.lt.s32.totalorder %v582, 17
        %vm635 = vcmp.lt.s32.totalorder %v583, 17
        %v636 = vsub.s32 %v580, 17
        %v637 = vsub.s32 %v581, 17
        %v638 = vsub.s32 %v582, 17
        %v639 = vsub.s32 %v583, 17
        %vm640 = vcmp.lt.s32.totalorder %v589, 16
        %vm641 = vcmp.ge.s32.totalorder %v589, 16
        %vm642 = vcmp.lt.s32.totalorder %v589, 32
        %vm643 = vmand %vm641, %vm642
        %vm644 = vcmp.ge.s32.totalorder %v580, 1
        %vm645 = vcmp.ge.s32.totalorder %v581, 1
        %vm646 = vcmp.ge.s32.totalorder %v582, 1
        %vm647 = vcmp.ge.s32.totalorder %v583, 1
        %vm648 = vcmp.ge.s32.totalorder %v636, 4
        %vm649 = vcmp.ge.s32.totalorder %v637, 4
        %vm650 = vcmp.ge.s32.totalorder %v638, 4
        %vm651 = vcmp.ge.s32.totalorder %v639, 4
        %v652 = vand.u32 %v636, 3
        %v653 = vand.u32 %v637, 3
        %v654 = vand.u32 %v638, 3
        %v655 = vand.u32 %v639, 3
        %vm656 = vcmp.ne.s32.totalorder %v652, 0
        %vm657 = vcmp.ne.s32.totalorder %v653, 0
        %vm658 = vcmp.ne.s32.totalorder %v654, 0
        %vm659 = vcmp.ne.s32.totalorder %v655, 0
        %vm660 = vmand %vm632, %vm642
        %vm661 = vmand %vm633, %vm642
        %vm662 = vmand %vm634, %vm642
        %vm663 = vmand %vm635, %vm642
        %vm664 = vmxor %vm632, 1
        %vm665 = vmxor %vm633, 1
        %vm666 = vmxor %vm634, 1
        %vm667 = vmxor %vm635, 1
        %vm668 = vmand %vm664, %vm640
        %vm669 = vmand %vm665, %vm640
        %vm670 = vmand %vm666, %vm640
        %vm671 = vmand %vm667, %vm640
        %vm672 = vmand %vm664, %vm643
        %vm673 = vmand %vm665, %vm643
        %vm674 = vmand %vm666, %vm643
        %vm675 = vmand %vm667, %vm643
        %v676 = vld [vmem:[%s1] sm:$0x1]
        %v677 = vld [vmem:[%s2] sm:$0x1]
        %vm678 = vcmask 523264
        %v679 = vsel %vm678, %v575, 0.0
        %680 = vadd.xlane.f32.xlu0 %v679
        %v681 = vpop.xlane.xlu0 %680
        %v682 = vsel %vm678, %v576, 0.0
        %683 = vadd.xlane.f32.xlu0 %v682
        %v684 = vpop.xlane.xlu0 %683
        %v685 = vsel %vm678, %v577, 0.0
        %686 = vadd.xlane.f32.xlu0 %v685
        %v687 = vpop.xlane.xlu0 %686
        %v688 = vsel %vm678, %v578, 0.0
        %689 = vadd.xlane.f32.xlu0 %v688
        %v690 = vpop.xlane.xlu0 %689
        %v691 = vrcp.pop 64.0
        %v692 = vmul.f32 %v681, %v691
        %v693 = vmul.f32 %v684, %v691
        %v694 = vmul.f32 %v687, %v691
        %v695 = vmul.f32 %v690, %v691
        %v696 = vsub.f32 %v575, %v692
        %v697 = vsub.f32 %v576, %v693
        %v698 = vsub.f32 %v577, %v694
        %v699 = vsub.f32 %v578, %v695
        %v700 = vmul.f32 %v696, %v696
        %v701 = vmul.f32 %v697, %v697
        %v702 = vmul.f32 %v698, %v698
        %v703 = vmul.f32 %v699, %v699
        %v704 = vsel %vm678, %v700, 0.0
        %705 = vadd.xlane.f32.xlu0 %v704
        %v706 = vpop.xlane.xlu0 %705
        %v707 = vsel %vm678, %v701, 0.0
        %708 = vadd.xlane.f32.xlu0 %v707
        %v709 = vpop.xlane.xlu0 %708
        %v710 = vsel %vm678, %v702, 0.0
        %711 = vadd.xlane.f32.xlu0 %v710
        %v712 = vpop.xlane.xlu0 %711
        %v713 = vsel %vm678, %v703, 0.0
        %714 = vadd.xlane.f32.xlu0 %v713
        %v715 = vpop.xlane.xlu0 %714
        %v716 = vmul.f32 %v706, %v691
        %v717 = vmul.f32 %v709, %v691
        %v718 = vmul.f32 %v712, %v691
        %v719 = vmul.f32 %v715, %v691
        %v720 = vadd.f32 %v716, 1e-05
        %v721 = vadd.f32 %v717, 1e-05
        %v722 = vadd.f32 %v718, 1e-05
        %v723 = vadd.f32 %v719, 1e-05
        %v724 = vrsqrt.pop %v720
        %v725 = vrsqrt.pop %v721
        %v726 = vrsqrt.pop %v722
        %v727 = vrsqrt.pop %v723
        %v728 = vmul.f32 %v696, %v724
        %v729 = vmul.f32 %v697, %v725
        %v730 = vmul.f32 %v698, %v726
        %v731 = vmul.f32 %v699, %v727
        %v733 = vlaneseq
        %v734 = vshrl.u32 %v733, 7
        %v735 = vsub.s32 0, %v734
        %v736 = vrot.slane %v676, %v735
        %v738 = vmul.f32 %v728, %v736
        %v739 = vmul.f32 %v729, %v736
        %v740 = vmul.f32 %v730, %v736
        %v741 = vmul.f32 %v731, %v736
        %v743 = vlaneseq
        %v744 = vshrl.u32 %v743, 7
        %v745 = vsub.s32 0, %v744
        %v746 = vrot.slane %v677, %v745
        %v748 = vadd.f32 %v738, %v746
        %v749 = vadd.f32 %v739, %v746
        %v750 = vadd.f32 %v740, %v746
        %v751 = vadd.f32 %v741, %v746
        %v752 = vrot.slane %v748, 7
        %v753 = vrot.slane %v749, 7
        %v754 = vrot.slane %v750, 7
        %v755 = vrot.slane %v751, 7
        %vm756 = vcmp.lt.s32.totalorder %v580, 1
        %v757 = vsel %vm756, %v754, %v755
        %v758 = vsel %vm756, %v753, %v754
        %v759 = vsel %vm756, %v752, %v753
        %v760 = vsel %vm756, %v755, %v752
        %v761 = vrot.slane %v748, 4
        %v762 = vrot.slane %v749, 4
        %v763 = vrot.slane %v750, 4
        %v764 = vrot.slane %v751, 4
        %vm765 = vcmp.lt.s32.totalorder %v580, 4
        %v766 = vsel %vm765, %v763, %v764
        %v767 = vsel %vm765, %v762, %v763
        %v768 = vsel %vm765, %v761, %v762
        %v769 = vsel %vm765, %v764, %v761
        %v770 = vsel %vm644, %v760, 0.0
        %v771 = vsel %vm645, %v759, 0.0
        %v772 = vsel %vm646, %v758, 0.0
        %v773 = vsel %vm647, %v757, 0.0
        %v774 = vsel %vm648, %v769, 0.0
        %v775 = vsel %vm649, %v768, 0.0
        %v776 = vsel %vm650, %v767, 0.0
        %v777 = vsel %vm651, %v766, 0.0
        %v778 = vsel %vm656, %v760, 0.0
        %v779 = vsel %vm657, %v759, 0.0
        %v780 = vsel %vm658, %v758, 0.0
        %v781 = vsel %vm659, %v757, 0.0
        %v782 = vsel %vm660, %v770, %v748
        %v783 = vsel %vm661, %v771, %v749
        %v784 = vsel %vm662, %v772, %v750
        %v785 = vsel %vm663, %v773, %v751
        %v786 = vsel %vm668, %v774, %v782
        %v787 = vsel %vm669, %v775, %v783
        %v788 = vsel %vm670, %v776, %v784
        %v789 = vsel %vm671, %v777, %v785
        %v790 = vsel %vm672, %v778, %v786
        %v791 = vsel %vm673, %v779, %v787
        %v792 = vsel %vm674, %v780, %v788
        %v793 = vsel %vm675, %v781, %v789
        %v794 = vpack.c.bf16 %v791, %v790
        %v795 = vpack.c.bf16 %v793, %v792
        %v796 = vld [vmem:[%s3] sm:$0xff]
        %v797 = vld [vmem:[%s3 + $0x8] sm:$0xff]
        %v798 = vld [vmem:[%s3 + $0x10] sm:$0xff]
        %v799 = vld [vmem:[%s3 + $0x18] sm:$0xff]
        %v800 = vld [vmem:[%s3 + $0x20] sm:$0xff]
        %v801 = vld [vmem:[%s3 + $0x28] sm:$0xff]
        %v802 = vld [vmem:[%s3 + $0x30] sm:$0xff]
        %v803 = vld [vmem:[%s3 + $0x38] sm:$0xff]
        %v812 = vunpack.c.l.b16 %v796
        %v813 = vunpack.c.h.b16 %v796
        %v814 = vunpack.c.l.b16 %v797
        %v815 = vunpack.c.h.b16 %v797
        %v816 = vunpack.c.l.b16 %v798
        %v817 = vunpack.c.h.b16 %v798
        %v818 = vunpack.c.l.b16 %v799
        %v819 = vunpack.c.h.b16 %v799
        %v820 = vunpack.c.l.b16 %v800
        %v821 = vunpack.c.h.b16 %v800
        %v822 = vunpack.c.l.b16 %v801
        %v823 = vunpack.c.h.b16 %v801
        %v824 = vunpack.c.l.b16 %v802
        %v825 = vunpack.c.h.b16 %v802
        %v826 = vunpack.c.l.b16 %v803
        %v827 = vunpack.c.h.b16 %v803
        %v828 = vpack.c.b16 %v814, %v812
        %v829 = vpack.c.b16 %v815, %v813
        %v830 = vpack.c.b16 %v818, %v816
        %v831 = vpack.c.b16 %v819, %v817
        %v832 = vpack.c.b16 %v822, %v820
        %v833 = vpack.c.b16 %v823, %v821
        %v834 = vpack.c.b16 %v826, %v824
        %v835 = vpack.c.b16 %v827, %v825
        %v845 = vsel %vm678, %v794, 0
        %v848 = vsel %vm678, %v795, 0
        %850 = vmatprep.subr.bf16.mxu0 %v829
        %851 = vmatpush1.bf16.msra.mxu0 %v828
        %852 = vmatprep.subr.bf16.mxu0 %v831
        %853 = vmatpush1.bf16.msra.mxu0 %v830
        %854 = vmatprep.subr.bf16.mxu0 %v833
        %855 = vmatpush1.bf16.msra.mxu0 %v832
        %856 = vmatprep.subr.bf16.mxu0 %v835
        %857 = vmatpush1.bf16.msra.mxu0 %v834
        %858 = vmatprep.subr.bf16.mxu0 0
        %859 = vmatpush1.bf16.msra.mxu0 0
        %860 = vmatprep.subr.bf16.mxu0 0
        %861 = vmatpush1.bf16.msra.mxu0 0
        %862 = vmatprep.subr.bf16.mxu0 0
        %863 = vmatpush1.bf16.msra.mxu0 0
        %864 = vmatprep.subr.bf16.mxu0 0
        %865 = vmatpush1.bf16.msra.mxu0 0
        %866 = vmatprep.subr.bf16.mxu0 0
        %867 = vmatpush1.bf16.msra.mxu0 0
        %868 = vmatprep.subr.bf16.mxu0 0
        %869 = vmatpush1.bf16.msra.mxu0 0
        %870 = vmatprep.subr.bf16.mxu0 0
        %871 = vmatpush1.bf16.msra.mxu0 0
        %872 = vmatprep.subr.bf16.mxu0 0
        %873 = vmatpush1.bf16.msra.mxu0 0
        %874 = vmatprep.subr.bf16.mxu0 0
        %875 = vmatpush1.bf16.msra.mxu0 0
        %876 = vmatprep.subr.bf16.mxu0 0
        %877 = vmatpush1.bf16.msra.mxu0 0
        %878 = vmatprep.subr.bf16.mxu0 0
        %879 = vmatpush1.bf16.msra.mxu0 0
        %880 = vmatprep.subr.bf16.mxu0 0
        %881 = vmatpush1.bf16.msra.mxu0 0
        %882 = vmatprep.mubr.bf16.mxu0 0
        %883 = vmatmul.mubr.bf16.gmra.mrb[0].mxu0 %v845
        %v884 = vpop.f32.mrb[0].mxu0
        %v885 = vadd.f32 0.0, %v884
        %v886 = vpop.f32.mrb[0].mxu0
        %v887 = vadd.f32 0.0, %v886
        %v888 = vpop.f32.mrb[0].mxu0
        %v889 = vadd.f32 0.0, %v888
        %v890 = vpop.f32.mrb[0].mxu0
        %v891 = vadd.f32 0.0, %v890
        %892 = vmatprep.mubr.bf16.mxu0 0
        %893 = vmatmul.mubr.bf16.gmra.mrb[0].mxu0 %v848
        %v894 = vpop.f32.mrb[0].mxu0
        %v895 = vadd.f32 0.0, %v894
        %v896 = vpop.f32.mrb[0].mxu0
        %v897 = vadd.f32 0.0, %v896
        %v898 = vpop.f32.mrb[0].mxu0
        %v899 = vadd.f32 0.0, %v898
        %v900 = vpop.f32.mrb[0].mxu0
        %v901 = vadd.f32 0.0, %v900
        %902 = vdwg.mxu0
        %907 = vrot.lane.b32.xlu0 %v885, 96
        %v908 = vpop.permute.xlu0 %907
        %909 = vrot.lane.b32.xlu0 %v889, 96
        %v910 = vpop.permute.xlu0 %909
        %911 = vrot.lane.b32.xlu0 %v895, 96
        %v912 = vpop.permute.xlu0 %911
        %913 = vrot.lane.b32.xlu0 %v899, 96
        %v914 = vpop.permute.xlu0 %913
        %923 = vrot.lane.b32.xlu0 %v887, 96
        %v924 = vpop.permute.xlu0 %923
        %925 = vrot.lane.b32.xlu0 %v891, 96
        %v926 = vpop.permute.xlu0 %925
        %927 = vrot.lane.b32.xlu0 %v897, 96
        %v928 = vpop.permute.xlu0 %927
        %929 = vrot.lane.b32.xlu0 %v901, 96
        %v930 = vpop.permute.xlu0 %929
        %v935 = vmul.f32 %v885, 0.17677669
        %v936 = vmul.f32 %v889, 0.17677669
        %v937 = vmul.f32 %v895, 0.17677669
        %v938 = vmul.f32 %v899, 0.17677669
        %v939 = vmul.f32 %v908, 0.17677669
        %v940 = vmul.f32 %v910, 0.17677669
        %v941 = vmul.f32 %v912, 0.17677669
        %v942 = vmul.f32 %v914, 0.17677669
        %943 = vrot.lane.b32.xlu0 %v885, 64
        %v944 = vpop.permute.xlu0 %943
        %945 = vrot.lane.b32.xlu0 %v889, 64
        %v946 = vpop.permute.xlu0 %945
        %947 = vrot.lane.b32.xlu0 %v895, 64
        %v948 = vpop.permute.xlu0 %947
        %949 = vrot.lane.b32.xlu0 %v899, 64
        %v950 = vpop.permute.xlu0 %949
        %951 = vrot.lane.b32.xlu0 %v908, 64
        %v952 = vpop.permute.xlu0 %951
        %953 = vrot.lane.b32.xlu0 %v910, 64
        %v954 = vpop.permute.xlu0 %953
        %955 = vrot.lane.b32.xlu0 %v912, 64
        %v956 = vpop.permute.xlu0 %955
        %957 = vrot.lane.b32.xlu0 %v914, 64
        %v958 = vpop.permute.xlu0 %957
        %vm959 = vcmask 261120
        %v961 = vsel %vm959, %v935, 0
        %v964 = vsel %vm959, %v936, 0
        %v967 = vsel %vm959, %v937, 0
        %v970 = vsel %vm959, %v938, 0
        %v973 = vsel %vm959, %v939, 0
        %v976 = vsel %vm959, %v940, 0
        %v979 = vsel %vm959, %v941, 0
        %v982 = vsel %vm959, %v942, 0
        %v984 = vsel %vm959, %v944, 0
        %v986 = vsel %vm959, %v946, 0
        %v988 = vsel %vm959, %v948, 0
        %v990 = vsel %vm959, %v950, 0
        %v992 = vsel %vm959, %v952, 0
        %v994 = vsel %vm959, %v954, 0
        %v996 = vsel %vm959, %v956, 0
        %v998 = vsel %vm959, %v958, 0
        %1000 = vmatprep.subr.mxu0 0.0
        %1001 = vmatpush1.xpose.msra.mxu0 %v984
        %1002 = vmatprep.subr.mxu0 0.0
        %1003 = vmatpush1.xpose.msra.mxu0 %v986
        %1004 = vmatprep.subr.mxu0 0.0
        %1005 = vmatpush1.xpose.msra.mxu0 %v988
        %1006 = vmatprep.subr.mxu0 0.0
        %1007 = vmatpush1.xpose.msra.mxu0 %v990
        %1008 = vmatprep.subr.mxu0 0.0
        %1009 = vmatpush1.xpose.msra.mxu0 %v992
        %1010 = vmatprep.subr.mxu0 0.0
        %1011 = vmatpush1.xpose.msra.mxu0 %v994
        %1012 = vmatprep.subr.mxu0 0.0
        %1013 = vmatpush1.xpose.msra.mxu0 %v996
        %1014 = vmatprep.subr.mxu0 0.0
        %1015 = vmatpush1.xpose.msra.mxu0 %v998
        %1016 = vmatprep.subr.mxu0 0.0
        %1017 = vmatpush1.xpose.msra.mxu0 0.0
        %1018 = vmatprep.subr.mxu0 0.0
        %1019 = vmatpush1.xpose.msra.mxu0 0.0
        %1020 = vmatprep.subr.mxu0 0.0
        %1021 = vmatpush1.xpose.msra.mxu0 0.0
        %1022 = vmatprep.subr.mxu0 0.0
        %1023 = vmatpush1.xpose.msra.mxu0 0.0
        %1024 = vmatprep.subr.mxu0 0.0
        %1025 = vmatpush1.xpose.msra.mxu0 0.0
        %1026 = vmatprep.subr.mxu0 0.0
        %1027 = vmatpush1.xpose.msra.mxu0 0.0
        %1028 = vmatprep.subr.mxu0 0.0
        %1029 = vmatpush1.xpose.msra.mxu0 0.0
        %1030 = vmatprep.subr.mxu0 0.0
        %1031 = vmatpush1.xpose.msra.mxu0 0.0
        %1032 = vmatprep.subr.mxu0 0.0
        %1033 = vmatpush1.xpose.msra.mxu0 0.0
        %1034 = vmatprep.subr.mxu0 0.0
        %1035 = vmatpush1.xpose.msra.mxu0 0.0
        %1036 = vmatprep.subr.mxu0 0.0
        %1037 = vmatpush1.xpose.msra.mxu0 0.0
        %1038 = vmatprep.subr.mxu0 0.0
        %1039 = vmatpush1.xpose.msra.mxu0 0.0
        %1040 = vmatprep.subr.mxu0 0.0
        %1041 = vmatpush1.xpose.msra.mxu0 0.0
        %1042 = vmatprep.subr.mxu0 0.0
        %1043 = vmatpush1.xpose.msra.mxu0 0.0
        %1044 = vmatprep.subr.mxu0 0.0
        %1045 = vmatpush1.xpose.msra.mxu0 0.0
        %1046 = vmatprep.subr.mxu0 0.0
        %1047 = vmatpush1.xpose.msra.mxu0 0.0
        %1048 = vmatprep.subr.mxu0 0.0
        %1049 = vmatpush1.xpose.msra.mxu0 0.0
        %1050 = vmatprep.subr.mxu0 0.0
        %1051 = vmatpush1.xpose.msra.mxu0 0.0
        %1052 = vmatprep.subr.mxu0 0.0
        %1053 = vmatpush1.xpose.msra.mxu0 0.0
        %1054 = vmatprep.subr.mxu0 0.0
        %1055 = vmatpush1.xpose.msra.mxu0 0.0
        %1056 = vmatprep.subr.mxu0 0.0
        %1057 = vmatpush1.xpose.msra.mxu0 0.0
        %1058 = vmatprep.subr.mxu0 0.0
        %1059 = vmatpush1.xpose.msra.mxu0 0.0
        %1060 = vmatprep.subr.mxu0 0.0
        %1061 = vmatpush1.xpose.msra.mxu0 0.0
        %1062 = vmatprep.subr.mxu0 0.0
        %1063 = vmatpush1.xpose.msra.mxu0 0.0
        %1064 = vmatprep.mubr.f32.mxu0 0.0
        %1065 = vmatmul.mubr.f32.gmra.mrb[0].mxu0 %v961
        %v1066 = vpop.f32.mrb[0].mxu0
        %v1067 = vadd.f32 0.0, %v1066
        %v1068 = vpop.f32.mrb[0].mxu0
        %1069 = vmatprep.mubr.f32.mxu0 0.0
        %1070 = vmatmul.mubr.f32.gmra.mrb[0].mxu0 %v964
        %v1071 = vpop.f32.mrb[0].mxu0
        %v1072 = vadd.f32 0.0, %v1071
        %v1073 = vpop.f32.mrb[0].mxu0
        %1074 = vmatprep.mubr.f32.mxu0 0.0
        %1075 = vmatmul.mubr.f32.gmra.mrb[0].mxu0 %v967
        %v1076 = vpop.f32.mrb[0].mxu0
        %v1077 = vadd.f32 0.0, %v1076
        %v1078 = vpop.f32.mrb[0].mxu0
        %1079 = vmatprep.mubr.f32.mxu0 0.0
        %1080 = vmatmul.mubr.f32.gmra.mrb[0].mxu0 %v970
        %v1081 = vpop.f32.mrb[0].mxu0
        %v1082 = vadd.f32 0.0, %v1081
        %v1083 = vpop.f32.mrb[0].mxu0
        %1084 = vmatprep.mubr.f32.mxu0 0.0
        %1085 = vmatmul.mubr.f32.gmra.mrb[0].mxu0 %v973
        %v1086 = vpop.f32.mrb[0].mxu0
        %v1087 = vadd.f32 0.0, %v1086
        %v1088 = vpop.f32.mrb[0].mxu0
        %1089 = vmatprep.mubr.f32.mxu0 0.0
        %1090 = vmatmul.mubr.f32.gmra.mrb[0].mxu0 %v976
        %v1091 = vpop.f32.mrb[0].mxu0
        %v1092 = vadd.f32 0.0, %v1091
        %v1093 = vpop.f32.mrb[0].mxu0
        %1094 = vmatprep.mubr.f32.mxu0 0.0
        %1095 = vmatmul.mubr.f32.gmra.mrb[0].mxu0 %v979
        %v1096 = vpop.f32.mrb[0].mxu0
        %v1097 = vadd.f32 0.0, %v1096
        %v1098 = vpop.f32.mrb[0].mxu0
        %1099 = vmatprep.mubr.f32.mxu0 0.0
        %1100 = vmatmul.mubr.f32.gmra.mrb[0].mxu0 %v982
        %v1101 = vpop.f32.mrb[0].mxu0
        %v1102 = vadd.f32 0.0, %v1101
        %v1103 = vpop.f32.mrb[0].mxu0
        %1104 = vdwg.mxu0
        %v1105 = vsel %vm624, %v1067, -1e+30
        %v1106 = vsel %vm625, %v1072, -1e+30
        %v1107 = vsel %vm626, %v1077, -1e+30
        %v1108 = vsel %vm627, %v1082, -1e+30
        %v1109 = vsel %vm628, %v1087, -1e+30
        %v1110 = vsel %vm629, %v1092, -1e+30
        %v1111 = vsel %vm630, %v1097, -1e+30
        %v1112 = vsel %vm631, %v1102, -1e+30
        %v1113 = vsel %vm678, %v1105, -inf
        %1114 = vmax.xlane.f32.xlu0 %v1113
        %v1115 = vpop.xlane.xlu0 %1114
        %v1116 = vsel %vm678, %v1106, -inf
        %1117 = vmax.xlane.f32.xlu0 %v1116
        %v1118 = vpop.xlane.xlu0 %1117
        %v1119 = vsel %vm678, %v1107, -inf
        %1120 = vmax.xlane.f32.xlu0 %v1119
        %v1121 = vpop.xlane.xlu0 %1120
        %v1122 = vsel %vm678, %v1108, -inf
        %1123 = vmax.xlane.f32.xlu0 %v1122
        %v1124 = vpop.xlane.xlu0 %1123
        %v1125 = vsel %vm678, %v1109, -inf
        %1126 = vmax.xlane.f32.xlu0 %v1125
        %v1127 = vpop.xlane.xlu0 %1126
        %v1128 = vsel %vm678, %v1110, -inf
        %1129 = vmax.xlane.f32.xlu0 %v1128
        %v1130 = vpop.xlane.xlu0 %1129
        %v1131 = vsel %vm678, %v1111, -inf
        %1132 = vmax.xlane.f32.xlu0 %v1131
        %v1133 = vpop.xlane.xlu0 %1132
        %v1134 = vsel %vm678, %v1112, -inf
        %1135 = vmax.xlane.f32.xlu0 %v1134
        %v1136 = vpop.xlane.xlu0 %1135
        %v1137 = vsub.f32 %v1105, %v1115
        %v1138 = vsub.f32 %v1106, %v1118
        %v1139 = vsub.f32 %v1107, %v1121
        %v1140 = vsub.f32 %v1108, %v1124
        %v1141 = vsub.f32 %v1109, %v1127
        %v1142 = vsub.f32 %v1110, %v1130
        %v1143 = vsub.f32 %v1111, %v1133
        %v1144 = vsub.f32 %v1112, %v1136
        %v1145 = vmul.f32 %v1137, 1.442695
        %v1146 = vpow.pop %v1145
        %v1147 = vmul.f32 %v1138, 1.442695
        %v1148 = vpow.pop %v1147
        %v1149 = vmul.f32 %v1139, 1.442695
        %v1150 = vpow.pop %v1149
        %v1151 = vmul.f32 %v1140, 1.442695
        %v1152 = vpow.pop %v1151
        %v1153 = vmul.f32 %v1141, 1.442695
        %v1154 = vpow.pop %v1153
        %v1155 = vmul.f32 %v1142, 1.442695
        %v1156 = vpow.pop %v1155
        %v1157 = vmul.f32 %v1143, 1.442695
        %v1158 = vpow.pop %v1157
        %v1159 = vmul.f32 %v1144, 1.442695
        %v1160 = vpow.pop %v1159
        %v1161 = vsel %vm678, %v1146, 0.0
        %1162 = vadd.xlane.f32.xlu0 %v1161
        %v1163 = vpop.xlane.xlu0 %1162
        %v1164 = vsel %vm678, %v1148, 0.0
        %1165 = vadd.xlane.f32.xlu0 %v1164
        %v1166 = vpop.xlane.xlu0 %1165
        %v1167 = vsel %vm678, %v1150, 0.0
        %1168 = vadd.xlane.f32.xlu0 %v1167
        %v1169 = vpop.xlane.xlu0 %1168
        %v1170 = vsel %vm678, %v1152, 0.0
        %1171 = vadd.xlane.f32.xlu0 %v1170
        %v1172 = vpop.xlane.xlu0 %1171
        %v1173 = vsel %vm678, %v1154, 0.0
        %1174 = vadd.xlane.f32.xlu0 %v1173
        %v1175 = vpop.xlane.xlu0 %1174
        %v1176 = vsel %vm678, %v1156, 0.0
        %1177 = vadd.xlane.f32.xlu0 %v1176
        %v1178 = vpop.xlane.xlu0 %1177
        %v1179 = vsel %vm678, %v1158, 0.0
        %1180 = vadd.xlane.f32.xlu0 %v1179
        %v1181 = vpop.xlane.xlu0 %1180
        %v1182 = vsel %vm678, %v1160, 0.0
        %1183 = vadd.xlane.f32.xlu0 %v1182
        %v1184 = vpop.xlane.xlu0 %1183
        %v1185 = vrcp.pop %v1163
        %v1186 = vrcp.pop %v1166
        %v1187 = vrcp.pop %v1169
        %v1188 = vrcp.pop %v1172
        %v1189 = vrcp.pop %v1175
        %v1190 = vrcp.pop %v1178
        %v1191 = vrcp.pop %v1181
        %v1192 = vrcp.pop %v1184
        %v1193 = vmul.f32 %v1146, %v1185
        %v1194 = vmul.f32 %v1148, %v1186
        %v1195 = vmul.f32 %v1150, %v1187
        %v1196 = vmul.f32 %v1152, %v1188
        %v1197 = vmul.f32 %v1154, %v1189
        %v1198 = vmul.f32 %v1156, %v1190
        %v1199 = vmul.f32 %v1158, %v1191
        %v1200 = vmul.f32 %v1160, %v1192
        %v1202 = vsel %vm678, %v1193, 0
        %v1205 = vsel %vm678, %v1194, 0
        %v1208 = vsel %vm678, %v1195, 0
        %v1211 = vsel %vm678, %v1196, 0
        %v1214 = vsel %vm678, %v1197, 0
        %v1217 = vsel %vm678, %v1198, 0
        %v1220 = vsel %vm678, %v1199, 0
        %v1223 = vsel %vm678, %v1200, 0
        %1225 = vmatprep.subr.mxu0 0.0
        %1226 = vmatpush1.msra.mxu0 %v887
        %1227 = vmatprep.subr.mxu0 0.0
        %1228 = vmatpush1.msra.mxu0 %v891
        %1229 = vmatprep.subr.mxu0 0.0
        %1230 = vmatpush1.msra.mxu0 %v897
        %1231 = vmatprep.subr.mxu0 0.0
        %1232 = vmatpush1.msra.mxu0 %v901
        %1233 = vmatprep.subr.mxu0 0.0
        %1234 = vmatpush1.msra.mxu0 %v924
        %1235 = vmatprep.subr.mxu0 0.0
        %1236 = vmatpush1.msra.mxu0 %v926
        %1237 = vmatprep.subr.mxu0 0.0
        %1238 = vmatpush1.msra.mxu0 %v928
        %1239 = vmatprep.subr.mxu0 0.0
        %1240 = vmatpush1.msra.mxu0 %v930
        %1241 = vmatprep.subr.mxu0 0.0
        %1242 = vmatpush1.msra.mxu0 0.0
        %1243 = vmatprep.subr.mxu0 0.0
        %1244 = vmatpush1.msra.mxu0 0.0
        %1245 = vmatprep.subr.mxu0 0.0
        %1246 = vmatpush1.msra.mxu0 0.0
        %1247 = vmatprep.subr.mxu0 0.0
        %1248 = vmatpush1.msra.mxu0 0.0
        %1249 = vmatprep.subr.mxu0 0.0
        %1250 = vmatpush1.msra.mxu0 0.0
        %1251 = vmatprep.subr.mxu0 0.0
        %1252 = vmatpush1.msra.mxu0 0.0
        %1253 = vmatprep.subr.mxu0 0.0
        %1254 = vmatpush1.msra.mxu0 0.0
        %1255 = vmatprep.subr.mxu0 0.0
        %1256 = vmatpush1.msra.mxu0 0.0
        %1257 = vmatprep.subr.mxu0 0.0
        %1258 = vmatpush1.msra.mxu0 0.0
        %1259 = vmatprep.subr.mxu0 0.0
        %1260 = vmatpush1.msra.mxu0 0.0
        %1261 = vmatprep.subr.mxu0 0.0
        %1262 = vmatpush1.msra.mxu0 0.0
        %1263 = vmatprep.subr.mxu0 0.0
        %1264 = vmatpush1.msra.mxu0 0.0
        %1265 = vmatprep.subr.mxu0 0.0
        %1266 = vmatpush1.msra.mxu0 0.0
        %1267 = vmatprep.subr.mxu0 0.0
        %1268 = vmatpush1.msra.mxu0 0.0
        %1269 = vmatprep.subr.mxu0 0.0
        %1270 = vmatpush1.msra.mxu0 0.0
        %1271 = vmatprep.subr.mxu0 0.0
        %1272 = vmatpush1.msra.mxu0 0.0
        %1273 = vmatprep.subr.mxu0 0.0
        %1274 = vmatpush1.msra.mxu0 0.0
        %1275 = vmatprep.subr.mxu0 0.0
        %1276 = vmatpush1.msra.mxu0 0.0
        %1277 = vmatprep.subr.mxu0 0.0
        %1278 = vmatpush1.msra.mxu0 0.0
        %1279 = vmatprep.subr.mxu0 0.0
        %1280 = vmatpush1.msra.mxu0 0.0
        %1281 = vmatprep.subr.mxu0 0.0
        %1282 = vmatpush1.msra.mxu0 0.0
        %1283 = vmatprep.subr.mxu0 0.0
        %1284 = vmatpush1.msra.mxu0 0.0
        %1285 = vmatprep.subr.mxu0 0.0
        %1286 = vmatpush1.msra.mxu0 0.0
        %1287 = vmatprep.subr.mxu0 0.0
        %1288 = vmatpush1.msra.mxu0 0.0
        %1289 = vmatprep.mubr.f32.mxu0 0.0
        %1290 = vmatmul.mubr.f32.gmra.mrb[0].mxu0 %v1202
        %v1291 = vpop.f32.mrb[0].mxu0
        %v1292 = vadd.f32 0.0, %v1291
        %v1293 = vpop.f32.mrb[0].mxu0
        %1294 = vmatprep.mubr.f32.mxu0 0.0
        %1295 = vmatmul.mubr.f32.gmra.mrb[0].mxu0 %v1205
        %v1296 = vpop.f32.mrb[0].mxu0
        %v1297 = vadd.f32 0.0, %v1296
        %v1298 = vpop.f32.mrb[0].mxu0
        %1299 = vmatprep.mubr.f32.mxu0 0.0
        %1300 = vmatmul.mubr.f32.gmra.mrb[0].mxu0 %v1208
        %v1301 = vpop.f32.mrb[0].mxu0
        %v1302 = vadd.f32 0.0, %v1301
        %v1303 = vpop.f32.mrb[0].mxu0
        %1304 = vmatprep.mubr.f32.mxu0 0.0
        %1305 = vmatmul.mubr.f32.gmra.mrb[0].mxu0 %v1211
        %v1306 = vpop.f32.mrb[0].mxu0
        %v1307 = vadd.f32 0.0, %v1306
        %v1308 = vpop.f32.mrb[0].mxu0
        %1309 = vmatprep.mubr.f32.mxu0 0.0
        %1310 = vmatmul.mubr.f32.gmra.mrb[0].mxu0 %v1214
        %v1311 = vpop.f32.mrb[0].mxu0
        %v1312 = vadd.f32 0.0, %v1311
        %v1313 = vpop.f32.mrb[0].mxu0
        %1314 = vmatprep.mubr.f32.mxu0 0.0
        %1315 = vmatmul.mubr.f32.gmra.mrb[0].mxu0 %v1217
        %v1316 = vpop.f32.mrb[0].mxu0
        %v1317 = vadd.f32 0.0, %v1316
        %v1318 = vpop.f32.mrb[0].mxu0
        %1319 = vmatprep.mubr.f32.mxu0 0.0
        %1320 = vmatmul.mubr.f32.gmra.mrb[0].mxu0 %v1220
        %v1321 = vpop.f32.mrb[0].mxu0
        %v1322 = vadd.f32 0.0, %v1321
        %v1323 = vpop.f32.mrb[0].mxu0
        %1324 = vmatprep.mubr.f32.mxu0 0.0
        %1325 = vmatmul.mubr.f32.gmra.mrb[0].mxu0 %v1223
        %v1326 = vpop.f32.mrb[0].mxu0
        %v1327 = vadd.f32 0.0, %v1326
        %v1328 = vpop.f32.mrb[0].mxu0
        %1329 = vdwg.mxu0
        %1334 = vrot.lane.b32.xlu0 %v1312, 32
        %v1335 = vpop.permute.xlu0 %1334
        %1336 = vrot.lane.b32.xlu0 %v1317, 32
        %v1337 = vpop.permute.xlu0 %1336
        %1338 = vrot.lane.b32.xlu0 %v1322, 32
        %v1339 = vpop.permute.xlu0 %1338
        %1340 = vrot.lane.b32.xlu0 %v1327, 32
        %v1341 = vpop.permute.xlu0 %1340
        %v1346 = vsel %vm959, %v1292, %v1335
        %v1347 = vsel %vm959, %v1297, %v1337
        %v1348 = vsel %vm959, %v1302, %v1339
        %v1349 = vsel %vm959, %v1307, %v1341
        %v1350 = vpack.c.bf16 %v1347, %v1346
        %v1351 = vpack.c.bf16 %v1349, %v1348
        %v1352 = vld [vmem:[%s4] sm:$0xf]
        %v1353 = vld [vmem:[%s4 + $0x4] sm:$0xf]
        %v1354 = vld [vmem:[%s4 + $0x8] sm:$0xf]
        %v1355 = vld [vmem:[%s4 + $0xc] sm:$0xf]
        %v1356 = vld [vmem:[%s4 + $0x10] sm:$0xf]
        %v1357 = vld [vmem:[%s4 + $0x14] sm:$0xf]
        %v1358 = vld [vmem:[%s4 + $0x18] sm:$0xf]
        %v1359 = vld [vmem:[%s4 + $0x1c] sm:$0xf]
        %v1360 = vld [vmem:[%s5] sm:$0x1]
        %v1362 = vlaneseq
        %v1363 = vshrl.u32 %v1362, 7
        %v1364 = vsub.s32 0, %v1363
        %v1365 = vrot.slane %v1360, %v1364
        %v1375 = vunpack.c.l.b16 %v1352
        %v1376 = vunpack.c.l.b16 %v1353
        %v1377 = vunpack.c.l.b16 %v1354
        %v1378 = vunpack.c.l.b16 %v1355
        %v1379 = vunpack.c.l.b16 %v1356
        %v1380 = vunpack.c.l.b16 %v1357
        %v1381 = vunpack.c.l.b16 %v1358
        %v1382 = vunpack.c.l.b16 %v1359
        %v1383 = vpack.c.b16 %v1376, %v1375
        %v1384 = vpack.c.b16 %v1378, %v1377
        %v1385 = vpack.c.b16 %v1380, %v1379
        %v1386 = vpack.c.b16 %v1382, %v1381
        %v1392 = vsel %vm678, %v1350, 0
        %v1395 = vsel %vm678, %v1351, 0
        %1397 = vmatprep.subr.bf16.mxu0 0
        %1398 = vmatpush1.bf16.msra.mxu0 %v1383
        %1399 = vmatprep.subr.bf16.mxu0 0
        %1400 = vmatpush1.bf16.msra.mxu0 %v1384
        %1401 = vmatprep.subr.bf16.mxu0 0
        %1402 = vmatpush1.bf16.msra.mxu0 %v1385
        %1403 = vmatprep.subr.bf16.mxu0 0
        %1404 = vmatpush1.bf16.msra.mxu0 %v1386
        %1405 = vmatprep.subr.bf16.mxu0 0
        %1406 = vmatpush1.bf16.msra.mxu0 0
        %1407 = vmatprep.subr.bf16.mxu0 0
        %1408 = vmatpush1.bf16.msra.mxu0 0
        %1409 = vmatprep.subr.bf16.mxu0 0
        %1410 = vmatpush1.bf16.msra.mxu0 0
        %1411 = vmatprep.subr.bf16.mxu0 0
        %1412 = vmatpush1.bf16.msra.mxu0 0
        %1413 = vmatprep.subr.bf16.mxu0 0
        %1414 = vmatpush1.bf16.msra.mxu0 0
        %1415 = vmatprep.subr.bf16.mxu0 0
        %1416 = vmatpush1.bf16.msra.mxu0 0
        %1417 = vmatprep.subr.bf16.mxu0 0
        %1418 = vmatpush1.bf16.msra.mxu0 0
        %1419 = vmatprep.subr.bf16.mxu0 0
        %1420 = vmatpush1.bf16.msra.mxu0 0
        %1421 = vmatprep.subr.bf16.mxu0 0
        %1422 = vmatpush1.bf16.msra.mxu0 0
        %1423 = vmatprep.subr.bf16.mxu0 0
        %1424 = vmatpush1.bf16.msra.mxu0 0
        %1425 = vmatprep.subr.bf16.mxu0 0
        %1426 = vmatpush1.bf16.msra.mxu0 0
        %1427 = vmatprep.subr.bf16.mxu0 0
        %1428 = vmatpush1.bf16.msra.mxu0 0
        %1429 = vmatprep.mubr.bf16.mxu0 0
        %1430 = vmatmul.mubr.bf16.gmra.mrb[0].mxu0 %v1392
        %v1431 = vpop.f32.mrb[0].mxu0
        %v1432 = vadd.f32 %v1365, %v1431
        %v1433 = vpop.f32.mrb[0].mxu0
        %v1434 = vpop.f32.mrb[0].mxu0
        %v1435 = vadd.f32 %v1365, %v1434
        %v1436 = vpop.f32.mrb[0].mxu0
        %1437 = vmatprep.mubr.bf16.mxu0 0
        %1438 = vmatmul.mubr.bf16.gmra.mrb[0].mxu0 %v1395
        %v1439 = vpop.f32.mrb[0].mxu0
        %v1440 = vadd.f32 %v1365, %v1439
        %v1441 = vpop.f32.mrb[0].mxu0
        %v1442 = vpop.f32.mrb[0].mxu0
        %v1443 = vadd.f32 %v1365, %v1442
        %v1444 = vpop.f32.mrb[0].mxu0
        %1445 = vdwg.mxu0
        %v1446 = vld [vmem:[%s6] sm:$0x1]
        %v1448 = vlaneseq
        %v1449 = vshrl.u32 %v1448, 7
        %v1450 = vsub.s32 0, %v1449
        %v1451 = vrot.slane %v1446, %v1450
        %v1453 = vmul.f32 %v1432, %v1451
        %v1454 = vmul.f32 %v1435, %v1451
        %v1455 = vmul.f32 %v1440, %v1451
        %v1456 = vmul.f32 %v1443, %v1451
        %v1457 = vadd.f32 %v575, %v1453
        %v1458 = vadd.f32 %v576, %v1454
        %v1459 = vadd.f32 %v577, %v1455
        %v1460 = vadd.f32 %v578, %v1456
        %v1461 = vld [vmem:[%s7] sm:$0x1]
        %v1462 = vld [vmem:[%s8] sm:$0x1]
        %v1463 = vsel %vm678, %v1457, 0.0
        %1464 = vadd.xlane.f32.xlu0 %v1463
        %v1465 = vpop.xlane.xlu0 %1464
        %v1466 = vsel %vm678, %v1458, 0.0
        %1467 = vadd.xlane.f32.xlu0 %v1466
        %v1468 = vpop.xlane.xlu0 %1467
        %v1469 = vsel %vm678, %v1459, 0.0
        %1470 = vadd.xlane.f32.xlu0 %v1469
        %v1471 = vpop.xlane.xlu0 %1470
        %v1472 = vsel %vm678, %v1460, 0.0
        %1473 = vadd.xlane.f32.xlu0 %v1472
        %v1474 = vpop.xlane.xlu0 %1473
        %v1475 = vmul.f32 %v1465, %v691
        %v1476 = vmul.f32 %v1468, %v691
        %v1477 = vmul.f32 %v1471, %v691
        %v1478 = vmul.f32 %v1474, %v691
        %v1479 = vsub.f32 %v1457, %v1475
        %v1480 = vsub.f32 %v1458, %v1476
        %v1481 = vsub.f32 %v1459, %v1477
        %v1482 = vsub.f32 %v1460, %v1478
        %v1483 = vmul.f32 %v1479, %v1479
        %v1484 = vmul.f32 %v1480, %v1480
        %v1485 = vmul.f32 %v1481, %v1481
        %v1486 = vmul.f32 %v1482, %v1482
        %v1487 = vsel %vm678, %v1483, 0.0
        %1488 = vadd.xlane.f32.xlu0 %v1487
        %v1489 = vpop.xlane.xlu0 %1488
        %v1490 = vsel %vm678, %v1484, 0.0
        %1491 = vadd.xlane.f32.xlu0 %v1490
        %v1492 = vpop.xlane.xlu0 %1491
        %v1493 = vsel %vm678, %v1485, 0.0
        %1494 = vadd.xlane.f32.xlu0 %v1493
        %v1495 = vpop.xlane.xlu0 %1494
        %v1496 = vsel %vm678, %v1486, 0.0
        %1497 = vadd.xlane.f32.xlu0 %v1496
        %v1498 = vpop.xlane.xlu0 %1497
        %v1499 = vmul.f32 %v1489, %v691
        %v1500 = vmul.f32 %v1492, %v691
        %v1501 = vmul.f32 %v1495, %v691
        %v1502 = vmul.f32 %v1498, %v691
        %v1503 = vadd.f32 %v1499, 1e-05
        %v1504 = vadd.f32 %v1500, 1e-05
        %v1505 = vadd.f32 %v1501, 1e-05
        %v1506 = vadd.f32 %v1502, 1e-05
        %v1507 = vrsqrt.pop %v1503
        %v1508 = vrsqrt.pop %v1504
        %v1509 = vrsqrt.pop %v1505
        %v1510 = vrsqrt.pop %v1506
        %v1511 = vmul.f32 %v1479, %v1507
        %v1512 = vmul.f32 %v1480, %v1508
        %v1513 = vmul.f32 %v1481, %v1509
        %v1514 = vmul.f32 %v1482, %v1510
        %v1516 = vlaneseq
        %v1517 = vshrl.u32 %v1516, 7
        %v1518 = vsub.s32 0, %v1517
        %v1519 = vrot.slane %v1461, %v1518
        %v1521 = vmul.f32 %v1511, %v1519
        %v1522 = vmul.f32 %v1512, %v1519
        %v1523 = vmul.f32 %v1513, %v1519
        %v1524 = vmul.f32 %v1514, %v1519
        %v1526 = vlaneseq
        %v1527 = vshrl.u32 %v1526, 7
        %v1528 = vsub.s32 0, %v1527
        %v1529 = vrot.slane %v1462, %v1528
        %v1531 = vadd.f32 %v1521, %v1529
        %v1532 = vadd.f32 %v1522, %v1529
        %v1533 = vadd.f32 %v1523, %v1529
        %v1534 = vadd.f32 %v1524, %v1529
        %v1535 = vrot.slane %v1531, 7
        %v1536 = vrot.slane %v1532, 7
        %v1537 = vrot.slane %v1533, 7
        %v1538 = vrot.slane %v1534, 7
        %v1539 = vsel %vm756, %v1537, %v1538
        %v1540 = vsel %vm756, %v1536, %v1537
        %v1541 = vsel %vm756, %v1535, %v1536
        %v1542 = vsel %vm756, %v1538, %v1535
        %v1543 = vrot.slane %v1531, 4
        %v1544 = vrot.slane %v1532, 4
        %v1545 = vrot.slane %v1533, 4
        %v1546 = vrot.slane %v1534, 4
        %v1547 = vsel %vm765, %v1545, %v1546
        %v1548 = vsel %vm765, %v1544, %v1545
        %v1549 = vsel %vm765, %v1543, %v1544
        %v1550 = vsel %vm765, %v1546, %v1543
        %v1551 = vsel %vm644, %v1542, 0.0
        %v1552 = vsel %vm645, %v1541, 0.0
        %v1553 = vsel %vm646, %v1540, 0.0
        %v1554 = vsel %vm647, %v1539, 0.0
        %v1555 = vsel %vm648, %v1550, 0.0
        %v1556 = vsel %vm649, %v1549, 0.0
        %v1557 = vsel %vm650, %v1548, 0.0
        %v1558 = vsel %vm651, %v1547, 0.0
        %v1559 = vsel %vm656, %v1542, 0.0
        %v1560 = vsel %vm657, %v1541, 0.0
        %v1561 = vsel %vm658, %v1540, 0.0
        %v1562 = vsel %vm659, %v1539, 0.0
        %v1563 = vsel %vm660, %v1551, %v1531
        %v1564 = vsel %vm661, %v1552, %v1532
        %v1565 = vsel %vm662, %v1553, %v1533
        %v1566 = vsel %vm663, %v1554, %v1534
        %v1567 = vsel %vm668, %v1555, %v1563
        %v1568 = vsel %vm669, %v1556, %v1564
        %v1569 = vsel %vm670, %v1557, %v1565
        %v1570 = vsel %vm671, %v1558, %v1566
        %v1571 = vsel %vm672, %v1559, %v1567
        %v1572 = vsel %vm673, %v1560, %v1568
        %v1573 = vsel %vm674, %v1561, %v1569
        %v1574 = vsel %vm675, %v1562, %v1570
        %v1575 = vpack.c.bf16 %v1572, %v1571
        %v1576 = vpack.c.bf16 %v1574, %v1573
        %v1577 = vld [vmem:[%s9] sm:$0xff]
        %v1578 = vld [vmem:[%s9 + $0x8] sm:$0xff]
        %v1579 = vld [vmem:[%s9 + $0x10] sm:$0xff]
        %v1580 = vld [vmem:[%s9 + $0x18] sm:$0xff]
        %v1581 = vld [vmem:[%s9 + $0x20] sm:$0xff]
        %v1582 = vld [vmem:[%s9 + $0x28] sm:$0xff]
        %v1583 = vld [vmem:[%s9 + $0x30] sm:$0xff]
        %v1584 = vld [vmem:[%s9 + $0x38] sm:$0xff]
        %v1585 = vld [vmem:[%s9 + $0x40] sm:$0xff]
        %v1586 = vld [vmem:[%s9 + $0x48] sm:$0xff]
        %v1587 = vld [vmem:[%s9 + $0x50] sm:$0xff]
        %v1588 = vld [vmem:[%s9 + $0x58] sm:$0xff]
        %v1589 = vld [vmem:[%s9 + $0x60] sm:$0xff]
        %v1590 = vld [vmem:[%s9 + $0x68] sm:$0xff]
        %v1591 = vld [vmem:[%s9 + $0x70] sm:$0xff]
        %v1592 = vld [vmem:[%s9 + $0x78] sm:$0xff]
        %v1593 = vld [vmem:[%s10] sm:$0xf]
        %v1595 = vlaneseq
        %v1596 = vshrl.u32 %v1595, 7
        %v1597 = vsub.s32 0, %v1596
        %v1598 = vrot.slane %v1593, %v1597
        %v1599 = vlaneseq
        %v1600 = vshrl.u32 %v1599, 7
        %v1601 = vsub.s32 1, %v1600
        %v1602 = vrot.slane %v1593, %v1601
        %v1603 = vlaneseq
        %v1604 = vshrl.u32 %v1603, 7
        %v1605 = vsub.s32 2, %v1604
        %v1606 = vrot.slane %v1593, %v1605
        %v1607 = vlaneseq
        %v1608 = vshrl.u32 %v1607, 7
        %v1609 = vsub.s32 3, %v1608
        %v1610 = vrot.slane %v1593, %v1609
        %v1631 = vunpack.c.l.b16 %v1577
        %v1632 = vunpack.c.h.b16 %v1577
        %v1633 = vunpack.c.l.b16 %v1578
        %v1634 = vunpack.c.h.b16 %v1578
        %v1635 = vunpack.c.l.b16 %v1579
        %v1636 = vunpack.c.h.b16 %v1579
        %v1637 = vunpack.c.l.b16 %v1580
        %v1638 = vunpack.c.h.b16 %v1580
        %v1639 = vunpack.c.l.b16 %v1581
        %v1640 = vunpack.c.h.b16 %v1581
        %v1641 = vunpack.c.l.b16 %v1582
        %v1642 = vunpack.c.h.b16 %v1582
        %v1643 = vunpack.c.l.b16 %v1583
        %v1644 = vunpack.c.h.b16 %v1583
        %v1645 = vunpack.c.l.b16 %v1584
        %v1646 = vunpack.c.h.b16 %v1584
        %v1647 = vunpack.c.l.b16 %v1585
        %v1648 = vunpack.c.h.b16 %v1585
        %v1649 = vunpack.c.l.b16 %v1586
        %v1650 = vunpack.c.h.b16 %v1586
        %v1651 = vunpack.c.l.b16 %v1587
        %v1652 = vunpack.c.h.b16 %v1587
        %v1653 = vunpack.c.l.b16 %v1588
        %v1654 = vunpack.c.h.b16 %v1588
        %v1655 = vunpack.c.l.b16 %v1589
        %v1656 = vunpack.c.h.b16 %v1589
        %v1657 = vunpack.c.l.b16 %v1590
        %v1658 = vunpack.c.h.b16 %v1590
        %v1659 = vunpack.c.l.b16 %v1591
        %v1660 = vunpack.c.h.b16 %v1591
        %v1661 = vunpack.c.l.b16 %v1592
        %v1662 = vunpack.c.h.b16 %v1592
        %v1663 = vpack.c.b16 %v1635, %v1631
        %v1664 = vpack.c.b16 %v1636, %v1632
        %v1665 = vpack.c.b16 %v1637, %v1633
        %v1666 = vpack.c.b16 %v1638, %v1634
        %v1667 = vpack.c.b16 %v1643, %v1639
        %v1668 = vpack.c.b16 %v1644, %v1640
        %v1669 = vpack.c.b16 %v1645, %v1641
        %v1670 = vpack.c.b16 %v1646, %v1642
        %v1671 = vpack.c.b16 %v1651, %v1647
        %v1672 = vpack.c.b16 %v1652, %v1648
        %v1673 = vpack.c.b16 %v1653, %v1649
        %v1674 = vpack.c.b16 %v1654, %v1650
        %v1675 = vpack.c.b16 %v1659, %v1655
        %v1676 = vpack.c.b16 %v1660, %v1656
        %v1677 = vpack.c.b16 %v1661, %v1657
        %v1678 = vpack.c.b16 %v1662, %v1658
        %v1696 = vsel %vm678, %v1575, 0
        %v1699 = vsel %vm678, %v1576, 0
        %1701 = vmatprep.subr.bf16.mxu0 %v1664
        %1702 = vmatpush1.bf16.msra.mxu0 %v1663
        %1703 = vmatprep.subr.bf16.mxu0 %v1668
        %1704 = vmatpush1.bf16.msra.mxu0 %v1667
        %1705 = vmatprep.subr.bf16.mxu0 %v1672
        %1706 = vmatpush1.bf16.msra.mxu0 %v1671
        %1707 = vmatprep.subr.bf16.mxu0 %v1676
        %1708 = vmatpush1.bf16.msra.mxu0 %v1675
        %1709 = vmatprep.subr.bf16.mxu0 0
        %1710 = vmatpush1.bf16.msra.mxu0 0
        %1711 = vmatprep.subr.bf16.mxu0 0
        %1712 = vmatpush1.bf16.msra.mxu0 0
        %1713 = vmatprep.subr.bf16.mxu0 0
        %1714 = vmatpush1.bf16.msra.mxu0 0
        %1715 = vmatprep.subr.bf16.mxu0 0
        %1716 = vmatpush1.bf16.msra.mxu0 0
        %1717 = vmatprep.subr.bf16.mxu0 0
        %1718 = vmatpush1.bf16.msra.mxu0 0
        %1719 = vmatprep.subr.bf16.mxu0 0
        %1720 = vmatpush1.bf16.msra.mxu0 0
        %1721 = vmatprep.subr.bf16.mxu0 0
        %1722 = vmatpush1.bf16.msra.mxu0 0
        %1723 = vmatprep.subr.bf16.mxu0 0
        %1724 = vmatpush1.bf16.msra.mxu0 0
        %1725 = vmatprep.subr.bf16.mxu0 0
        %1726 = vmatpush1.bf16.msra.mxu0 0
        %1727 = vmatprep.subr.bf16.mxu0 0
        %1728 = vmatpush1.bf16.msra.mxu0 0
        %1729 = vmatprep.subr.bf16.mxu0 0
        %1730 = vmatpush1.bf16.msra.mxu0 0
        %1731 = vmatprep.subr.bf16.mxu0 0
        %1732 = vmatpush1.bf16.msra.mxu0 0
        %1733 = vmatprep.mubr.bf16.mxu0 0
        %1734 = vmatmul.mubr.bf16.gmra.mrb[0].mxu0 %v1696
        %v1735 = vpop.f32.mrb[0].mxu0
        %v1736 = vadd.f32 %v1598, %v1735
        %v1737 = vpop.f32.mrb[0].mxu0
        %v1738 = vadd.f32 %v1602, %v1737
        %v1739 = vpop.f32.mrb[0].mxu0
        %v1740 = vadd.f32 %v1598, %v1739
        %v1741 = vpop.f32.mrb[0].mxu0
        %v1742 = vadd.f32 %v1602, %v1741
        %1743 = vmatprep.mubr.bf16.mxu0 0
        %1744 = vmatmul.mubr.bf16.gmra.mrb[0].mxu0 %v1699
        %v1745 = vpop.f32.mrb[0].mxu0
        %v1746 = vadd.f32 %v1598, %v1745
        %v1747 = vpop.f32.mrb[0].mxu0
        %v1748 = vadd.f32 %v1602, %v1747
        %v1749 = vpop.f32.mrb[0].mxu0
        %v1750 = vadd.f32 %v1598, %v1749
        %v1751 = vpop.f32.mrb[0].mxu0
        %v1752 = vadd.f32 %v1602, %v1751
        %1753 = vdwg.mxu0
        %1754 = vmatprep.subr.bf16.mxu0 %v1666
        %1755 = vmatpush1.bf16.msra.mxu0 %v1665
        %1756 = vmatprep.subr.bf16.mxu0 %v1670
        %1757 = vmatpush1.bf16.msra.mxu0 %v1669
        %1758 = vmatprep.subr.bf16.mxu0 %v1674
        %1759 = vmatpush1.bf16.msra.mxu0 %v1673
        %1760 = vmatprep.subr.bf16.mxu0 %v1678
        %1761 = vmatpush1.bf16.msra.mxu0 %v1677
        %1762 = vmatprep.subr.bf16.mxu0 0
        %1763 = vmatpush1.bf16.msra.mxu0 0
        %1764 = vmatprep.subr.bf16.mxu0 0
        %1765 = vmatpush1.bf16.msra.mxu0 0
        %1766 = vmatprep.subr.bf16.mxu0 0
        %1767 = vmatpush1.bf16.msra.mxu0 0
        %1768 = vmatprep.subr.bf16.mxu0 0
        %1769 = vmatpush1.bf16.msra.mxu0 0
        %1770 = vmatprep.subr.bf16.mxu0 0
        %1771 = vmatpush1.bf16.msra.mxu0 0
        %1772 = vmatprep.subr.bf16.mxu0 0
        %1773 = vmatpush1.bf16.msra.mxu0 0
        %1774 = vmatprep.subr.bf16.mxu0 0
        %1775 = vmatpush1.bf16.msra.mxu0 0
        %1776 = vmatprep.subr.bf16.mxu0 0
        %1777 = vmatpush1.bf16.msra.mxu0 0
        %1778 = vmatprep.subr.bf16.mxu0 0
        %1779 = vmatpush1.bf16.msra.mxu0 0
        %1780 = vmatprep.subr.bf16.mxu0 0
        %1781 = vmatpush1.bf16.msra.mxu0 0
        %1782 = vmatprep.subr.bf16.mxu0 0
        %1783 = vmatpush1.bf16.msra.mxu0 0
        %1784 = vmatprep.subr.bf16.mxu0 0
        %1785 = vmatpush1.bf16.msra.mxu0 0
        %1786 = vmatprep.mubr.bf16.mxu0 0
        %1787 = vmatmul.mubr.bf16.gmra.mrb[0].mxu0 %v1696
        %v1788 = vpop.f32.mrb[0].mxu0
        %v1789 = vadd.f32 %v1606, %v1788
        %v1790 = vpop.f32.mrb[0].mxu0
        %v1791 = vadd.f32 %v1610, %v1790
        %v1792 = vpop.f32.mrb[0].mxu0
        %v1793 = vadd.f32 %v1606, %v1792
        %v1794 = vpop.f32.mrb[0].mxu0
        %v1795 = vadd.f32 %v1610, %v1794
        %1796 = vmatprep.mubr.bf16.mxu0 0
        %1797 = vmatmul.mubr.bf16.gmra.mrb[0].mxu0 %v1699
        %v1798 = vpop.f32.mrb[0].mxu0
        %v1799 = vadd.f32 %v1606, %v1798
        %v1800 = vpop.f32.mrb[0].mxu0
        %v1801 = vadd.f32 %v1610, %v1800
        %v1802 = vpop.f32.mrb[0].mxu0
        %v1803 = vadd.f32 %v1606, %v1802
        %v1804 = vpop.f32.mrb[0].mxu0
        %v1805 = vadd.f32 %v1610, %v1804
        %1806 = vdwg.mxu0
        %v1807 = vmul.f32 %v1789, 0.5
        %v1808 = vmul.f32 %v1791, 0.5
        %v1809 = vmul.f32 %v1793, 0.5
        %v1810 = vmul.f32 %v1795, 0.5
        %v1811 = vmul.f32 %v1799, 0.5
        %v1812 = vmul.f32 %v1801, 0.5
        %v1813 = vmul.f32 %v1803, 0.5
        %v1814 = vmul.f32 %v1805, 0.5
        %v1815 = vmul.f32 %v1789, 0.70710677
        %v1816 = vmul.f32 %v1791, 0.70710677
        %v1817 = vmul.f32 %v1793, 0.70710677
        %v1818 = vmul.f32 %v1795, 0.70710677
        %v1819 = vmul.f32 %v1799, 0.70710677
        %v1820 = vmul.f32 %v1801, 0.70710677
        %v1821 = vmul.f32 %v1803, 0.70710677
        %v1822 = vmul.f32 %v1805, 0.70710677
        %v1823 = verf.f32.pop %v1815
        %v1824 = verf.f32.pop %v1816
        %v1825 = verf.f32.pop %v1817
        %v1826 = verf.f32.pop %v1818
        %v1827 = verf.f32.pop %v1819
        %v1828 = verf.f32.pop %v1820
        %v1829 = verf.f32.pop %v1821
        %v1830 = verf.f32.pop %v1822
        %v1831 = vadd.f32 %v1823, 1.0
        %v1832 = vadd.f32 %v1824, 1.0
        %v1833 = vadd.f32 %v1825, 1.0
        %v1834 = vadd.f32 %v1826, 1.0
        %v1835 = vadd.f32 %v1827, 1.0
        %v1836 = vadd.f32 %v1828, 1.0
        %v1837 = vadd.f32 %v1829, 1.0
        %v1838 = vadd.f32 %v1830, 1.0
        %v1839 = vmul.f32 %v1807, %v1831
        %v1840 = vmul.f32 %v1808, %v1832
        %v1841 = vmul.f32 %v1809, %v1833
        %v1842 = vmul.f32 %v1810, %v1834
        %v1843 = vmul.f32 %v1811, %v1835
        %v1844 = vmul.f32 %v1812, %v1836
        %v1845 = vmul.f32 %v1813, %v1837
        %v1846 = vmul.f32 %v1814, %v1838
        %v1847 = vmul.f32 %v1736, %v1839
        %v1848 = vmul.f32 %v1738, %v1840
        %v1849 = vmul.f32 %v1740, %v1841
        %v1850 = vmul.f32 %v1742, %v1842
        %v1851 = vmul.f32 %v1746, %v1843
        %v1852 = vmul.f32 %v1748, %v1844
        %v1853 = vmul.f32 %v1750, %v1845
        %v1854 = vmul.f32 %v1752, %v1846
        %v1855 = vpack.c.bf16 %v1849, %v1847
        %v1856 = vpack.c.bf16 %v1850, %v1848
        %v1857 = vpack.c.bf16 %v1853, %v1851
        %v1858 = vpack.c.bf16 %v1854, %v1852
        %v1859 = vld [vmem:[%s11] sm:$0xf]
        %v1860 = vld [vmem:[%s11 + $0x4] sm:$0xf]
        %v1861 = vld [vmem:[%s11 + $0x8] sm:$0xf]
        %v1862 = vld [vmem:[%s11 + $0xc] sm:$0xf]
        %v1863 = vld [vmem:[%s11 + $0x10] sm:$0xf]
        %v1864 = vld [vmem:[%s11 + $0x14] sm:$0xf]
        %v1865 = vld [vmem:[%s11 + $0x18] sm:$0xf]
        %v1866 = vld [vmem:[%s11 + $0x1c] sm:$0xf]
        %v1867 = vld [vmem:[%s11 + $0x20] sm:$0xf]
        %v1868 = vld [vmem:[%s11 + $0x24] sm:$0xf]
        %v1869 = vld [vmem:[%s11 + $0x28] sm:$0xf]
        %v1870 = vld [vmem:[%s11 + $0x2c] sm:$0xf]
        %v1871 = vld [vmem:[%s11 + $0x30] sm:$0xf]
        %v1872 = vld [vmem:[%s11 + $0x34] sm:$0xf]
        %v1873 = vld [vmem:[%s11 + $0x38] sm:$0xf]
        %v1874 = vld [vmem:[%s11 + $0x3c] sm:$0xf]
        %v1875 = vld [vmem:[%s11 + $0x40] sm:$0xf]
        %v1876 = vld [vmem:[%s11 + $0x44] sm:$0xf]
        %v1877 = vld [vmem:[%s11 + $0x48] sm:$0xf]
        %v1878 = vld [vmem:[%s11 + $0x4c] sm:$0xf]
        %v1879 = vld [vmem:[%s11 + $0x50] sm:$0xf]
        %v1880 = vld [vmem:[%s11 + $0x54] sm:$0xf]
        %v1881 = vld [vmem:[%s11 + $0x58] sm:$0xf]
        %v1882 = vld [vmem:[%s11 + $0x5c] sm:$0xf]
        %v1883 = vld [vmem:[%s11 + $0x60] sm:$0xf]
        %v1884 = vld [vmem:[%s11 + $0x64] sm:$0xf]
        %v1885 = vld [vmem:[%s11 + $0x68] sm:$0xf]
        %v1886 = vld [vmem:[%s11 + $0x6c] sm:$0xf]
        %v1887 = vld [vmem:[%s11 + $0x70] sm:$0xf]
        %v1888 = vld [vmem:[%s11 + $0x74] sm:$0xf]
        %v1889 = vld [vmem:[%s11 + $0x78] sm:$0xf]
        %v1890 = vld [vmem:[%s11 + $0x7c] sm:$0xf]
        %v1891 = vld [vmem:[%s12] sm:$0x1]
        %v1893 = vlaneseq
        %v1894 = vshrl.u32 %v1893, 7
        %v1895 = vsub.s32 0, %v1894
        %v1896 = vrot.slane %v1891, %v1895
        %v1930 = vunpack.c.l.b16 %v1859
        %v1931 = vunpack.c.l.b16 %v1860
        %v1932 = vunpack.c.l.b16 %v1861
        %v1933 = vunpack.c.l.b16 %v1862
        %v1934 = vunpack.c.l.b16 %v1863
        %v1935 = vunpack.c.l.b16 %v1864
        %v1936 = vunpack.c.l.b16 %v1865
        %v1937 = vunpack.c.l.b16 %v1866
        %v1938 = vunpack.c.l.b16 %v1867
        %v1939 = vunpack.c.l.b16 %v1868
        %v1940 = vunpack.c.l.b16 %v1869
        %v1941 = vunpack.c.l.b16 %v1870
        %v1942 = vunpack.c.l.b16 %v1871
        %v1943 = vunpack.c.l.b16 %v1872
        %v1944 = vunpack.c.l.b16 %v1873
        %v1945 = vunpack.c.l.b16 %v1874
        %v1946 = vunpack.c.l.b16 %v1875
        %v1947 = vunpack.c.l.b16 %v1876
        %v1948 = vunpack.c.l.b16 %v1877
        %v1949 = vunpack.c.l.b16 %v1878
        %v1950 = vunpack.c.l.b16 %v1879
        %v1951 = vunpack.c.l.b16 %v1880
        %v1952 = vunpack.c.l.b16 %v1881
        %v1953 = vunpack.c.l.b16 %v1882
        %v1954 = vunpack.c.l.b16 %v1883
        %v1955 = vunpack.c.l.b16 %v1884
        %v1956 = vunpack.c.l.b16 %v1885
        %v1957 = vunpack.c.l.b16 %v1886
        %v1958 = vunpack.c.l.b16 %v1887
        %v1959 = vunpack.c.l.b16 %v1888
        %v1960 = vunpack.c.l.b16 %v1889
        %v1961 = vunpack.c.l.b16 %v1890
        %v1962 = vpack.c.b16 %v1931, %v1930
        %v1963 = vpack.c.b16 %v1933, %v1932
        %v1964 = vpack.c.b16 %v1935, %v1934
        %v1965 = vpack.c.b16 %v1937, %v1936
        %v1966 = vpack.c.b16 %v1939, %v1938
        %v1967 = vpack.c.b16 %v1941, %v1940
        %v1968 = vpack.c.b16 %v1943, %v1942
        %v1969 = vpack.c.b16 %v1945, %v1944
        %v1970 = vpack.c.b16 %v1947, %v1946
        %v1971 = vpack.c.b16 %v1949, %v1948
        %v1972 = vpack.c.b16 %v1951, %v1950
        %v1973 = vpack.c.b16 %v1953, %v1952
        %v1974 = vpack.c.b16 %v1955, %v1954
        %v1975 = vpack.c.b16 %v1957, %v1956
        %v1976 = vpack.c.b16 %v1959, %v1958
        %v1977 = vpack.c.b16 %v1961, %v1960
        %1994 = vmatprep.subr.bf16.mxu0 0
        %1995 = vmatpush1.bf16.msra.mxu0 %v1962
        %1996 = vmatprep.subr.bf16.mxu0 0
        %1997 = vmatpush1.bf16.msra.mxu0 %v1963
        %1998 = vmatprep.subr.bf16.mxu0 0
        %1999 = vmatpush1.bf16.msra.mxu0 %v1964
        %2000 = vmatprep.subr.bf16.mxu0 0
        %2001 = vmatpush1.bf16.msra.mxu0 %v1965
        %2002 = vmatprep.subr.bf16.mxu0 0
        %2003 = vmatpush1.bf16.msra.mxu0 %v1966
        %2004 = vmatprep.subr.bf16.mxu0 0
        %2005 = vmatpush1.bf16.msra.mxu0 %v1967
        %2006 = vmatprep.subr.bf16.mxu0 0
        %2007 = vmatpush1.bf16.msra.mxu0 %v1968
        %2008 = vmatprep.subr.bf16.mxu0 0
        %2009 = vmatpush1.bf16.msra.mxu0 %v1969
        %2010 = vmatprep.subr.bf16.mxu0 0
        %2011 = vmatpush1.bf16.msra.mxu0 %v1970
        %2012 = vmatprep.subr.bf16.mxu0 0
        %2013 = vmatpush1.bf16.msra.mxu0 %v1971
        %2014 = vmatprep.subr.bf16.mxu0 0
        %2015 = vmatpush1.bf16.msra.mxu0 %v1972
        %2016 = vmatprep.subr.bf16.mxu0 0
        %2017 = vmatpush1.bf16.msra.mxu0 %v1973
        %2018 = vmatprep.subr.bf16.mxu0 0
        %2019 = vmatpush1.bf16.msra.mxu0 %v1974
        %2020 = vmatprep.subr.bf16.mxu0 0
        %2021 = vmatpush1.bf16.msra.mxu0 %v1975
        %2022 = vmatprep.subr.bf16.mxu0 0
        %2023 = vmatpush1.bf16.msra.mxu0 %v1976
        %2024 = vmatprep.subr.bf16.mxu0 0
        %2025 = vmatpush1.bf16.msra.mxu0 %v1977
        %2026 = vmatprep.mubr.bf16.mxu0 %v1856
        %2027 = vmatmul.mubr.bf16.gmra.mrb[0].mxu0 %v1855
        %v2028 = vpop.f32.mrb[0].mxu0
        %v2029 = vadd.f32 %v1896, %v2028
        %v2030 = vpop.f32.mrb[0].mxu0
        %v2031 = vpop.f32.mrb[0].mxu0
        %v2032 = vadd.f32 %v1896, %v2031
        %v2033 = vpop.f32.mrb[0].mxu0
        %2034 = vmatprep.mubr.bf16.mxu0 %v1858
        %2035 = vmatmul.mubr.bf16.gmra.mrb[0].mxu0 %v1857
        %v2036 = vpop.f32.mrb[0].mxu0
        %v2037 = vadd.f32 %v1896, %v2036
        %v2038 = vpop.f32.mrb[0].mxu0
        %v2039 = vpop.f32.mrb[0].mxu0
        %v2040 = vadd.f32 %v1896, %v2039
        %v2041 = vpop.f32.mrb[0].mxu0
        %2042 = vdwg.mxu0
        %v2043 = vld [vmem:[%s13] sm:$0x1]
        %v2045 = vlaneseq
        %v2046 = vshrl.u32 %v2045, 7
        %v2047 = vsub.s32 0, %v2046
        %v2048 = vrot.slane %v2043, %v2047
        %v2050 = vmul.f32 %v2029, %v2048
        %v2051 = vmul.f32 %v2032, %v2048
        %v2052 = vmul.f32 %v2037, %v2048
        %v2053 = vmul.f32 %v2040, %v2048
        %v2054 = vadd.f32 %v1457, %v2050
        %v2055 = vadd.f32 %v1458, %v2051
        %v2056 = vadd.f32 %v1459, %v2052
        %v2057 = vadd.f32 %v1460, %v2053
        %s2058 = scalar_lea.vmem %s1, 1
        %v2059 = vld [vmem:[%s2058] sm:$0x1]
        %s2060 = scalar_lea.vmem %s2, 1
        %v2061 = vld [vmem:[%s2060] sm:$0x1]
        %v2062 = vsel %vm678, %v2054, 0.0
        %2063 = vadd.xlane.f32.xlu0 %v2062
        %v2064 = vpop.xlane.xlu0 %2063
        %v2065 = vsel %vm678, %v2055, 0.0
        %2066 = vadd.xlane.f32.xlu0 %v2065
        %v2067 = vpop.xlane.xlu0 %2066
        %v2068 = vsel %vm678, %v2056, 0.0
        %2069 = vadd.xlane.f32.xlu0 %v2068
        %v2070 = vpop.xlane.xlu0 %2069
        %v2071 = vsel %vm678, %v2057, 0.0
        %2072 = vadd.xlane.f32.xlu0 %v2071
        %v2073 = vpop.xlane.xlu0 %2072
        %v2074 = vmul.f32 %v2064, %v691
        %v2075 = vmul.f32 %v2067, %v691
        %v2076 = vmul.f32 %v2070, %v691
        %v2077 = vmul.f32 %v2073, %v691
        %v2078 = vsub.f32 %v2054, %v2074
        %v2079 = vsub.f32 %v2055, %v2075
        %v2080 = vsub.f32 %v2056, %v2076
        %v2081 = vsub.f32 %v2057, %v2077
        %v2082 = vmul.f32 %v2078, %v2078
        %v2083 = vmul.f32 %v2079, %v2079
        %v2084 = vmul.f32 %v2080, %v2080
        %v2085 = vmul.f32 %v2081, %v2081
        %v2086 = vsel %vm678, %v2082, 0.0
        %2087 = vadd.xlane.f32.xlu0 %v2086
        %v2088 = vpop.xlane.xlu0 %2087
        %v2089 = vsel %vm678, %v2083, 0.0
        %2090 = vadd.xlane.f32.xlu0 %v2089
        %v2091 = vpop.xlane.xlu0 %2090
        %v2092 = vsel %vm678, %v2084, 0.0
        %2093 = vadd.xlane.f32.xlu0 %v2092
        %v2094 = vpop.xlane.xlu0 %2093
        %v2095 = vsel %vm678, %v2085, 0.0
        %2096 = vadd.xlane.f32.xlu0 %v2095
        %v2097 = vpop.xlane.xlu0 %2096
        %v2098 = vmul.f32 %v2088, %v691
        %v2099 = vmul.f32 %v2091, %v691
        %v2100 = vmul.f32 %v2094, %v691
        %v2101 = vmul.f32 %v2097, %v691
        %v2102 = vadd.f32 %v2098, 1e-05
        %v2103 = vadd.f32 %v2099, 1e-05
        %v2104 = vadd.f32 %v2100, 1e-05
        %v2105 = vadd.f32 %v2101, 1e-05
        %v2106 = vrsqrt.pop %v2102
        %v2107 = vrsqrt.pop %v2103
        %v2108 = vrsqrt.pop %v2104
        %v2109 = vrsqrt.pop %v2105
        %v2110 = vmul.f32 %v2078, %v2106
        %v2111 = vmul.f32 %v2079, %v2107
        %v2112 = vmul.f32 %v2080, %v2108
        %v2113 = vmul.f32 %v2081, %v2109
        %v2115 = vlaneseq
        %v2116 = vshrl.u32 %v2115, 7
        %v2117 = vsub.s32 0, %v2116
        %v2118 = vrot.slane %v2059, %v2117
        %v2120 = vmul.f32 %v2110, %v2118
        %v2121 = vmul.f32 %v2111, %v2118
        %v2122 = vmul.f32 %v2112, %v2118
        %v2123 = vmul.f32 %v2113, %v2118
        %v2125 = vlaneseq
        %v2126 = vshrl.u32 %v2125, 7
        %v2127 = vsub.s32 0, %v2126
        %v2128 = vrot.slane %v2061, %v2127
        %v2130 = vadd.f32 %v2120, %v2128
        %v2131 = vadd.f32 %v2121, %v2128
        %v2132 = vadd.f32 %v2122, %v2128
        %v2133 = vadd.f32 %v2123, %v2128
        %v2134 = vrot.slane %v2130, 7
        %v2135 = vrot.slane %v2131, 7
        %v2136 = vrot.slane %v2132, 7
        %v2137 = vrot.slane %v2133, 7
        %v2138 = vsel %vm756, %v2136, %v2137
        %v2139 = vsel %vm756, %v2135, %v2136
        %v2140 = vsel %vm756, %v2134, %v2135
        %v2141 = vsel %vm756, %v2137, %v2134
        %v2142 = vrot.slane %v2130, 4
        %v2143 = vrot.slane %v2131, 4
        %v2144 = vrot.slane %v2132, 4
        %v2145 = vrot.slane %v2133, 4
        %v2146 = vsel %vm765, %v2144, %v2145
        %v2147 = vsel %vm765, %v2143, %v2144
        %v2148 = vsel %vm765, %v2142, %v2143
        %v2149 = vsel %vm765, %v2145, %v2142
        %v2150 = vsel %vm644, %v2141, 0.0
        %v2151 = vsel %vm645, %v2140, 0.0
        %v2152 = vsel %vm646, %v2139, 0.0
        %v2153 = vsel %vm647, %v2138, 0.0
        %v2154 = vsel %vm648, %v2149, 0.0
        %v2155 = vsel %vm649, %v2148, 0.0
        %v2156 = vsel %vm650, %v2147, 0.0
        %v2157 = vsel %vm651, %v2146, 0.0
        %v2158 = vsel %vm656, %v2141, 0.0
        %v2159 = vsel %vm657, %v2140, 0.0
        %v2160 = vsel %vm658, %v2139, 0.0
        %v2161 = vsel %vm659, %v2138, 0.0
        %v2162 = vsel %vm660, %v2150, %v2130
        %v2163 = vsel %vm661, %v2151, %v2131
        %v2164 = vsel %vm662, %v2152, %v2132
        %v2165 = vsel %vm663, %v2153, %v2133
        %v2166 = vsel %vm668, %v2154, %v2162
        %v2167 = vsel %vm669, %v2155, %v2163
        %v2168 = vsel %vm670, %v2156, %v2164
        %v2169 = vsel %vm671, %v2157, %v2165
        %v2170 = vsel %vm672, %v2158, %v2166
        %v2171 = vsel %vm673, %v2159, %v2167
        %v2172 = vsel %vm674, %v2160, %v2168
        %v2173 = vsel %vm675, %v2161, %v2169
        %v2174 = vpack.c.bf16 %v2171, %v2170
        %v2175 = vpack.c.bf16 %v2173, %v2172
        %s2176 = scalar_lea.vmem %s3, 64
        %v2177 = vld [vmem:[%s2176] sm:$0xff]
        %v2178 = vld [vmem:[%s2176 + $0x8] sm:$0xff]
        %v2179 = vld [vmem:[%s2176 + $0x10] sm:$0xff]
        %v2180 = vld [vmem:[%s2176 + $0x18] sm:$0xff]
        %v2181 = vld [vmem:[%s2176 + $0x20] sm:$0xff]
        %v2182 = vld [vmem:[%s2176 + $0x28] sm:$0xff]
        %v2183 = vld [vmem:[%s2176 + $0x30] sm:$0xff]
        %v2184 = vld [vmem:[%s2176 + $0x38] sm:$0xff]
        %v2193 = vunpack.c.l.b16 %v2177
        %v2194 = vunpack.c.h.b16 %v2177
        %v2195 = vunpack.c.l.b16 %v2178
        %v2196 = vunpack.c.h.b16 %v2178
        %v2197 = vunpack.c.l.b16 %v2179
        %v2198 = vunpack.c.h.b16 %v2179
        %v2199 = vunpack.c.l.b16 %v2180
        %v2200 = vunpack.c.h.b16 %v2180
        %v2201 = vunpack.c.l.b16 %v2181
        %v2202 = vunpack.c.h.b16 %v2181
        %v2203 = vunpack.c.l.b16 %v2182
        %v2204 = vunpack.c.h.b16 %v2182
        %v2205 = vunpack.c.l.b16 %v2183
        %v2206 = vunpack.c.h.b16 %v2183
        %v2207 = vunpack.c.l.b16 %v2184
        %v2208 = vunpack.c.h.b16 %v2184
        %v2209 = vpack.c.b16 %v2195, %v2193
        %v2210 = vpack.c.b16 %v2196, %v2194
        %v2211 = vpack.c.b16 %v2199, %v2197
        %v2212 = vpack.c.b16 %v2200, %v2198
        %v2213 = vpack.c.b16 %v2203, %v2201
        %v2214 = vpack.c.b16 %v2204, %v2202
        %v2215 = vpack.c.b16 %v2207, %v2205
        %v2216 = vpack.c.b16 %v2208, %v2206
        %v2226 = vsel %vm678, %v2174, 0
        %v2229 = vsel %vm678, %v2175, 0
        %2231 = vmatprep.subr.bf16.mxu0 %v2210
        %2232 = vmatpush1.bf16.msra.mxu0 %v2209
        %2233 = vmatprep.subr.bf16.mxu0 %v2212
        %2234 = vmatpush1.bf16.msra.mxu0 %v2211
        %2235 = vmatprep.subr.bf16.mxu0 %v2214
        %2236 = vmatpush1.bf16.msra.mxu0 %v2213
        %2237 = vmatprep.subr.bf16.mxu0 %v2216
        %2238 = vmatpush1.bf16.msra.mxu0 %v2215
        %2239 = vmatprep.subr.bf16.mxu0 0
        %2240 = vmatpush1.bf16.msra.mxu0 0
        %2241 = vmatprep.subr.bf16.mxu0 0
        %2242 = vmatpush1.bf16.msra.mxu0 0
        %2243 = vmatprep.subr.bf16.mxu0 0
        %2244 = vmatpush1.bf16.msra.mxu0 0
        %2245 = vmatprep.subr.bf16.mxu0 0
        %2246 = vmatpush1.bf16.msra.mxu0 0
        %2247 = vmatprep.subr.bf16.mxu0 0
        %2248 = vmatpush1.bf16.msra.mxu0 0
        %2249 = vmatprep.subr.bf16.mxu0 0
        %2250 = vmatpush1.bf16.msra.mxu0 0
        %2251 = vmatprep.subr.bf16.mxu0 0
        %2252 = vmatpush1.bf16.msra.mxu0 0
        %2253 = vmatprep.subr.bf16.mxu0 0
        %2254 = vmatpush1.bf16.msra.mxu0 0
        %2255 = vmatprep.subr.bf16.mxu0 0
        %2256 = vmatpush1.bf16.msra.mxu0 0
        %2257 = vmatprep.subr.bf16.mxu0 0
        %2258 = vmatpush1.bf16.msra.mxu0 0
        %2259 = vmatprep.subr.bf16.mxu0 0
        %2260 = vmatpush1.bf16.msra.mxu0 0
        %2261 = vmatprep.subr.bf16.mxu0 0
        %2262 = vmatpush1.bf16.msra.mxu0 0
        %2263 = vmatprep.mubr.bf16.mxu0 0
        %2264 = vmatmul.mubr.bf16.gmra.mrb[0].mxu0 %v2226
        %v2265 = vpop.f32.mrb[0].mxu0
        %v2266 = vadd.f32 0.0, %v2265
        %v2267 = vpop.f32.mrb[0].mxu0
        %v2268 = vadd.f32 0.0, %v2267
        %v2269 = vpop.f32.mrb[0].mxu0
        %v2270 = vadd.f32 0.0, %v2269
        %v2271 = vpop.f32.mrb[0].mxu0
        %v2272 = vadd.f32 0.0, %v2271
        %2273 = vmatprep.mubr.bf16.mxu0 0
        %2274 = vmatmul.mubr.bf16.gmra.mrb[0].mxu0 %v2229
        %v2275 = vpop.f32.mrb[0].mxu0
        %v2276 = vadd.f32 0.0, %v2275
        %v2277 = vpop.f32.mrb[0].mxu0
        %v2278 = vadd.f32 0.0, %v2277
        %v2279 = vpop.f32.mrb[0].mxu0
        %v2280 = vadd.f32 0.0, %v2279
        %v2281 = vpop.f32.mrb[0].mxu0
        %v2282 = vadd.f32 0.0, %v2281
        %2283 = vdwg.mxu0
        %2288 = vrot.lane.b32.xlu0 %v2266, 96
        %v2289 = vpop.permute.xlu0 %2288
        %2290 = vrot.lane.b32.xlu0 %v2270, 96
        %v2291 = vpop.permute.xlu0 %2290
        %2292 = vrot.lane.b32.xlu0 %v2276, 96
        %v2293 = vpop.permute.xlu0 %2292
        %2294 = vrot.lane.b32.xlu0 %v2280, 96
        %v2295 = vpop.permute.xlu0 %2294
        %2304 = vrot.lane.b32.xlu0 %v2268, 96
        %v2305 = vpop.permute.xlu0 %2304
        %2306 = vrot.lane.b32.xlu0 %v2272, 96
        %v2307 = vpop.permute.xlu0 %2306
        %2308 = vrot.lane.b32.xlu0 %v2278, 96
        %v2309 = vpop.permute.xlu0 %2308
        %2310 = vrot.lane.b32.xlu0 %v2282, 96
        %v2311 = vpop.permute.xlu0 %2310
        %v2316 = vmul.f32 %v2266, 0.17677669
        %v2317 = vmul.f32 %v2270, 0.17677669
        %v2318 = vmul.f32 %v2276, 0.17677669
        %v2319 = vmul.f32 %v2280, 0.17677669
        %v2320 = vmul.f32 %v2289, 0.17677669
        %v2321 = vmul.f32 %v2291, 0.17677669
        %v2322 = vmul.f32 %v2293, 0.17677669
        %v2323 = vmul.f32 %v2295, 0.17677669
        %2324 = vrot.lane.b32.xlu0 %v2266, 64
        %v2325 = vpop.permute.xlu0 %2324
        %2326 = vrot.lane.b32.xlu0 %v2270, 64
        %v2327 = vpop.permute.xlu0 %2326
        %2328 = vrot.lane.b32.xlu0 %v2276, 64
        %v2329 = vpop.permute.xlu0 %2328
        %2330 = vrot.lane.b32.xlu0 %v2280, 64
        %v2331 = vpop.permute.xlu0 %2330
        %2332 = vrot.lane.b32.xlu0 %v2289, 64
        %v2333 = vpop.permute.xlu0 %2332
        %2334 = vrot.lane.b32.xlu0 %v2291, 64
        %v2335 = vpop.permute.xlu0 %2334
        %2336 = vrot.lane.b32.xlu0 %v2293, 64
        %v2337 = vpop.permute.xlu0 %2336
        %2338 = vrot.lane.b32.xlu0 %v2295, 64
        %v2339 = vpop.permute.xlu0 %2338
        %v2341 = vsel %vm959, %v2316, 0
        %v2344 = vsel %vm959, %v2317, 0
        %v2347 = vsel %vm959, %v2318, 0
        %v2350 = vsel %vm959, %v2319, 0
        %v2353 = vsel %vm959, %v2320, 0
        %v2356 = vsel %vm959, %v2321, 0
        %v2359 = vsel %vm959, %v2322, 0
        %v2362 = vsel %vm959, %v2323, 0
        %v2364 = vsel %vm959, %v2325, 0
        %v2366 = vsel %vm959, %v2327, 0
        %v2368 = vsel %vm959, %v2329, 0
        %v2370 = vsel %vm959, %v2331, 0
        %v2372 = vsel %vm959, %v2333, 0
        %v2374 = vsel %vm959, %v2335, 0
        %v2376 = vsel %vm959, %v2337, 0
        %v2378 = vsel %vm959, %v2339, 0
        %2380 = vmatprep.subr.mxu0 0.0
        %2381 = vmatpush1.xpose.msra.mxu0 %v2364
        %2382 = vmatprep.subr.mxu0 0.0
        %2383 = vmatpush1.xpose.msra.mxu0 %v2366
        %2384 = vmatprep.subr.mxu0 0.0
        %2385 = vmatpush1.xpose.msra.mxu0 %v2368
        %2386 = vmatprep.subr.mxu0 0.0
        %2387 = vmatpush1.xpose.msra.mxu0 %v2370
        %2388 = vmatprep.subr.mxu0 0.0
        %2389 = vmatpush1.xpose.msra.mxu0 %v2372
        %2390 = vmatprep.subr.mxu0 0.0
        %2391 = vmatpush1.xpose.msra.mxu0 %v2374
        %2392 = vmatprep.subr.mxu0 0.0
        %2393 = vmatpush1.xpose.msra.mxu0 %v2376
        %2394 = vmatprep.subr.mxu0 0.0
        %2395 = vmatpush1.xpose.msra.mxu0 %v2378
        %2396 = vmatprep.subr.mxu0 0.0
        %2397 = vmatpush1.xpose.msra.mxu0 0.0
        %2398 = vmatprep.subr.mxu0 0.0
        %2399 = vmatpush1.xpose.msra.mxu0 0.0
        %2400 = vmatprep.subr.mxu0 0.0
        %2401 = vmatpush1.xpose.msra.mxu0 0.0
        %2402 = vmatprep.subr.mxu0 0.0
        %2403 = vmatpush1.xpose.msra.mxu0 0.0
        %2404 = vmatprep.subr.mxu0 0.0
        %2405 = vmatpush1.xpose.msra.mxu0 0.0
        %2406 = vmatprep.subr.mxu0 0.0
        %2407 = vmatpush1.xpose.msra.mxu0 0.0
        %2408 = vmatprep.subr.mxu0 0.0
        %2409 = vmatpush1.xpose.msra.mxu0 0.0
        %2410 = vmatprep.subr.mxu0 0.0
        %2411 = vmatpush1.xpose.msra.mxu0 0.0
        %2412 = vmatprep.subr.mxu0 0.0
        %2413 = vmatpush1.xpose.msra.mxu0 0.0
        %2414 = vmatprep.subr.mxu0 0.0
        %2415 = vmatpush1.xpose.msra.mxu0 0.0
        %2416 = vmatprep.subr.mxu0 0.0
        %2417 = vmatpush1.xpose.msra.mxu0 0.0
        %2418 = vmatprep.subr.mxu0 0.0
        %2419 = vmatpush1.xpose.msra.mxu0 0.0
        %2420 = vmatprep.subr.mxu0 0.0
        %2421 = vmatpush1.xpose.msra.mxu0 0.0
        %2422 = vmatprep.subr.mxu0 0.0
        %2423 = vmatpush1.xpose.msra.mxu0 0.0
        %2424 = vmatprep.subr.mxu0 0.0
        %2425 = vmatpush1.xpose.msra.mxu0 0.0
        %2426 = vmatprep.subr.mxu0 0.0
        %2427 = vmatpush1.xpose.msra.mxu0 0.0
        %2428 = vmatprep.subr.mxu0 0.0
        %2429 = vmatpush1.xpose.msra.mxu0 0.0
        %2430 = vmatprep.subr.mxu0 0.0
        %2431 = vmatpush1.xpose.msra.mxu0 0.0
        %2432 = vmatprep.subr.mxu0 0.0
        %2433 = vmatpush1.xpose.msra.mxu0 0.0
        %2434 = vmatprep.subr.mxu0 0.0
        %2435 = vmatpush1.xpose.msra.mxu0 0.0
        %2436 = vmatprep.subr.mxu0 0.0
        %2437 = vmatpush1.xpose.msra.mxu0 0.0
        %2438 = vmatprep.subr.mxu0 0.0
        %2439 = vmatpush1.xpose.msra.mxu0 0.0
        %2440 = vmatprep.subr.mxu0 0.0
        %2441 = vmatpush1.xpose.msra.mxu0 0.0
        %2442 = vmatprep.subr.mxu0 0.0
        %2443 = vmatpush1.xpose.msra.mxu0 0.0
        %2444 = vmatprep.mubr.f32.mxu0 0.0
        %2445 = vmatmul.mubr.f32.gmra.mrb[0].mxu0 %v2341
        %v2446 = vpop.f32.mrb[0].mxu0
        %v2447 = vadd.f32 0.0, %v2446
        %v2448 = vpop.f32.mrb[0].mxu0
        %2449 = vmatprep.mubr.f32.mxu0 0.0
        %2450 = vmatmul.mubr.f32.gmra.mrb[0].mxu0 %v2344
        %v2451 = vpop.f32.mrb[0].mxu0
        %v2452 = vadd.f32 0.0, %v2451
        %v2453 = vpop.f32.mrb[0].mxu0
        %2454 = vmatprep.mubr.f32.mxu0 0.0
        %2455 = vmatmul.mubr.f32.gmra.mrb[0].mxu0 %v2347
        %v2456 = vpop.f32.mrb[0].mxu0
        %v2457 = vadd.f32 0.0, %v2456
        %v2458 = vpop.f32.mrb[0].mxu0
        %2459 = vmatprep.mubr.f32.mxu0 0.0
        %2460 = vmatmul.mubr.f32.gmra.mrb[0].mxu0 %v2350
        %v2461 = vpop.f32.mrb[0].mxu0
        %v2462 = vadd.f32 0.0, %v2461
        %v2463 = vpop.f32.mrb[0].mxu0
        %2464 = vmatprep.mubr.f32.mxu0 0.0
        %2465 = vmatmul.mubr.f32.gmra.mrb[0].mxu0 %v2353
        %v2466 = vpop.f32.mrb[0].mxu0
        %v2467 = vadd.f32 0.0, %v2466
        %v2468 = vpop.f32.mrb[0].mxu0
        %2469 = vmatprep.mubr.f32.mxu0 0.0
        %2470 = vmatmul.mubr.f32.gmra.mrb[0].mxu0 %v2356
        %v2471 = vpop.f32.mrb[0].mxu0
        %v2472 = vadd.f32 0.0, %v2471
        %v2473 = vpop.f32.mrb[0].mxu0
        %2474 = vmatprep.mubr.f32.mxu0 0.0
        %2475 = vmatmul.mubr.f32.gmra.mrb[0].mxu0 %v2359
        %v2476 = vpop.f32.mrb[0].mxu0
        %v2477 = vadd.f32 0.0, %v2476
        %v2478 = vpop.f32.mrb[0].mxu0
        %2479 = vmatprep.mubr.f32.mxu0 0.0
        %2480 = vmatmul.mubr.f32.gmra.mrb[0].mxu0 %v2362
        %v2481 = vpop.f32.mrb[0].mxu0
        %v2482 = vadd.f32 0.0, %v2481
        %v2483 = vpop.f32.mrb[0].mxu0
        %2484 = vdwg.mxu0
        %v2485 = vsel %vm624, %v2447, -1e+30
        %v2486 = vsel %vm625, %v2452, -1e+30
        %v2487 = vsel %vm626, %v2457, -1e+30
        %v2488 = vsel %vm627, %v2462, -1e+30
        %v2489 = vsel %vm628, %v2467, -1e+30
        %v2490 = vsel %vm629, %v2472, -1e+30
        %v2491 = vsel %vm630, %v2477, -1e+30
        %v2492 = vsel %vm631, %v2482, -1e+30
        %v2493 = vsel %vm678, %v2485, -inf
        %2494 = vmax.xlane.f32.xlu0 %v2493
        %v2495 = vpop.xlane.xlu0 %2494
        %v2496 = vsel %vm678, %v2486, -inf
        %2497 = vmax.xlane.f32.xlu0 %v2496
        %v2498 = vpop.xlane.xlu0 %2497
        %v2499 = vsel %vm678, %v2487, -inf
        %2500 = vmax.xlane.f32.xlu0 %v2499
        %v2501 = vpop.xlane.xlu0 %2500
        %v2502 = vsel %vm678, %v2488, -inf
        %2503 = vmax.xlane.f32.xlu0 %v2502
        %v2504 = vpop.xlane.xlu0 %2503
        %v2505 = vsel %vm678, %v2489, -inf
        %2506 = vmax.xlane.f32.xlu0 %v2505
        %v2507 = vpop.xlane.xlu0 %2506
        %v2508 = vsel %vm678, %v2490, -inf
        %2509 = vmax.xlane.f32.xlu0 %v2508
        %v2510 = vpop.xlane.xlu0 %2509
        %v2511 = vsel %vm678, %v2491, -inf
        %2512 = vmax.xlane.f32.xlu0 %v2511
        %v2513 = vpop.xlane.xlu0 %2512
        %v2514 = vsel %vm678, %v2492, -inf
        %2515 = vmax.xlane.f32.xlu0 %v2514
        %v2516 = vpop.xlane.xlu0 %2515
        %v2517 = vsub.f32 %v2485, %v2495
        %v2518 = vsub.f32 %v2486, %v2498
        %v2519 = vsub.f32 %v2487, %v2501
        %v2520 = vsub.f32 %v2488, %v2504
        %v2521 = vsub.f32 %v2489, %v2507
        %v2522 = vsub.f32 %v2490, %v2510
        %v2523 = vsub.f32 %v2491, %v2513
        %v2524 = vsub.f32 %v2492, %v2516
        %v2525 = vmul.f32 %v2517, 1.442695
        %v2526 = vpow.pop %v2525
        %v2527 = vmul.f32 %v2518, 1.442695
        %v2528 = vpow.pop %v2527
        %v2529 = vmul.f32 %v2519, 1.442695
        %v2530 = vpow.pop %v2529
        %v2531 = vmul.f32 %v2520, 1.442695
        %v2532 = vpow.pop %v2531
        %v2533 = vmul.f32 %v2521, 1.442695
        %v2534 = vpow.pop %v2533
        %v2535 = vmul.f32 %v2522, 1.442695
        %v2536 = vpow.pop %v2535
        %v2537 = vmul.f32 %v2523, 1.442695
        %v2538 = vpow.pop %v2537
        %v2539 = vmul.f32 %v2524, 1.442695
        %v2540 = vpow.pop %v2539
        %v2541 = vsel %vm678, %v2526, 0.0
        %2542 = vadd.xlane.f32.xlu0 %v2541
        %v2543 = vpop.xlane.xlu0 %2542
        %v2544 = vsel %vm678, %v2528, 0.0
        %2545 = vadd.xlane.f32.xlu0 %v2544
        %v2546 = vpop.xlane.xlu0 %2545
        %v2547 = vsel %vm678, %v2530, 0.0
        %2548 = vadd.xlane.f32.xlu0 %v2547
        %v2549 = vpop.xlane.xlu0 %2548
        %v2550 = vsel %vm678, %v2532, 0.0
        %2551 = vadd.xlane.f32.xlu0 %v2550
        %v2552 = vpop.xlane.xlu0 %2551
        %v2553 = vsel %vm678, %v2534, 0.0
        %2554 = vadd.xlane.f32.xlu0 %v2553
        %v2555 = vpop.xlane.xlu0 %2554
        %v2556 = vsel %vm678, %v2536, 0.0
        %2557 = vadd.xlane.f32.xlu0 %v2556
        %v2558 = vpop.xlane.xlu0 %2557
        %v2559 = vsel %vm678, %v2538, 0.0
        %2560 = vadd.xlane.f32.xlu0 %v2559
        %v2561 = vpop.xlane.xlu0 %2560
        %v2562 = vsel %vm678, %v2540, 0.0
        %2563 = vadd.xlane.f32.xlu0 %v2562
        %v2564 = vpop.xlane.xlu0 %2563
        %v2565 = vrcp.pop %v2543
        %v2566 = vrcp.pop %v2546
        %v2567 = vrcp.pop %v2549
        %v2568 = vrcp.pop %v2552
        %v2569 = vrcp.pop %v2555
        %v2570 = vrcp.pop %v2558
        %v2571 = vrcp.pop %v2561
        %v2572 = vrcp.pop %v2564
        %v2573 = vmul.f32 %v2526, %v2565
        %v2574 = vmul.f32 %v2528, %v2566
        %v2575 = vmul.f32 %v2530, %v2567
        %v2576 = vmul.f32 %v2532, %v2568
        %v2577 = vmul.f32 %v2534, %v2569
        %v2578 = vmul.f32 %v2536, %v2570
        %v2579 = vmul.f32 %v2538, %v2571
        %v2580 = vmul.f32 %v2540, %v2572
        %v2582 = vsel %vm678, %v2573, 0
        %v2585 = vsel %vm678, %v2574, 0
        %v2588 = vsel %vm678, %v2575, 0
        %v2591 = vsel %vm678, %v2576, 0
        %v2594 = vsel %vm678, %v2577, 0
        %v2597 = vsel %vm678, %v2578, 0
        %v2600 = vsel %vm678, %v2579, 0
        %v2603 = vsel %vm678, %v2580, 0
        %2605 = vmatprep.subr.mxu0 0.0
        %2606 = vmatpush1.msra.mxu0 %v2268
        %2607 = vmatprep.subr.mxu0 0.0
        %2608 = vmatpush1.msra.mxu0 %v2272
        %2609 = vmatprep.subr.mxu0 0.0
        %2610 = vmatpush1.msra.mxu0 %v2278
        %2611 = vmatprep.subr.mxu0 0.0
        %2612 = vmatpush1.msra.mxu0 %v2282
        %2613 = vmatprep.subr.mxu0 0.0
        %2614 = vmatpush1.msra.mxu0 %v2305
        %2615 = vmatprep.subr.mxu0 0.0
        %2616 = vmatpush1.msra.mxu0 %v2307
        %2617 = vmatprep.subr.mxu0 0.0
        %2618 = vmatpush1.msra.mxu0 %v2309
        %2619 = vmatprep.subr.mxu0 0.0
        %2620 = vmatpush1.msra.mxu0 %v2311
        %2621 = vmatprep.subr.mxu0 0.0
        %2622 = vmatpush1.msra.mxu0 0.0
        %2623 = vmatprep.subr.mxu0 0.0
        %2624 = vmatpush1.msra.mxu0 0.0
        %2625 = vmatprep.subr.mxu0 0.0
        %2626 = vmatpush1.msra.mxu0 0.0
        %2627 = vmatprep.subr.mxu0 0.0
        %2628 = vmatpush1.msra.mxu0 0.0
        %2629 = vmatprep.subr.mxu0 0.0
        %2630 = vmatpush1.msra.mxu0 0.0
        %2631 = vmatprep.subr.mxu0 0.0
        %2632 = vmatpush1.msra.mxu0 0.0
        %2633 = vmatprep.subr.mxu0 0.0
        %2634 = vmatpush1.msra.mxu0 0.0
        %2635 = vmatprep.subr.mxu0 0.0
        %2636 = vmatpush1.msra.mxu0 0.0
        %2637 = vmatprep.subr.mxu0 0.0
        %2638 = vmatpush1.msra.mxu0 0.0
        %2639 = vmatprep.subr.mxu0 0.0
        %2640 = vmatpush1.msra.mxu0 0.0
        %2641 = vmatprep.subr.mxu0 0.0
        %2642 = vmatpush1.msra.mxu0 0.0
        %2643 = vmatprep.subr.mxu0 0.0
        %2644 = vmatpush1.msra.mxu0 0.0
        %2645 = vmatprep.subr.mxu0 0.0
        %2646 = vmatpush1.msra.mxu0 0.0
        %2647 = vmatprep.subr.mxu0 0.0
        %2648 = vmatpush1.msra.mxu0 0.0
        %2649 = vmatprep.subr.mxu0 0.0
        %2650 = vmatpush1.msra.mxu0 0.0
        %2651 = vmatprep.subr.mxu0 0.0
        %2652 = vmatpush1.msra.mxu0 0.0
        %2653 = vmatprep.subr.mxu0 0.0
        %2654 = vmatpush1.msra.mxu0 0.0
        %2655 = vmatprep.subr.mxu0 0.0
        %2656 = vmatpush1.msra.mxu0 0.0
        %2657 = vmatprep.subr.mxu0 0.0
        %2658 = vmatpush1.msra.mxu0 0.0
        %2659 = vmatprep.subr.mxu0 0.0
        %2660 = vmatpush1.msra.mxu0 0.0
        %2661 = vmatprep.subr.mxu0 0.0
        %2662 = vmatpush1.msra.mxu0 0.0
        %2663 = vmatprep.subr.mxu0 0.0
        %2664 = vmatpush1.msra.mxu0 0.0
        %2665 = vmatprep.subr.mxu0 0.0
        %2666 = vmatpush1.msra.mxu0 0.0
        %2667 = vmatprep.subr.mxu0 0.0
        %2668 = vmatpush1.msra.mxu0 0.0
        %2669 = vmatprep.mubr.f32.mxu0 0.0
        %2670 = vmatmul.mubr.f32.gmra.mrb[0].mxu0 %v2582
        %v2671 = vpop.f32.mrb[0].mxu0
        %v2672 = vadd.f32 0.0, %v2671
        %v2673 = vpop.f32.mrb[0].mxu0
        %2674 = vmatprep.mubr.f32.mxu0 0.0
        %2675 = vmatmul.mubr.f32.gmra.mrb[0].mxu0 %v2585
        %v2676 = vpop.f32.mrb[0].mxu0
        %v2677 = vadd.f32 0.0, %v2676
        %v2678 = vpop.f32.mrb[0].mxu0
        %2679 = vmatprep.mubr.f32.mxu0 0.0
        %2680 = vmatmul.mubr.f32.gmra.mrb[0].mxu0 %v2588
        %v2681 = vpop.f32.mrb[0].mxu0
        %v2682 = vadd.f32 0.0, %v2681
        %v2683 = vpop.f32.mrb[0].mxu0
        %2684 = vmatprep.mubr.f32.mxu0 0.0
        %2685 = vmatmul.mubr.f32.gmra.mrb[0].mxu0 %v2591
        %v2686 = vpop.f32.mrb[0].mxu0
        %v2687 = vadd.f32 0.0, %v2686
        %v2688 = vpop.f32.mrb[0].mxu0
        %2689 = vmatprep.mubr.f32.mxu0 0.0
        %2690 = vmatmul.mubr.f32.gmra.mrb[0].mxu0 %v2594
        %v2691 = vpop.f32.mrb[0].mxu0
        %v2692 = vadd.f32 0.0, %v2691
        %v2693 = vpop.f32.mrb[0].mxu0
        %2694 = vmatprep.mubr.f32.mxu0 0.0
        %2695 = vmatmul.mubr.f32.gmra.mrb[0].mxu0 %v2597
        %v2696 = vpop.f32.mrb[0].mxu0
        %v2697 = vadd.f32 0.0, %v2696
        %v2698 = vpop.f32.mrb[0].mxu0
        %2699 = vmatprep.mubr.f32.mxu0 0.0
        %2700 = vmatmul.mubr.f32.gmra.mrb[0].mxu0 %v2600
        %v2701 = vpop.f32.mrb[0].mxu0
        %v2702 = vadd.f32 0.0, %v2701
        %v2703 = vpop.f32.mrb[0].mxu0
        %2704 = vmatprep.mubr.f32.mxu0 0.0
        %2705 = vmatmul.mubr.f32.gmra.mrb[0].mxu0 %v2603
        %v2706 = vpop.f32.mrb[0].mxu0
        %v2707 = vadd.f32 0.0, %v2706
        %v2708 = vpop.f32.mrb[0].mxu0
        %2709 = vdwg.mxu0
        %2714 = vrot.lane.b32.xlu0 %v2692, 32
        %v2715 = vpop.permute.xlu0 %2714
        %2716 = vrot.lane.b32.xlu0 %v2697, 32
        %v2717 = vpop.permute.xlu0 %2716
        %2718 = vrot.lane.b32.xlu0 %v2702, 32
        %v2719 = vpop.permute.xlu0 %2718
        %2720 = vrot.lane.b32.xlu0 %v2707, 32
        %v2721 = vpop.permute.xlu0 %2720
        %v2726 = vsel %vm959, %v2672, %v2715
        %v2727 = vsel %vm959, %v2677, %v2717
        %v2728 = vsel %vm959, %v2682, %v2719
        %v2729 = vsel %vm959, %v2687, %v2721
        %v2730 = vpack.c.bf16 %v2727, %v2726
        %v2731 = vpack.c.bf16 %v2729, %v2728
        %s2732 = scalar_lea.vmem %s4, 32
        %v2733 = vld [vmem:[%s2732] sm:$0xf]
        %v2734 = vld [vmem:[%s2732 + $0x4] sm:$0xf]
        %v2735 = vld [vmem:[%s2732 + $0x8] sm:$0xf]
        %v2736 = vld [vmem:[%s2732 + $0xc] sm:$0xf]
        %v2737 = vld [vmem:[%s2732 + $0x10] sm:$0xf]
        %v2738 = vld [vmem:[%s2732 + $0x14] sm:$0xf]
        %v2739 = vld [vmem:[%s2732 + $0x18] sm:$0xf]
        %v2740 = vld [vmem:[%s2732 + $0x1c] sm:$0xf]
        %s2741 = scalar_lea.vmem %s5, 1
        %v2742 = vld [vmem:[%s2741] sm:$0x1]
        %v2744 = vlaneseq
        %v2745 = vshrl.u32 %v2744, 7
        %v2746 = vsub.s32 0, %v2745
        %v2747 = vrot.slane %v2742, %v2746
        %v2757 = vunpack.c.l.b16 %v2733
        %v2758 = vunpack.c.l.b16 %v2734
        %v2759 = vunpack.c.l.b16 %v2735
        %v2760 = vunpack.c.l.b16 %v2736
        %v2761 = vunpack.c.l.b16 %v2737
        %v2762 = vunpack.c.l.b16 %v2738
        %v2763 = vunpack.c.l.b16 %v2739
        %v2764 = vunpack.c.l.b16 %v2740
        %v2765 = vpack.c.b16 %v2758, %v2757
        %v2766 = vpack.c.b16 %v2760, %v2759
        %v2767 = vpack.c.b16 %v2762, %v2761
        %v2768 = vpack.c.b16 %v2764, %v2763
        %v2774 = vsel %vm678, %v2730, 0
        %v2777 = vsel %vm678, %v2731, 0
        %2779 = vmatprep.subr.bf16.mxu0 0
        %2780 = vmatpush1.bf16.msra.mxu0 %v2765
        %2781 = vmatprep.subr.bf16.mxu0 0
        %2782 = vmatpush1.bf16.msra.mxu0 %v2766
        %2783 = vmatprep.subr.bf16.mxu0 0
        %2784 = vmatpush1.bf16.msra.mxu0 %v2767
        %2785 = vmatprep.subr.bf16.mxu0 0
        %2786 = vmatpush1.bf16.msra.mxu0 %v2768
        %2787 = vmatprep.subr.bf16.mxu0 0
        %2788 = vmatpush1.bf16.msra.mxu0 0
        %2789 = vmatprep.subr.bf16.mxu0 0
        %2790 = vmatpush1.bf16.msra.mxu0 0
        %2791 = vmatprep.subr.bf16.mxu0 0
        %2792 = vmatpush1.bf16.msra.mxu0 0
        %2793 = vmatprep.subr.bf16.mxu0 0
        %2794 = vmatpush1.bf16.msra.mxu0 0
        %2795 = vmatprep.subr.bf16.mxu0 0
        %2796 = vmatpush1.bf16.msra.mxu0 0
        %2797 = vmatprep.subr.bf16.mxu0 0
        %2798 = vmatpush1.bf16.msra.mxu0 0
        %2799 = vmatprep.subr.bf16.mxu0 0
        %2800 = vmatpush1.bf16.msra.mxu0 0
        %2801 = vmatprep.subr.bf16.mxu0 0
        %2802 = vmatpush1.bf16.msra.mxu0 0
        %2803 = vmatprep.subr.bf16.mxu0 0
        %2804 = vmatpush1.bf16.msra.mxu0 0
        %2805 = vmatprep.subr.bf16.mxu0 0
        %2806 = vmatpush1.bf16.msra.mxu0 0
        %2807 = vmatprep.subr.bf16.mxu0 0
        %2808 = vmatpush1.bf16.msra.mxu0 0
        %2809 = vmatprep.subr.bf16.mxu0 0
        %2810 = vmatpush1.bf16.msra.mxu0 0
        %2811 = vmatprep.mubr.bf16.mxu0 0
        %2812 = vmatmul.mubr.bf16.gmra.mrb[0].mxu0 %v2774
        %v2813 = vpop.f32.mrb[0].mxu0
        %v2814 = vadd.f32 %v2747, %v2813
        %v2815 = vpop.f32.mrb[0].mxu0
        %v2816 = vpop.f32.mrb[0].mxu0
        %v2817 = vadd.f32 %v2747, %v2816
        %v2818 = vpop.f32.mrb[0].mxu0
        %2819 = vmatprep.mubr.bf16.mxu0 0
        %2820 = vmatmul.mubr.bf16.gmra.mrb[0].mxu0 %v2777
        %v2821 = vpop.f32.mrb[0].mxu0
        %v2822 = vadd.f32 %v2747, %v2821
        %v2823 = vpop.f32.mrb[0].mxu0
        %v2824 = vpop.f32.mrb[0].mxu0
        %v2825 = vadd.f32 %v2747, %v2824
        %v2826 = vpop.f32.mrb[0].mxu0
        %2827 = vdwg.mxu0
        %s2828 = scalar_lea.vmem %s6, 1
        %v2829 = vld [vmem:[%s2828] sm:$0x1]
        %v2831 = vlaneseq
        %v2832 = vshrl.u32 %v2831, 7
        %v2833 = vsub.s32 0, %v2832
        %v2834 = vrot.slane %v2829, %v2833
        %v2836 = vmul.f32 %v2814, %v2834
        %v2837 = vmul.f32 %v2817, %v2834
        %v2838 = vmul.f32 %v2822, %v2834
        %v2839 = vmul.f32 %v2825, %v2834
        %v2840 = vadd.f32 %v2054, %v2836
        %v2841 = vadd.f32 %v2055, %v2837
        %v2842 = vadd.f32 %v2056, %v2838
        %v2843 = vadd.f32 %v2057, %v2839
        %s2844 = scalar_lea.vmem %s7, 1
        %v2845 = vld [vmem:[%s2844] sm:$0x1]
        %s2846 = scalar_lea.vmem %s8, 1
        %v2847 = vld [vmem:[%s2846] sm:$0x1]
        %v2848 = vsel %vm678, %v2840, 0.0
        %2849 = vadd.xlane.f32.xlu0 %v2848
        %v2850 = vpop.xlane.xlu0 %2849
        %v2851 = vsel %vm678, %v2841, 0.0
        %2852 = vadd.xlane.f32.xlu0 %v2851
        %v2853 = vpop.xlane.xlu0 %2852
        %v2854 = vsel %vm678, %v2842, 0.0
        %2855 = vadd.xlane.f32.xlu0 %v2854
        %v2856 = vpop.xlane.xlu0 %2855
        %v2857 = vsel %vm678, %v2843, 0.0
        %2858 = vadd.xlane.f32.xlu0 %v2857
        %v2859 = vpop.xlane.xlu0 %2858
        %v2860 = vmul.f32 %v2850, %v691
        %v2861 = vmul.f32 %v2853, %v691
        %v2862 = vmul.f32 %v2856, %v691
        %v2863 = vmul.f32 %v2859, %v691
        %v2864 = vsub.f32 %v2840, %v2860
        %v2865 = vsub.f32 %v2841, %v2861
        %v2866 = vsub.f32 %v2842, %v2862
        %v2867 = vsub.f32 %v2843, %v2863
        %v2868 = vmul.f32 %v2864, %v2864
        %v2869 = vmul.f32 %v2865, %v2865
        %v2870 = vmul.f32 %v2866, %v2866
        %v2871 = vmul.f32 %v2867, %v2867
        %v2872 = vsel %vm678, %v2868, 0.0
        %2873 = vadd.xlane.f32.xlu0 %v2872
        %v2874 = vpop.xlane.xlu0 %2873
        %v2875 = vsel %vm678, %v2869, 0.0
        %2876 = vadd.xlane.f32.xlu0 %v2875
        %v2877 = vpop.xlane.xlu0 %2876
        %v2878 = vsel %vm678, %v2870, 0.0
        %2879 = vadd.xlane.f32.xlu0 %v2878
        %v2880 = vpop.xlane.xlu0 %2879
        %v2881 = vsel %vm678, %v2871, 0.0
        %2882 = vadd.xlane.f32.xlu0 %v2881
        %v2883 = vpop.xlane.xlu0 %2882
        %v2884 = vmul.f32 %v2874, %v691
        %v2885 = vmul.f32 %v2877, %v691
        %v2886 = vmul.f32 %v2880, %v691
        %v2887 = vmul.f32 %v2883, %v691
        %v2888 = vadd.f32 %v2884, 1e-05
        %v2889 = vadd.f32 %v2885, 1e-05
        %v2890 = vadd.f32 %v2886, 1e-05
        %v2891 = vadd.f32 %v2887, 1e-05
        %v2892 = vrsqrt.pop %v2888
        %v2893 = vrsqrt.pop %v2889
        %v2894 = vrsqrt.pop %v2890
        %v2895 = vrsqrt.pop %v2891
        %v2896 = vmul.f32 %v2864, %v2892
        %v2897 = vmul.f32 %v2865, %v2893
        %v2898 = vmul.f32 %v2866, %v2894
        %v2899 = vmul.f32 %v2867, %v2895
        %v2901 = vlaneseq
        %v2902 = vshrl.u32 %v2901, 7
        %v2903 = vsub.s32 0, %v2902
        %v2904 = vrot.slane %v2845, %v2903
        %v2906 = vmul.f32 %v2896, %v2904
        %v2907 = vmul.f32 %v2897, %v2904
        %v2908 = vmul.f32 %v2898, %v2904
        %v2909 = vmul.f32 %v2899, %v2904
        %v2911 = vlaneseq
        %v2912 = vshrl.u32 %v2911, 7
        %v2913 = vsub.s32 0, %v2912
        %v2914 = vrot.slane %v2847, %v2913
        %v2916 = vadd.f32 %v2906, %v2914
        %v2917 = vadd.f32 %v2907, %v2914
        %v2918 = vadd.f32 %v2908, %v2914
        %v2919 = vadd.f32 %v2909, %v2914
        %v2920 = vrot.slane %v2916, 7
        %v2921 = vrot.slane %v2917, 7
        %v2922 = vrot.slane %v2918, 7
        %v2923 = vrot.slane %v2919, 7
        %v2924 = vsel %vm756, %v2922, %v2923
        %v2925 = vsel %vm756, %v2921, %v2922
        %v2926 = vsel %vm756, %v2920, %v2921
        %v2927 = vsel %vm756, %v2923, %v2920
        %v2928 = vrot.slane %v2916, 4
        %v2929 = vrot.slane %v2917, 4
        %v2930 = vrot.slane %v2918, 4
        %v2931 = vrot.slane %v2919, 4
        %v2932 = vsel %vm765, %v2930, %v2931
        %v2933 = vsel %vm765, %v2929, %v2930
        %v2934 = vsel %vm765, %v2928, %v2929
        %v2935 = vsel %vm765, %v2931, %v2928
        %v2936 = vsel %vm644, %v2927, 0.0
        %v2937 = vsel %vm645, %v2926, 0.0
        %v2938 = vsel %vm646, %v2925, 0.0
        %v2939 = vsel %vm647, %v2924, 0.0
        %v2940 = vsel %vm648, %v2935, 0.0
        %v2941 = vsel %vm649, %v2934, 0.0
        %v2942 = vsel %vm650, %v2933, 0.0
        %v2943 = vsel %vm651, %v2932, 0.0
        %v2944 = vsel %vm656, %v2927, 0.0
        %v2945 = vsel %vm657, %v2926, 0.0
        %v2946 = vsel %vm658, %v2925, 0.0
        %v2947 = vsel %vm659, %v2924, 0.0
        %v2948 = vsel %vm660, %v2936, %v2916
        %v2949 = vsel %vm661, %v2937, %v2917
        %v2950 = vsel %vm662, %v2938, %v2918
        %v2951 = vsel %vm663, %v2939, %v2919
        %v2952 = vsel %vm668, %v2940, %v2948
        %v2953 = vsel %vm669, %v2941, %v2949
        %v2954 = vsel %vm670, %v2942, %v2950
        %v2955 = vsel %vm671, %v2943, %v2951
        %v2956 = vsel %vm672, %v2944, %v2952
        %v2957 = vsel %vm673, %v2945, %v2953
        %v2958 = vsel %vm674, %v2946, %v2954
        %v2959 = vsel %vm675, %v2947, %v2955
        %v2960 = vpack.c.bf16 %v2957, %v2956
        %v2961 = vpack.c.bf16 %v2959, %v2958
        %s2962 = scalar_lea.vmem %s9, 128
        %v2963 = vld [vmem:[%s2962] sm:$0xff]
        %v2964 = vld [vmem:[%s2962 + $0x8] sm:$0xff]
        %v2965 = vld [vmem:[%s2962 + $0x10] sm:$0xff]
        %v2966 = vld [vmem:[%s2962 + $0x18] sm:$0xff]
        %v2967 = vld [vmem:[%s2962 + $0x20] sm:$0xff]
        %v2968 = vld [vmem:[%s2962 + $0x28] sm:$0xff]
        %v2969 = vld [vmem:[%s2962 + $0x30] sm:$0xff]
        %v2970 = vld [vmem:[%s2962 + $0x38] sm:$0xff]
        %v2971 = vld [vmem:[%s2962 + $0x40] sm:$0xff]
        %v2972 = vld [vmem:[%s2962 + $0x48] sm:$0xff]
        %v2973 = vld [vmem:[%s2962 + $0x50] sm:$0xff]
        %v2974 = vld [vmem:[%s2962 + $0x58] sm:$0xff]
        %v2975 = vld [vmem:[%s2962 + $0x60] sm:$0xff]
        %v2976 = vld [vmem:[%s2962 + $0x68] sm:$0xff]
        %v2977 = vld [vmem:[%s2962 + $0x70] sm:$0xff]
        %v2978 = vld [vmem:[%s2962 + $0x78] sm:$0xff]
        %s2979 = scalar_lea.vmem %s10, 4
        %v2980 = vld [vmem:[%s2979] sm:$0xf]
        %v2982 = vlaneseq
        %v2983 = vshrl.u32 %v2982, 7
        %v2984 = vsub.s32 0, %v2983
        %v2985 = vrot.slane %v2980, %v2984
        %v2986 = vlaneseq
        %v2987 = vshrl.u32 %v2986, 7
        %v2988 = vsub.s32 1, %v2987
        %v2989 = vrot.slane %v2980, %v2988
        %v2990 = vlaneseq
        %v2991 = vshrl.u32 %v2990, 7
        %v2992 = vsub.s32 2, %v2991
        %v2993 = vrot.slane %v2980, %v2992
        %v2994 = vlaneseq
        %v2995 = vshrl.u32 %v2994, 7
        %v2996 = vsub.s32 3, %v2995
        %v2997 = vrot.slane %v2980, %v2996
        %v3018 = vunpack.c.l.b16 %v2963
        %v3019 = vunpack.c.h.b16 %v2963
        %v3020 = vunpack.c.l.b16 %v2964
        %v3021 = vunpack.c.h.b16 %v2964
        %v3022 = vunpack.c.l.b16 %v2965
        %v3023 = vunpack.c.h.b16 %v2965
        %v3024 = vunpack.c.l.b16 %v2966
        %v3025 = vunpack.c.h.b16 %v2966
        %v3026 = vunpack.c.l.b16 %v2967
        %v3027 = vunpack.c.h.b16 %v2967
        %v3028 = vunpack.c.l.b16 %v2968
        %v3029 = vunpack.c.h.b16 %v2968
        %v3030 = vunpack.c.l.b16 %v2969
        %v3031 = vunpack.c.h.b16 %v2969
        %v3032 = vunpack.c.l.b16 %v2970
        %v3033 = vunpack.c.h.b16 %v2970
        %v3034 = vunpack.c.l.b16 %v2971
        %v3035 = vunpack.c.h.b16 %v2971
        %v3036 = vunpack.c.l.b16 %v2972
        %v3037 = vunpack.c.h.b16 %v2972
        %v3038 = vunpack.c.l.b16 %v2973
        %v3039 = vunpack.c.h.b16 %v2973
        %v3040 = vunpack.c.l.b16 %v2974
        %v3041 = vunpack.c.h.b16 %v2974
        %v3042 = vunpack.c.l.b16 %v2975
        %v3043 = vunpack.c.h.b16 %v2975
        %v3044 = vunpack.c.l.b16 %v2976
        %v3045 = vunpack.c.h.b16 %v2976
        %v3046 = vunpack.c.l.b16 %v2977
        %v3047 = vunpack.c.h.b16 %v2977
        %v3048 = vunpack.c.l.b16 %v2978
        %v3049 = vunpack.c.h.b16 %v2978
        %v3050 = vpack.c.b16 %v3022, %v3018
        %v3051 = vpack.c.b16 %v3023, %v3019
        %v3052 = vpack.c.b16 %v3024, %v3020
        %v3053 = vpack.c.b16 %v3025, %v3021
        %v3054 = vpack.c.b16 %v3030, %v3026
        %v3055 = vpack.c.b16 %v3031, %v3027
        %v3056 = vpack.c.b16 %v3032, %v3028
        %v3057 = vpack.c.b16 %v3033, %v3029
        %v3058 = vpack.c.b16 %v3038, %v3034
        %v3059 = vpack.c.b16 %v3039, %v3035
        %v3060 = vpack.c.b16 %v3040, %v3036
        %v3061 = vpack.c.b16 %v3041, %v3037
        %v3062 = vpack.c.b16 %v3046, %v3042
        %v3063 = vpack.c.b16 %v3047, %v3043
        %v3064 = vpack.c.b16 %v3048, %v3044
        %v3065 = vpack.c.b16 %v3049, %v3045
        %v3083 = vsel %vm678, %v2960, 0
        %v3086 = vsel %vm678, %v2961, 0
        %3088 = vmatprep.subr.bf16.mxu0 %v3051
        %3089 = vmatpush1.bf16.msra.mxu0 %v3050
        %3090 = vmatprep.subr.bf16.mxu0 %v3055
        %3091 = vmatpush1.bf16.msra.mxu0 %v3054
        %3092 = vmatprep.subr.bf16.mxu0 %v3059
        %3093 = vmatpush1.bf16.msra.mxu0 %v3058
        %3094 = vmatprep.subr.bf16.mxu0 %v3063
        %3095 = vmatpush1.bf16.msra.mxu0 %v3062
        %3096 = vmatprep.subr.bf16.mxu0 0
        %3097 = vmatpush1.bf16.msra.mxu0 0
        %3098 = vmatprep.subr.bf16.mxu0 0
        %3099 = vmatpush1.bf16.msra.mxu0 0
        %3100 = vmatprep.subr.bf16.mxu0 0
        %3101 = vmatpush1.bf16.msra.mxu0 0
        %3102 = vmatprep.subr.bf16.mxu0 0
        %3103 = vmatpush1.bf16.msra.mxu0 0
        %3104 = vmatprep.subr.bf16.mxu0 0
        %3105 = vmatpush1.bf16.msra.mxu0 0
        %3106 = vmatprep.subr.bf16.mxu0 0
        %3107 = vmatpush1.bf16.msra.mxu0 0
        %3108 = vmatprep.subr.bf16.mxu0 0
        %3109 = vmatpush1.bf16.msra.mxu0 0
        %3110 = vmatprep.subr.bf16.mxu0 0
        %3111 = vmatpush1.bf16.msra.mxu0 0
        %3112 = vmatprep.subr.bf16.mxu0 0
        %3113 = vmatpush1.bf16.msra.mxu0 0
        %3114 = vmatprep.subr.bf16.mxu0 0
        %3115 = vmatpush1.bf16.msra.mxu0 0
        %3116 = vmatprep.subr.bf16.mxu0 0
        %3117 = vmatpush1.bf16.msra.mxu0 0
        %3118 = vmatprep.subr.bf16.mxu0 0
        %3119 = vmatpush1.bf16.msra.mxu0 0
        %3120 = vmatprep.mubr.bf16.mxu0 0
        %3121 = vmatmul.mubr.bf16.gmra.mrb[0].mxu0 %v3083
        %v3122 = vpop.f32.mrb[0].mxu0
        %v3123 = vadd.f32 %v2985, %v3122
        %v3124 = vpop.f32.mrb[0].mxu0
        %v3125 = vadd.f32 %v2989, %v3124
        %v3126 = vpop.f32.mrb[0].mxu0
        %v3127 = vadd.f32 %v2985, %v3126
        %v3128 = vpop.f32.mrb[0].mxu0
        %v3129 = vadd.f32 %v2989, %v3128
        %3130 = vmatprep.mubr.bf16.mxu0 0
        %3131 = vmatmul.mubr.bf16.gmra.mrb[0].mxu0 %v3086
        %v3132 = vpop.f32.mrb[0].mxu0
        %v3133 = vadd.f32 %v2985, %v3132
        %v3134 = vpop.f32.mrb[0].mxu0
        %v3135 = vadd.f32 %v2989, %v3134
        %v3136 = vpop.f32.mrb[0].mxu0
        %v3137 = vadd.f32 %v2985, %v3136
        %v3138 = vpop.f32.mrb[0].mxu0
        %v3139 = vadd.f32 %v2989, %v3138
        %3140 = vdwg.mxu0
        %3141 = vmatprep.subr.bf16.mxu0 %v3053
        %3142 = vmatpush1.bf16.msra.mxu0 %v3052
        %3143 = vmatprep.subr.bf16.mxu0 %v3057
        %3144 = vmatpush1.bf16.msra.mxu0 %v3056
        %3145 = vmatprep.subr.bf16.mxu0 %v3061
        %3146 = vmatpush1.bf16.msra.mxu0 %v3060
        %3147 = vmatprep.subr.bf16.mxu0 %v3065
        %3148 = vmatpush1.bf16.msra.mxu0 %v3064
        %3149 = vmatprep.subr.bf16.mxu0 0
        %3150 = vmatpush1.bf16.msra.mxu0 0
        %3151 = vmatprep.subr.bf16.mxu0 0
        %3152 = vmatpush1.bf16.msra.mxu0 0
        %3153 = vmatprep.subr.bf16.mxu0 0
        %3154 = vmatpush1.bf16.msra.mxu0 0
        %3155 = vmatprep.subr.bf16.mxu0 0
        %3156 = vmatpush1.bf16.msra.mxu0 0
        %3157 = vmatprep.subr.bf16.mxu0 0
        %3158 = vmatpush1.bf16.msra.mxu0 0
        %3159 = vmatprep.subr.bf16.mxu0 0
        %3160 = vmatpush1.bf16.msra.mxu0 0
        %3161 = vmatprep.subr.bf16.mxu0 0
        %3162 = vmatpush1.bf16.msra.mxu0 0
        %3163 = vmatprep.subr.bf16.mxu0 0
        %3164 = vmatpush1.bf16.msra.mxu0 0
        %3165 = vmatprep.subr.bf16.mxu0 0
        %3166 = vmatpush1.bf16.msra.mxu0 0
        %3167 = vmatprep.subr.bf16.mxu0 0
        %3168 = vmatpush1.bf16.msra.mxu0 0
        %3169 = vmatprep.subr.bf16.mxu0 0
        %3170 = vmatpush1.bf16.msra.mxu0 0
        %3171 = vmatprep.subr.bf16.mxu0 0
        %3172 = vmatpush1.bf16.msra.mxu0 0
        %3173 = vmatprep.mubr.bf16.mxu0 0
        %3174 = vmatmul.mubr.bf16.gmra.mrb[0].mxu0 %v3083
        %v3175 = vpop.f32.mrb[0].mxu0
        %v3176 = vadd.f32 %v2993, %v3175
        %v3177 = vpop.f32.mrb[0].mxu0
        %v3178 = vadd.f32 %v2997, %v3177
        %v3179 = vpop.f32.mrb[0].mxu0
        %v3180 = vadd.f32 %v2993, %v3179
        %v3181 = vpop.f32.mrb[0].mxu0
        %v3182 = vadd.f32 %v2997, %v3181
        %3183 = vmatprep.mubr.bf16.mxu0 0
        %3184 = vmatmul.mubr.bf16.gmra.mrb[0].mxu0 %v3086
        %v3185 = vpop.f32.mrb[0].mxu0
        %v3186 = vadd.f32 %v2993, %v3185
        %v3187 = vpop.f32.mrb[0].mxu0
        %v3188 = vadd.f32 %v2997, %v3187
        %v3189 = vpop.f32.mrb[0].mxu0
        %v3190 = vadd.f32 %v2993, %v3189
        %v3191 = vpop.f32.mrb[0].mxu0
        %v3192 = vadd.f32 %v2997, %v3191
        %3193 = vdwg.mxu0
        %v3194 = vmul.f32 %v3176, 0.5
        %v3195 = vmul.f32 %v3178, 0.5
        %v3196 = vmul.f32 %v3180, 0.5
        %v3197 = vmul.f32 %v3182, 0.5
        %v3198 = vmul.f32 %v3186, 0.5
        %v3199 = vmul.f32 %v3188, 0.5
        %v3200 = vmul.f32 %v3190, 0.5
        %v3201 = vmul.f32 %v3192, 0.5
        %v3202 = vmul.f32 %v3176, 0.70710677
        %v3203 = vmul.f32 %v3178, 0.70710677
        %v3204 = vmul.f32 %v3180, 0.70710677
        %v3205 = vmul.f32 %v3182, 0.70710677
        %v3206 = vmul.f32 %v3186, 0.70710677
        %v3207 = vmul.f32 %v3188, 0.70710677
        %v3208 = vmul.f32 %v3190, 0.70710677
        %v3209 = vmul.f32 %v3192, 0.70710677
        %v3210 = verf.f32.pop %v3202
        %v3211 = verf.f32.pop %v3203
        %v3212 = verf.f32.pop %v3204
        %v3213 = verf.f32.pop %v3205
        %v3214 = verf.f32.pop %v3206
        %v3215 = verf.f32.pop %v3207
        %v3216 = verf.f32.pop %v3208
        %v3217 = verf.f32.pop %v3209
        %v3218 = vadd.f32 %v3210, 1.0
        %v3219 = vadd.f32 %v3211, 1.0
        %v3220 = vadd.f32 %v3212, 1.0
        %v3221 = vadd.f32 %v3213, 1.0
        %v3222 = vadd.f32 %v3214, 1.0
        %v3223 = vadd.f32 %v3215, 1.0
        %v3224 = vadd.f32 %v3216, 1.0
        %v3225 = vadd.f32 %v3217, 1.0
        %v3226 = vmul.f32 %v3194, %v3218
        %v3227 = vmul.f32 %v3195, %v3219
        %v3228 = vmul.f32 %v3196, %v3220
        %v3229 = vmul.f32 %v3197, %v3221
        %v3230 = vmul.f32 %v3198, %v3222
        %v3231 = vmul.f32 %v3199, %v3223
        %v3232 = vmul.f32 %v3200, %v3224
        %v3233 = vmul.f32 %v3201, %v3225
        %v3234 = vmul.f32 %v3123, %v3226
        %v3235 = vmul.f32 %v3125, %v3227
        %v3236 = vmul.f32 %v3127, %v3228
        %v3237 = vmul.f32 %v3129, %v3229
        %v3238 = vmul.f32 %v3133, %v3230
        %v3239 = vmul.f32 %v3135, %v3231
        %v3240 = vmul.f32 %v3137, %v3232
        %v3241 = vmul.f32 %v3139, %v3233
        %v3242 = vpack.c.bf16 %v3236, %v3234
        %v3243 = vpack.c.bf16 %v3237, %v3235
        %v3244 = vpack.c.bf16 %v3240, %v3238
        %v3245 = vpack.c.bf16 %v3241, %v3239
        %s3246 = scalar_lea.vmem %s11, 128
        %v3247 = vld [vmem:[%s3246] sm:$0xf]
        %v3248 = vld [vmem:[%s3246 + $0x4] sm:$0xf]
        %v3249 = vld [vmem:[%s3246 + $0x8] sm:$0xf]
        %v3250 = vld [vmem:[%s3246 + $0xc] sm:$0xf]
        %v3251 = vld [vmem:[%s3246 + $0x10] sm:$0xf]
        %v3252 = vld [vmem:[%s3246 + $0x14] sm:$0xf]
        %v3253 = vld [vmem:[%s3246 + $0x18] sm:$0xf]
        %v3254 = vld [vmem:[%s3246 + $0x1c] sm:$0xf]
        %v3255 = vld [vmem:[%s3246 + $0x20] sm:$0xf]
        %v3256 = vld [vmem:[%s3246 + $0x24] sm:$0xf]
        %v3257 = vld [vmem:[%s3246 + $0x28] sm:$0xf]
        %v3258 = vld [vmem:[%s3246 + $0x2c] sm:$0xf]
        %v3259 = vld [vmem:[%s3246 + $0x30] sm:$0xf]
        %v3260 = vld [vmem:[%s3246 + $0x34] sm:$0xf]
        %v3261 = vld [vmem:[%s3246 + $0x38] sm:$0xf]
        %v3262 = vld [vmem:[%s3246 + $0x3c] sm:$0xf]
        %v3263 = vld [vmem:[%s3246 + $0x40] sm:$0xf]
        %v3264 = vld [vmem:[%s3246 + $0x44] sm:$0xf]
        %v3265 = vld [vmem:[%s3246 + $0x48] sm:$0xf]
        %v3266 = vld [vmem:[%s3246 + $0x4c] sm:$0xf]
        %v3267 = vld [vmem:[%s3246 + $0x50] sm:$0xf]
        %v3268 = vld [vmem:[%s3246 + $0x54] sm:$0xf]
        %v3269 = vld [vmem:[%s3246 + $0x58] sm:$0xf]
        %v3270 = vld [vmem:[%s3246 + $0x5c] sm:$0xf]
        %v3271 = vld [vmem:[%s3246 + $0x60] sm:$0xf]
        %v3272 = vld [vmem:[%s3246 + $0x64] sm:$0xf]
        %v3273 = vld [vmem:[%s3246 + $0x68] sm:$0xf]
        %v3274 = vld [vmem:[%s3246 + $0x6c] sm:$0xf]
        %v3275 = vld [vmem:[%s3246 + $0x70] sm:$0xf]
        %v3276 = vld [vmem:[%s3246 + $0x74] sm:$0xf]
        %v3277 = vld [vmem:[%s3246 + $0x78] sm:$0xf]
        %v3278 = vld [vmem:[%s3246 + $0x7c] sm:$0xf]
        %s3279 = scalar_lea.vmem %s12, 1
        %v3280 = vld [vmem:[%s3279] sm:$0x1]
        %v3282 = vlaneseq
        %v3283 = vshrl.u32 %v3282, 7
        %v3284 = vsub.s32 0, %v3283
        %v3285 = vrot.slane %v3280, %v3284
        %v3319 = vunpack.c.l.b16 %v3247
        %v3320 = vunpack.c.l.b16 %v3248
        %v3321 = vunpack.c.l.b16 %v3249
        %v3322 = vunpack.c.l.b16 %v3250
        %v3323 = vunpack.c.l.b16 %v3251
        %v3324 = vunpack.c.l.b16 %v3252
        %v3325 = vunpack.c.l.b16 %v3253
        %v3326 = vunpack.c.l.b16 %v3254
        %v3327 = vunpack.c.l.b16 %v3255
        %v3328 = vunpack.c.l.b16 %v3256
        %v3329 = vunpack.c.l.b16 %v3257
        %v3330 = vunpack.c.l.b16 %v3258
        %v3331 = vunpack.c.l.b16 %v3259
        %v3332 = vunpack.c.l.b16 %v3260
        %v3333 = vunpack.c.l.b16 %v3261
        %v3334 = vunpack.c.l.b16 %v3262
        %v3335 = vunpack.c.l.b16 %v3263
        %v3336 = vunpack.c.l.b16 %v3264
        %v3337 = vunpack.c.l.b16 %v3265
        %v3338 = vunpack.c.l.b16 %v3266
        %v3339 = vunpack.c.l.b16 %v3267
        %v3340 = vunpack.c.l.b16 %v3268
        %v3341 = vunpack.c.l.b16 %v3269
        %v3342 = vunpack.c.l.b16 %v3270
        %v3343 = vunpack.c.l.b16 %v3271
        %v3344 = vunpack.c.l.b16 %v3272
        %v3345 = vunpack.c.l.b16 %v3273
        %v3346 = vunpack.c.l.b16 %v3274
        %v3347 = vunpack.c.l.b16 %v3275
        %v3348 = vunpack.c.l.b16 %v3276
        %v3349 = vunpack.c.l.b16 %v3277
        %v3350 = vunpack.c.l.b16 %v3278
        %v3351 = vpack.c.b16 %v3320, %v3319
        %v3352 = vpack.c.b16 %v3322, %v3321
        %v3353 = vpack.c.b16 %v3324, %v3323
        %v3354 = vpack.c.b16 %v3326, %v3325
        %v3355 = vpack.c.b16 %v3328, %v3327
        %v3356 = vpack.c.b16 %v3330, %v3329
        %v3357 = vpack.c.b16 %v3332, %v3331
        %v3358 = vpack.c.b16 %v3334, %v3333
        %v3359 = vpack.c.b16 %v3336, %v3335
        %v3360 = vpack.c.b16 %v3338, %v3337
        %v3361 = vpack.c.b16 %v3340, %v3339
        %v3362 = vpack.c.b16 %v3342, %v3341
        %v3363 = vpack.c.b16 %v3344, %v3343
        %v3364 = vpack.c.b16 %v3346, %v3345
        %v3365 = vpack.c.b16 %v3348, %v3347
        %v3366 = vpack.c.b16 %v3350, %v3349
        %3383 = vmatprep.subr.bf16.mxu0 0
        %3384 = vmatpush1.bf16.msra.mxu0 %v3351
        %3385 = vmatprep.subr.bf16.mxu0 0
        %3386 = vmatpush1.bf16.msra.mxu0 %v3352
        %3387 = vmatprep.subr.bf16.mxu0 0
        %3388 = vmatpush1.bf16.msra.mxu0 %v3353
        %3389 = vmatprep.subr.bf16.mxu0 0
        %3390 = vmatpush1.bf16.msra.mxu0 %v3354
        %3391 = vmatprep.subr.bf16.mxu0 0
        %3392 = vmatpush1.bf16.msra.mxu0 %v3355
        %3393 = vmatprep.subr.bf16.mxu0 0
        %3394 = vmatpush1.bf16.msra.mxu0 %v3356
        %3395 = vmatprep.subr.bf16.mxu0 0
        %3396 = vmatpush1.bf16.msra.mxu0 %v3357
        %3397 = vmatprep.subr.bf16.mxu0 0
        %3398 = vmatpush1.bf16.msra.mxu0 %v3358
        %3399 = vmatprep.subr.bf16.mxu0 0
        %3400 = vmatpush1.bf16.msra.mxu0 %v3359
        %3401 = vmatprep.subr.bf16.mxu0 0
        %3402 = vmatpush1.bf16.msra.mxu0 %v3360
        %3403 = vmatprep.subr.bf16.mxu0 0
        %3404 = vmatpush1.bf16.msra.mxu0 %v3361
        %3405 = vmatprep.subr.bf16.mxu0 0
        %3406 = vmatpush1.bf16.msra.mxu0 %v3362
        %3407 = vmatprep.subr.bf16.mxu0 0
        %3408 = vmatpush1.bf16.msra.mxu0 %v3363
        %3409 = vmatprep.subr.bf16.mxu0 0
        %3410 = vmatpush1.bf16.msra.mxu0 %v3364
        %3411 = vmatprep.subr.bf16.mxu0 0
        %3412 = vmatpush1.bf16.msra.mxu0 %v3365
        %3413 = vmatprep.subr.bf16.mxu0 0
        %3414 = vmatpush1.bf16.msra.mxu0 %v3366
        %3415 = vmatprep.mubr.bf16.mxu0 %v3243
        %3416 = vmatmul.mubr.bf16.gmra.mrb[0].mxu0 %v3242
        %v3417 = vpop.f32.mrb[0].mxu0
        %v3418 = vadd.f32 %v3285, %v3417
        %v3419 = vpop.f32.mrb[0].mxu0
        %v3420 = vpop.f32.mrb[0].mxu0
        %v3421 = vadd.f32 %v3285, %v3420
        %v3422 = vpop.f32.mrb[0].mxu0
        %3423 = vmatprep.mubr.bf16.mxu0 %v3245
        %3424 = vmatmul.mubr.bf16.gmra.mrb[0].mxu0 %v3244
        %v3425 = vpop.f32.mrb[0].mxu0
        %v3426 = vadd.f32 %v3285, %v3425
        %v3427 = vpop.f32.mrb[0].mxu0
        %v3428 = vpop.f32.mrb[0].mxu0
        %v3429 = vadd.f32 %v3285, %v3428
        %v3430 = vpop.f32.mrb[0].mxu0
        %3431 = vdwg.mxu0
        %s3432 = scalar_lea.vmem %s13, 1
        %v3433 = vld [vmem:[%s3432] sm:$0x1]
        %v3435 = vlaneseq
        %v3436 = vshrl.u32 %v3435, 7
        %v3437 = vsub.s32 0, %v3436
        %v3438 = vrot.slane %v3433, %v3437
        %v3440 = vmul.f32 %v3418, %v3438
        %v3441 = vmul.f32 %v3421, %v3438
        %v3442 = vmul.f32 %v3426, %v3438
        %v3443 = vmul.f32 %v3429, %v3438
        %v3444 = vadd.f32 %v2840, %v3440
        %v3445 = vadd.f32 %v2841, %v3441
        %v3446 = vadd.f32 %v2842, %v3442
        %v3447 = vadd.f32 %v2843, %v3443
        %v3448 = vld [vmem:[%s14] sm:$0x1]
        %v3449 = vld [vmem:[%s15] sm:$0x1]
        %v3450 = vsel %vm678, %v3444, 0.0
        %3451 = vadd.xlane.f32.xlu0 %v3450
        %v3452 = vpop.xlane.xlu0 %3451
        %v3453 = vsel %vm678, %v3445, 0.0
        %3454 = vadd.xlane.f32.xlu0 %v3453
        %v3455 = vpop.xlane.xlu0 %3454
        %v3456 = vsel %vm678, %v3446, 0.0
        %3457 = vadd.xlane.f32.xlu0 %v3456
        %v3458 = vpop.xlane.xlu0 %3457
        %v3459 = vsel %vm678, %v3447, 0.0
        %3460 = vadd.xlane.f32.xlu0 %v3459
        %v3461 = vpop.xlane.xlu0 %3460
        %v3462 = vmul.f32 %v3452, %v691
        %v3463 = vmul.f32 %v3455, %v691
        %v3464 = vmul.f32 %v3458, %v691
        %v3465 = vmul.f32 %v3461, %v691
        %v3466 = vsub.f32 %v3444, %v3462
        %v3467 = vsub.f32 %v3445, %v3463
        %v3468 = vsub.f32 %v3446, %v3464
        %v3469 = vsub.f32 %v3447, %v3465
        %v3470 = vmul.f32 %v3466, %v3466
        %v3471 = vmul.f32 %v3467, %v3467
        %v3472 = vmul.f32 %v3468, %v3468
        %v3473 = vmul.f32 %v3469, %v3469
        %v3474 = vsel %vm678, %v3470, 0.0
        %3475 = vadd.xlane.f32.xlu0 %v3474
        %v3476 = vpop.xlane.xlu0 %3475
        %v3477 = vsel %vm678, %v3471, 0.0
        %3478 = vadd.xlane.f32.xlu0 %v3477
        %v3479 = vpop.xlane.xlu0 %3478
        %v3480 = vsel %vm678, %v3472, 0.0
        %3481 = vadd.xlane.f32.xlu0 %v3480
        %v3482 = vpop.xlane.xlu0 %3481
        %v3483 = vsel %vm678, %v3473, 0.0
        %3484 = vadd.xlane.f32.xlu0 %v3483
        %v3485 = vpop.xlane.xlu0 %3484
        %v3486 = vmul.f32 %v3476, %v691
        %v3487 = vmul.f32 %v3479, %v691
        %v3488 = vmul.f32 %v3482, %v691
        %v3489 = vmul.f32 %v3485, %v691
        %v3490 = vadd.f32 %v3486, 1e-05
        %v3491 = vadd.f32 %v3487, 1e-05
        %v3492 = vadd.f32 %v3488, 1e-05
        %v3493 = vadd.f32 %v3489, 1e-05
        %v3494 = vrsqrt.pop %v3490
        %v3495 = vrsqrt.pop %v3491
        %v3496 = vrsqrt.pop %v3492
        %v3497 = vrsqrt.pop %v3493
        %v3498 = vmul.f32 %v3466, %v3494
        %v3499 = vmul.f32 %v3467, %v3495
        %v3500 = vmul.f32 %v3468, %v3496
        %v3501 = vmul.f32 %v3469, %v3497
        %v3503 = vlaneseq
        %v3504 = vshrl.u32 %v3503, 7
        %v3505 = vsub.s32 0, %v3504
        %v3506 = vrot.slane %v3448, %v3505
        %v3508 = vmul.f32 %v3498, %v3506
        %v3509 = vmul.f32 %v3499, %v3506
        %v3510 = vmul.f32 %v3500, %v3506
        %v3511 = vmul.f32 %v3501, %v3506
        %v3513 = vlaneseq
        %v3514 = vshrl.u32 %v3513, 7
        %v3515 = vsub.s32 0, %v3514
        %v3516 = vrot.slane %v3449, %v3515
        %v3518 = vadd.f32 %v3508, %v3516
        %v3519 = vadd.f32 %v3509, %v3516
        %v3520 = vadd.f32 %v3510, %v3516
        %v3521 = vadd.f32 %v3511, %v3516
        %v3522 = vpack.c.bf16 %v3519, %v3518
        %v3523 = vpack.c.bf16 %v3521, %v3520
        %v3524 = vld [vmem:[%s16] sm:$0xff]
        %v3525 = vld [vmem:[%s16 + $0x8] sm:$0xff]
        %v3526 = vld [vmem:[%s16 + $0x10] sm:$0xff]
        %v3527 = vld [vmem:[%s16 + $0x18] sm:$0xff]
        %v3528 = vld [vmem:[%s16 + $0x20] sm:$0xff]
        %v3529 = vld [vmem:[%s16 + $0x28] sm:$0xff]
        %v3530 = vld [vmem:[%s16 + $0x30] sm:$0xff]
        %v3531 = vld [vmem:[%s16 + $0x38] sm:$0xff]
        %v3532 = vld [vmem:[%s17] sm:$0x3]
        %v3534 = vlaneseq
        %v3535 = vshrl.u32 %v3534, 7
        %v3536 = vsub.s32 0, %v3535
        %v3537 = vrot.slane %v3532, %v3536
        %v3538 = vlaneseq
        %v3539 = vshrl.u32 %v3538, 7
        %v3540 = vsub.s32 1, %v3539
        %v3541 = vrot.slane %v3532, %v3540
        %v3552 = vunpack.c.l.b16 %v3524
        %v3553 = vunpack.c.h.b16 %v3524
        %v3554 = vunpack.c.l.b16 %v3525
        %v3555 = vunpack.c.h.b16 %v3525
        %v3556 = vunpack.c.l.b16 %v3526
        %v3557 = vunpack.c.h.b16 %v3526
        %v3558 = vunpack.c.l.b16 %v3527
        %v3559 = vunpack.c.h.b16 %v3527
        %v3560 = vunpack.c.l.b16 %v3528
        %v3561 = vunpack.c.h.b16 %v3528
        %v3562 = vunpack.c.l.b16 %v3529
        %v3563 = vunpack.c.h.b16 %v3529
        %v3564 = vunpack.c.l.b16 %v3530
        %v3565 = vunpack.c.h.b16 %v3530
        %v3566 = vunpack.c.l.b16 %v3531
        %v3567 = vunpack.c.h.b16 %v3531
        %v3568 = vpack.c.b16 %v3554, %v3552
        %v3569 = vpack.c.b16 %v3555, %v3553
        %v3570 = vpack.c.b16 %v3558, %v3556
        %v3571 = vpack.c.b16 %v3559, %v3557
        %v3572 = vpack.c.b16 %v3562, %v3560
        %v3573 = vpack.c.b16 %v3563, %v3561
        %v3574 = vpack.c.b16 %v3566, %v3564
        %v3575 = vpack.c.b16 %v3567, %v3565
        %v3585 = vsel %vm678, %v3522, 0
        %v3588 = vsel %vm678, %v3523, 0
        %3590 = vmatprep.subr.bf16.mxu0 %v3569
        %3591 = vmatpush1.bf16.msra.mxu0 %v3568
        %3592 = vmatprep.subr.bf16.mxu0 %v3571
        %3593 = vmatpush1.bf16.msra.mxu0 %v3570
        %3594 = vmatprep.subr.bf16.mxu0 %v3573
        %3595 = vmatpush1.bf16.msra.mxu0 %v3572
        %3596 = vmatprep.subr.bf16.mxu0 %v3575
        %3597 = vmatpush1.bf16.msra.mxu0 %v3574
        %3598 = vmatprep.subr.bf16.mxu0 0
        %3599 = vmatpush1.bf16.msra.mxu0 0
        %3600 = vmatprep.subr.bf16.mxu0 0
        %3601 = vmatpush1.bf16.msra.mxu0 0
        %3602 = vmatprep.subr.bf16.mxu0 0
        %3603 = vmatpush1.bf16.msra.mxu0 0
        %3604 = vmatprep.subr.bf16.mxu0 0
        %3605 = vmatpush1.bf16.msra.mxu0 0
        %3606 = vmatprep.subr.bf16.mxu0 0
        %3607 = vmatpush1.bf16.msra.mxu0 0
        %3608 = vmatprep.subr.bf16.mxu0 0
        %3609 = vmatpush1.bf16.msra.mxu0 0
        %3610 = vmatprep.subr.bf16.mxu0 0
        %3611 = vmatpush1.bf16.msra.mxu0 0
        %3612 = vmatprep.subr.bf16.mxu0 0
        %3613 = vmatpush1.bf16.msra.mxu0 0
        %3614 = vmatprep.subr.bf16.mxu0 0
        %3615 = vmatpush1.bf16.msra.mxu0 0
        %3616 = vmatprep.subr.bf16.mxu0 0
        %3617 = vmatpush1.bf16.msra.mxu0 0
        %3618 = vmatprep.subr.bf16.mxu0 0
        %3619 = vmatpush1.bf16.msra.mxu0 0
        %3620 = vmatprep.subr.bf16.mxu0 0
        %3621 = vmatpush1.bf16.msra.mxu0 0
        %3622 = vmatprep.mubr.bf16.mxu0 0
        %3623 = vmatmul.mubr.bf16.gmra.mrb[0].mxu0 %v3585
        %v3624 = vpop.f32.mrb[0].mxu0
        %v3625 = vadd.f32 %v3537, %v3624
        %v3626 = vpop.f32.mrb[0].mxu0
        %v3627 = vadd.f32 %v3541, %v3626
        %v3628 = vpop.f32.mrb[0].mxu0
        %v3629 = vadd.f32 %v3537, %v3628
        %v3630 = vpop.f32.mrb[0].mxu0
        %v3631 = vadd.f32 %v3541, %v3630
        %3632 = vmatprep.mubr.bf16.mxu0 0
        %3633 = vmatmul.mubr.bf16.gmra.mrb[0].mxu0 %v3588
        %v3634 = vpop.f32.mrb[0].mxu0
        %v3635 = vadd.f32 %v3537, %v3634
        %v3636 = vpop.f32.mrb[0].mxu0
        %v3637 = vadd.f32 %v3541, %v3636
        %v3638 = vpop.f32.mrb[0].mxu0
        %v3639 = vadd.f32 %v3537, %v3638
        %v3640 = vpop.f32.mrb[0].mxu0
        %v3641 = vadd.f32 %v3541, %v3640
        %3642 = vdwg.mxu0
        %v3643 = vadd.s32 %v589, 128
        %vm3644 = vcmp.ge.s32.totalorder %v580, 16
        %vm3645 = vcmp.ge.s32.totalorder %v581, 16
        %vm3646 = vcmp.ge.s32.totalorder %v582, 16
        %vm3647 = vcmp.ge.s32.totalorder %v583, 16
        %vm3648 = vcmp.lt.s32.totalorder %v589, 128
        %vm3649 = vcmp.lt.s32.totalorder %v3643, 128
        %vm3650 = vmand %vm3644, %vm3648
        %vm3651 = vmand %vm3644, %vm3649
        %vm3652 = vmand %vm3645, %vm3648
        %vm3653 = vmand %vm3645, %vm3649
        %vm3654 = vmand %vm3646, %vm3648
        %vm3655 = vmand %vm3646, %vm3649
        %vm3656 = vmand %vm3647, %vm3648
        %vm3657 = vmand %vm3647, %vm3649
        %vm3658 = vcmp.lt.s32.totalorder %v580, 16
        %vm3659 = vcmp.lt.s32.totalorder %v581, 16
        %vm3660 = vcmp.lt.s32.totalorder %v582, 16
        %vm3661 = vcmp.lt.s32.totalorder %v583, 16
        %vm3662 = vcmp.ge.s32.totalorder %v589, 128
        %vm3663 = vcmp.ge.s32.totalorder %v3643, 128
        %vm3664 = vmand %vm3658, %vm3662
        %vm3665 = vmand %vm3658, %vm3663
        %vm3666 = vmand %vm3659, %vm3662
        %vm3667 = vmand %vm3659, %vm3663
        %vm3668 = vmand %vm3660, %vm3662
        %vm3669 = vmand %vm3660, %vm3663
        %vm3670 = vmand %vm3661, %vm3662
        %vm3671 = vmand %vm3661, %vm3663
        %vm3672 = vmor %vm3650, %vm3664
        %vm3673 = vmor %vm3651, %vm3665
        %vm3674 = vmor %vm3652, %vm3666
        %vm3675 = vmor %vm3653, %vm3667
        %vm3676 = vmor %vm3654, %vm3668
        %vm3677 = vmor %vm3655, %vm3669
        %vm3678 = vmor %vm3656, %vm3670
        %vm3679 = vmor %vm3657, %vm3671
        %v3680 = vsel %vm3672, -3.4028235e+38, %v3625
        %v3681 = vsel %vm3673, -3.4028235e+38, %v3627
        %v3682 = vsel %vm3674, -3.4028235e+38, %v3629
        %v3683 = vsel %vm3675, -3.4028235e+38, %v3631
        %v3684 = vsel %vm3676, -3.4028235e+38, %v3635
        %v3685 = vsel %vm3677, -3.4028235e+38, %v3637
        %v3686 = vsel %vm3678, -3.4028235e+38, %v3639
        %v3687 = vsel %vm3679, -3.4028235e+38, %v3641
        %3688 = vst [vmem:[%s568] sm:$0xff] %v3680
        %3689 = vst [vmem:[%s568 + $0x8] sm:$0xff] %v3681
        %3690 = vst [vmem:[%s568 + $0x10] sm:$0xff] %v3682
        %3691 = vst [vmem:[%s568 + $0x18] sm:$0xff] %v3683
        %3692 = vst [vmem:[%s568 + $0x20] sm:$0xff] %v3684
        %3693 = vst [vmem:[%s568 + $0x28] sm:$0xff] %v3685
        %3694 = vst [vmem:[%s568 + $0x30] sm:$0xff] %v3686
        %3695 = vst [vmem:[%s568 + $0x38] sm:$0xff] %v3687
        %s3696 = sand.u32 %s423, 1
        %s3697 = scalar_lea.sflag [#allocation3], %s3696
        %s3698 = sand.u32 %s423, 1
        %s3699 = smul.addr %s3698, 64
        %s3700 = scalar_lea.vmem [#allocation2], %s3699
        // Predicated region
        $region93: #{dalle_forward.1} parent=91 // pred_check
          %p3701 = pneg %p433
        $region94: #{dalle_forward.1} parent=91 // pred_check_branch
          %3703 = sbr.rel (%p3701) target = $region96
        $region95: #{dalle_forward.1} parent=91 // pred_region
          %s3705 = ssub.s32 1024, 1024
          %3706 = vsyncadd %s3697, %s3705
          %s3707 = smul.addr %s32, 8
          %s3708 = smul.addr %s3707, 128
          %s3709 = scalar_lea.hbm %s18, %s3708
          %s3710 = sshll.u32 %s3700, 4
          %s3711 = int_to_ptr.vmem [resolvable:$true] %s3710
          %3716 = dma.vmem_to_hbm [thread:$0]  %s3711, 1024, %s3709, %s3697, 256, 256, 16
        $region96: #{dalle_forward.1} parent=91 // pred_fallthru
          _
      $region92: #{dalle_forward.1} parent=5 // pred_fallthru
        _
      %p3717 = scmp.le.s32.totalorder 2, %s27
      // Predicated region
      $region97: #{dalle_forward.1} parent=5 // pred_check
        %p3718 = pneg %p3717
      $region98: #{dalle_forward.1} parent=5 // pred_check_branch
        %3720 = sbr.rel (%p3718) target = $region100
      $region99: #{dalle_forward.1} parent=5 // pred_region
        %s3721 = ssub.s32 %s27, 2
        // Predicated region
        $region101: #{dalle_forward.1} parent=99 // pred_check
          %p3722 = pneg %p439
        $region102: #{dalle_forward.1} parent=99 // pred_check_branch
          %3724 = sbr.rel (%p3722) target = $region104
        $region103: #{dalle_forward.1} parent=99 // pred_region
          %s3725 = sand.u32 %s424, 1
          %s3726 = scalar_lea.sflag [#allocation3], %s3725
          %s3727 = sand.u32 %s424, 1
          %s3728 = smul.addr %s3727, 64
          %s3729 = scalar_lea.vmem [#allocation2], %s3728
          %3730 = dma.done %s3726, 1024
        $region104: #{dalle_forward.1} parent=99 // pred_fallthru
          _
      $region100: #{dalle_forward.1} parent=5 // pred_fallthru
        _
    $region6: #{dalle_forward.1} parent=1 // loop_footer
      %s31 = sadd.s32 1, %s27
    $region7: #{dalle_forward.1} parent=1 // loop_footer_branch
      %26 = sbr.rel target = $region3
    $region8: #{dalle_forward.1} parent=1 // loop_exit
      _
    %3731 = vsyncpa [#allocation3], 1
    %s3732 = scalar_lea.sflag [#allocation3], 1
    %3733 = vsyncpa %s3732, 1

</llo_original>
